<compile_context>
chip_gen: v7x
topology: tpu7x:2x2x1
jax: 0.10.0
libtpu: 0.0.40
codegen_flags: <defaults>
</compile_context>

<pallas_src>
import functools
import math

import jax
import jax.numpy as jnp
from jax import lax
from jax.experimental import pallas as pl
from jax.experimental.pallas import tpu as pltpu

_NEG_INF = -1e30
_TRANS_B = (((1,), (1,)), ((), ()))   # contract minor dims of both operands (A @ B^T)
_TRANS_A = (((0,), (0,)), ((), ()))   # contract major dims of both operands (A^T @ B)


def _fused_block_kernel(*refs, n_head, d_k, d_v, seq_len, apply_block_bias,
                        use_mask, with_ffn, return_attn, eps=1e-6):
    it = iter(refs)
    x_ref = next(it)
    kmask_ref = next(it) if use_mask else None
    wqkv_ref = next(it)
    wfc_ref = next(it)
    g1_ref = next(it)
    b1_ref = next(it)
    if with_ffn:
        w1_ref = next(it)
        fb1_ref = next(it)
        w2_ref = next(it)
        fb2_ref = next(it)
        g2_ref = next(it)
        b2_ref = next(it)
    out_ref = next(it)
    attn_ref = next(it) if return_attn else None

    x = x_ref[...]                                    # (M, D) f32, M = BB*L
    xb = x.astype(jnp.bfloat16)
    M, D = x.shape
    HK = n_head * d_k

    # Single fused [Wq*scale; Wk; Wv] projection, transposed (head-major rows):
    # per-head Q^T / K^T / V^T slices below are contiguous sublane slices.
    qkvt = lax.dot_general(wqkv_ref[...], xb, dimension_numbers=_TRANS_B,
                           preferred_element_type=jnp.float32
                           ).astype(jnp.bfloat16)     # (2*HK + H*dv, M)

    # Additive bias (block-diagonal batch-fold mask built in-kernel + optional
    # key-visibility mask), hoisted out of the head loop.
    bias = None
    if apply_block_bias:
        row_b = lax.broadcasted_iota(jnp.int32, (M, M), 0) // seq_len
        col_b = lax.broadcasted_iota(jnp.int32, (M, M), 1) // seq_len
        bias = jnp.where(row_b == col_b, 0.0, _NEG_INF).astype(jnp.float32)
    if use_mask:
        kb = jnp.where(kmask_ref[0, 0:1, :] == 0.0, _NEG_INF, 0.0)   # (1, M)
        kb = kb.astype(jnp.float32)
        bias = kb if bias is None else bias + kb

    o = jnp.zeros((M, D), jnp.float32)
    for h in range(n_head):
        q_ht = qkvt[h * d_k:(h + 1) * d_k, :]                    # (dk, M)
        k_ht = qkvt[HK + h * d_k:HK + (h + 1) * d_k, :]          # (dk, M)
        v_ht = qkvt[2 * HK + h * d_v:2 * HK + (h + 1) * d_v, :]  # (dv, M)

        # Scores: contract dim 0 of both operands (Q^T, K^T) -> (M, M).
        logits = lax.dot_general(q_ht, k_ht, dimension_numbers=_TRANS_A,
                                 preferred_element_type=jnp.float32)
        if bias is not None:
            logits = logits + bias

        # Softmax in f32; reciprocal on the EUP (approx) instead of a divide.
        m = jnp.max(logits, axis=-1, keepdims=True)
        e = jnp.exp(logits - m)
        s = jnp.sum(e, axis=-1, keepdims=True)
        attn = e * pl.reciprocal(s, approx=True)                 # (M, M)

        if attn_ref is not None:
            attn_ref[0, h] = attn          # debug-only path, dropped by default

        # attn @ V with V stored transposed -> trans-B dot_general.
        head_out = lax.dot_general(attn.astype(jnp.bfloat16), v_ht,
                                   dimension_numbers=_TRANS_B,
                                   preferred_element_type=jnp.float32)  # (M, dv)

        # fc(concat_h(o_h)) == sum_h o_h @ Wfc[h*dv:(h+1)*dv, :]
        o = o + jnp.dot(head_out.astype(jnp.bfloat16),
                        wfc_ref[h * d_v:(h + 1) * d_v, :],
                        preferred_element_type=jnp.float32)             # (M, D)

    # Residual + LayerNorm (eps=1e-6), all in f32.
    o = o + x
    mean = jnp.mean(o, axis=-1, keepdims=True)
    var = jnp.mean(jnp.square(o - mean), axis=-1, keepdims=True)
    ln1 = (o - mean) * lax.rsqrt(var + eps) * g1_ref[...] + b1_ref[...]

    if not with_ffn:
        out_ref[...] = ln1
        return

    # PositionwiseFeedForward: w2(relu(w1(x))) + residual, then LayerNorm.
    h1 = jnp.dot(ln1.astype(jnp.bfloat16), w1_ref[...],
                 preferred_element_type=jnp.float32) + fb1_ref[...]
    h1 = jnp.maximum(h1, 0.0)
    f = jnp.dot(h1.astype(jnp.bfloat16), w2_ref[...],
                preferred_element_type=jnp.float32) + fb2_ref[...]
    f = f + ln1
    mean2 = jnp.mean(f, axis=-1, keepdims=True)
    var2 = jnp.mean(jnp.square(f - mean2), axis=-1, keepdims=True)
    out_ref[...] = (f - mean2) * lax.rsqrt(var2 + eps) * g2_ref[...] + b2_ref[...]


# ---------- one-time parameter preparation (hoisted out of the hot path) ----------

def prepare_attention_params(wq, wk, wv, wfc, gamma, beta, *, d_k):
    """wq/wk: (D, H*dk), wv: (D, H*dv) in (in, out) = torch W.T layout;
    wfc: (H*dv, D); gamma/beta: (D,). Call once per module, not per forward."""
    D = wq.shape[0]
    scale = 1.0 / math.sqrt(d_k)
    wqkv = jnp.concatenate([(wq * scale).T, wk.T, wv.T], axis=0).astype(jnp.bfloat16)
    return dict(
        wqkv=wqkv,                                   # (2*H*dk + H*dv, D) bf16
        wfc=wfc.astype(jnp.bfloat16),                # (H*dv, D) bf16
        gamma=gamma.reshape(1, D).astype(jnp.float32),
        beta=beta.reshape(1, D).astype(jnp.float32))


def prepare_ffn_params(w1, b1, w2, b2, gamma, beta):
    """w1: (D, d_inner), w2: (d_inner, D) in (in, out) layout; biases/LN params 1-D."""
    D, H = w1.shape
    return dict(
        w1=w1.astype(jnp.bfloat16), b1=b1.reshape(1, H).astype(jnp.float32),
        w2=w2.astype(jnp.bfloat16), b2=b2.reshape(1, D).astype(jnp.float32),
        gamma=gamma.reshape(1, D).astype(jnp.float32),
        beta=beta.reshape(1, D).astype(jnp.float32))


# ---------- wrapper ----------

def fused_attention_block(x, attn_params, ffn_params=None, *, n_head, d_k, d_v,
                          key_mask=None, batch_block=None, return_attn=False):
    """Self-attention MultiHeadAttention forward (q = k = v = x), optionally
    followed by the PositionwiseFeedForward (i.e. a full EncoderLayer).

    x:        (B, L, D) float32
    key_mask: optional (B, L) {0,1} visibility mask applied along the key axis
              (the Renderer's masked_softmax path).  None == mask-less softmax.
    """
    B, L, D = x.shape
    HK = n_head * d_k
    HV = n_head * d_v

    if batch_block is None:
        # Keep M = batch_block*L <= 128 so the (M, M) softmax temporaries stay
        # resident in vregs, and keep >= 2 grid steps on the parallel axis so
        # both v7x TensorCores get work (no cost on v5e/v6e single-TC chips).
        batch_block = min(B, max(1, 128 // max(L, 1)))
        if B >= 2:
            batch_block = min(batch_block, max(1, B // 2))
        while B % batch_block:
            batch_block -= 1
    BB = batch_block
    assert B % BB == 0, "batch_block must divide batch size"
    NB = B // BB
    M = BB * L
    if NB > 1:
        assert M % 8 == 0, "batch_block * L must be a multiple of 8 when tiled"

    x2 = x.reshape(B * L, D).astype(jnp.float32)
    use_mask = key_mask is not None
    with_ffn = ffn_params is not None

    args = [x2]
    if use_mask:
        # Replicate along an 8-sublane axis so the per-step block is a
        # layout-safe (1, 8, M) tile; the kernel reads one row of it.
        km = key_mask.reshape(NB, 1, M).astype(jnp.float32)
        km = jnp.broadcast_to(km, (NB, 8, M))
        args.append(km)
    args += [attn_params['wqkv'], attn_params['wfc'],
             attn_params['gamma'], attn_params['beta']]
    if with_ffn:
        Hf = ffn_params['w1'].shape[1]
        args += [ffn_params['w1'], ffn_params['b1'], ffn_params['w2'],
                 ffn_params['b2'], ffn_params['gamma'], ffn_params['beta']]

    if return_attn:
        out_shape = (jax.ShapeDtypeStruct((B * L, D), jnp.float32),
                     jax.ShapeDtypeStruct((NB, n_head, M, M), jnp.float32))
        out_specs = (pl.BlockSpec((M, D), lambda n: (n, 0)),
                     pl.BlockSpec((1, n_head, M, M), lambda n: (n, 0, 0, 0)))
    else:
        out_shape = jax.ShapeDtypeStruct((B * L, D), jnp.float32)
        out_specs = pl.BlockSpec((M, D), lambda n: (n, 0))

    kernel = functools.partial(
        _fused_block_kernel, n_head=n_head, d_k=d_k, d_v=d_v, seq_len=L,
        apply_block_bias=(BB > 1), use_mask=use_mask, with_ffn=with_ffn,
        return_attn=return_attn)

    def _run(single_buffer_consts):
        const_kw = (dict(pipeline_mode=pl.Buffered(1))
                    if single_buffer_consts else {})

        def const_spec(shape):
            # Constant-index operand: index_map is all-zeros every step, so
            # double buffering buys nothing -> single-buffer to save VMEM.
            return pl.BlockSpec(shape, lambda *_: (0,) * len(shape), **const_kw)

        in_specs = [pl.BlockSpec((M, D), lambda n: (n, 0))]
        if use_mask:
            in_specs.append(pl.BlockSpec((1, 8, M), lambda n: (n, 0, 0)))
        in_specs += [const_spec((2 * HK + HV, D)),
                     const_spec((HV, D)),
                     const_spec((1, D)),
                     const_spec((1, D))]
        if with_ffn:
            in_specs += [const_spec((D, Hf)), const_spec((1, Hf)),
                         const_spec((Hf, D)), const_spec((1, D)),
                         const_spec((1, D)), const_spec((1, D))]

        return pl.pallas_call(
            kernel,
            out_shape=out_shape,
            grid=(NB,),
            in_specs=in_specs,
            out_specs=out_specs,
            compiler_params=pltpu.CompilerParams(
                dimension_semantics=("parallel",),
                vmem_limit_bytes=32 * 1024 * 1024),
        )(*args)

    try:
        result = _run(True)
    except Exception:
        # Fallback in case pipeline_mode=pl.Buffered(1) is unsupported on this
        # jax version; any genuine error re-surfaces from the second call.
        result = _run(False)

    if return_attn:
        out2, attn_blocks = result
    else:
        out2 = result
    out = out2.reshape(B, L, D)
    if not return_attn:
        return out

    if BB == 1:
        attn = attn_blocks.reshape(B, n_head, L, L)
    else:
        # Extract per-batch diagonal (L, L) blocks of the batch-folded attention.
        a = attn_blocks.reshape(NB, n_head, BB, L, BB, L)
        idx = jnp.arange(BB)
        a = a[:, :, idx, :, idx, :]                 # (BB, NB, H, L, L)
        attn = jnp.moveaxis(a, 0, 1).reshape(B, n_head, L, L)
    return out, attn


# ---------- pure-JAX references (PyTorch-equivalent) ----------

def _layernorm(x, gamma, beta, eps=1e-6):
    mean = jnp.mean(x, axis=-1, keepdims=True)
    var = jnp.mean(jnp.square(x - mean), axis=-1, keepdims=True)
    return (x - mean) * lax.rsqrt(var + eps) * gamma + beta


def reference_mha(x, wq, wk, wv, wfc, gamma, beta, *, n_head, d_k, d_v,
                  key_mask=None):
    B, L, D = x.shape
    residual = x
    qp = (x @ wq).reshape(B, L, n_head, d_k).transpose(0, 2, 1, 3)
    kp = (x @ wk).reshape(B, L, n_head, d_k).transpose(0, 2, 1, 3)
    vp = (x @ wv).reshape(B, L, n_head, d_v).transpose(0, 2, 1, 3)
    logits = jnp.einsum('bhqd,bhkd->bhqk', qp / math.sqrt(d_k), kp)
    if key_mask is not None:
        logits = jnp.where(key_mask[:, None, None, :] == 0, -jnp.inf, logits)
    attn = jax.nn.softmax(logits, axis=-1)
    out = jnp.einsum('bhqk,bhkd->bhqd', attn, vp)
    out = out.transpose(0, 2, 1, 3).reshape(B, L, n_head * d_v)
    out = out @ wfc + residual
    return _layernorm(out, gamma, beta), attn


def reference_encoder_layer(x, wq, wk, wv, wfc, g1, b1, w1, fb1, w2, fb2, g2, b2,
                            *, n_head, d_k, d_v, key_mask=None):
    out, attn = reference_mha(x, wq, wk, wv, wfc, g1, b1, n_head=n_head,
                              d_k=d_k, d_v=d_v, key_mask=key_mask)
    h = jnp.maximum(out @ w1 + fb1, 0.0)
    f = h @ w2 + fb2 + out
    return _layernorm(f, g2, b2), attn


if __name__ == "__main__":
    # Small shapes consistent with the Renderer: d_model=32, 4 heads, d_k=d_v=8.
    B, L, D = 2, 8, 32
    n_head, d_k, d_v = 4, 8, 8
    d_inner = 32

    key = jax.random.PRNGKey(0)
    ks = jax.random.split(key, 12)
    x = jax.random.normal(ks[0], (B, L, D), jnp.float32)
    wq = 0.1 * jax.random.normal(ks[1], (D, n_head * d_k), jnp.float32)
    wk = 0.1 * jax.random.normal(ks[2], (D, n_head * d_k), jnp.float32)
    wv = 0.1 * jax.random.normal(ks[3], (D, n_head * d_v), jnp.float32)
    wfc = 0.1 * jax.random.normal(ks[4], (n_head * d_v, D), jnp.float32)
    g1 = jnp.ones((D,), jnp.float32)       # MHA LayerNorm default affine
    b1 = jnp.zeros((D,), jnp.float32)
    w1 = 0.1 * jax.random.normal(ks[5], (D, d_inner), jnp.float32)
    fb1 = 0.05 * jax.random.normal(ks[6], (d_inner,), jnp.float32)
    w2 = 0.1 * jax.random.normal(ks[7], (d_inner, D), jnp.float32)
    fb2 = 0.05 * jax.random.normal(ks[8], (D,), jnp.float32)
    g2 = 1.0 + 0.1 * jax.random.normal(ks[9], (D,), jnp.float32)
    b2 = 0.1 * jax.random.normal(ks[10], (D,), jnp.float32)

    # Visibility mask like the Renderer's (last token always visible).
    key_mask = (jax.random.uniform(ks[11], (B, L)) > 0.3).astype(jnp.float32)
    key_mask = key_mask.at[:, -1].set(1.0)

    # One-time parameter prep (hoisted out of the per-call path).
    attn_p = prepare_attention_params(wq, wk, wv, wfc, g1, b1, d_k=d_k)
    ffn_p = prepare_ffn_params(w1, fb1, w2, fb2, g2, b2)

    # 1) Full EncoderLayer (slf_attn with visibility mask + pos_ffn), fused.
    out_enc = fused_attention_block(x, attn_p, ffn_p, n_head=n_head, d_k=d_k,
                                    d_v=d_v, key_mask=key_mask)
    out_enc = jax.block_until_ready(out_enc)
    ref_enc, _ = reference_encoder_layer(x, wq, wk, wv, wfc, g1, b1, w1, fb1,
                                         w2, fb2, g2, b2, n_head=n_head,
                                         d_k=d_k, d_v=d_v, key_mask=key_mask)
    assert out_enc.shape == (B, L, D)
    assert jnp.allclose(out_enc, ref_enc, atol=3e-2, rtol=3e-2)

    # 2) MHA-only (mask=None) with the debug attention-map path.
    out_mha, attn = fused_attention_block(x, attn_p, None, n_head=n_head,
                                          d_k=d_k, d_v=d_v, return_attn=True)
    out_mha = jax.block_until_ready(out_mha)
    attn = jax.block_until_ready(attn)
    ref_mha, ref_attn = reference_mha(x, wq, wk, wv, wfc, g1, b1,
                                      n_head=n_head, d_k=d_k, d_v=d_v)
    assert out_mha.shape == (B, L, D)
    assert attn.shape == (B, n_head, L, L)
    # bf16 matmul operands + approx reciprocal -> loosened tolerance.
    assert jnp.allclose(out_mha, ref_mha, atol=3e-2, rtol=3e-2)
    assert jnp.allclose(attn, ref_attn, atol=3e-2, rtol=3e-2)

    print("KERNEL_OK")
</pallas_src>

<mosaic_0001>
module attributes {stable_mosaic.version = 11 : i64} {
  func.func @_fused_block_kernel(%arg0: i32, %arg1: memref<8x32xf32, #tpu.memory_space<vmem>>, %arg2: memref<1x8x8xf32, #tpu.memory_space<vmem>>, %arg3: memref<96x32xbf16, #tpu.memory_space<vmem>>, %arg4: memref<32x32xbf16, #tpu.memory_space<vmem>>, %arg5: memref<1x32xf32, #tpu.memory_space<vmem>>, %arg6: memref<1x32xf32, #tpu.memory_space<vmem>>, %arg7: memref<32x32xbf16, #tpu.memory_space<vmem>>, %arg8: memref<1x32xf32, #tpu.memory_space<vmem>>, %arg9: memref<32x32xbf16, #tpu.memory_space<vmem>>, %arg10: memref<1x32xf32, #tpu.memory_space<vmem>>, %arg11: memref<1x32xf32, #tpu.memory_space<vmem>>, %arg12: memref<1x32xf32, #tpu.memory_space<vmem>>, %arg13: memref<8x32xf32, #tpu.memory_space<vmem>>) attributes {dimension_semantics = [#tpu.dimension_semantics<parallel>], iteration_bounds = array<i64: 2>, scalar_prefetch = 0 : i64, scratch_operands = 0 : i64, tpu.core_type = #tpu.core_type<tc>, window_params = [{transform_indices = @transform_0, window_bounds = array<i64: 8, 32>}, {transform_indices = @transform_1, window_bounds = array<i64: 1, 8, 8>}, {pipeline_mode = #tpu.pipeline_mode<synchronous>, transform_indices = @transform_2, window_bounds = array<i64: 96, 32>}, {pipeline_mode = #tpu.pipeline_mode<synchronous>, transform_indices = @transform_3, window_bounds = array<i64: 32, 32>}, {pipeline_mode = #tpu.pipeline_mode<synchronous>, transform_indices = @transform_4, window_bounds = array<i64: 1, 32>}, {pipeline_mode = #tpu.pipeline_mode<synchronous>, transform_indices = @transform_5, window_bounds = array<i64: 1, 32>}, {pipeline_mode = #tpu.pipeline_mode<synchronous>, transform_indices = @transform_6, window_bounds = array<i64: 32, 32>}, {pipeline_mode = #tpu.pipeline_mode<synchronous>, transform_indices = @transform_7, window_bounds = array<i64: 1, 32>}, {pipeline_mode = #tpu.pipeline_mode<synchronous>, transform_indices = @transform_8, window_bounds = array<i64: 32, 32>}, {pipeline_mode = #tpu.pipeline_mode<synchronous>, transform_indices = @transform_9, window_bounds = array<i64: 1, 32>}, {pipeline_mode = #tpu.pipeline_mode<synchronous>, transform_indices = @transform_10, window_bounds = array<i64: 1, 32>}, {pipeline_mode = #tpu.pipeline_mode<synchronous>, transform_indices = @transform_11, window_bounds = array<i64: 1, 32>}, {transform_indices = @transform_12, window_bounds = array<i64: 8, 32>}]} {
    %c0 = arith.constant 0 : index
    %c0_0 = arith.constant 0 : index
    %0 = vector.load %arg1[%c0, %c0_0] : memref<8x32xf32, #tpu.memory_space<vmem>>, vector<8x32xf32>
    %1 = arith.truncf %0 : vector<8x32xf32> to vector<8x32xbf16>
    %c0_1 = arith.constant 0 : index
    %c0_2 = arith.constant 0 : index
    %2 = vector.load %arg3[%c0_1, %c0_2] : memref<96x32xbf16, #tpu.memory_space<vmem>>, vector<96x32xbf16>
    %cst = arith.constant dense<0.000000e+00> : vector<96x8xf32>
    %3 = tpu.matmul %2, %1, %cst {dimension_numbers = #tpu.dot_dimension_numbers<[1], [1], [0], [0], [0, 0, 1, 0], [], []>} : vector<96x32xbf16>, vector<8x32xbf16>, vector<96x8xf32> -> vector<96x8xf32>
    %4 = arith.truncf %3 : vector<96x8xf32> to vector<96x8xbf16>
    %c0_3 = arith.constant 0 : index
    %c0_4 = arith.constant 0 : index
    %c0_5 = arith.constant 0 : index
    %5 = vector.load %arg2[%c0_3, %c0_4, %c0_5] : memref<1x8x8xf32, #tpu.memory_space<vmem>>, vector<1x1x8xf32>
    %6 = vector.shape_cast %5 : vector<1x1x8xf32> to vector<1x8xf32>
    %cst_6 = arith.constant 0.000000e+00 : f32
    %7 = vector.broadcast %cst_6 : f32 to vector<1x8xf32>
    %8 = arith.cmpf oeq, %6, %7 : vector<1x8xf32>
    %cst_7 = arith.constant -1.000000e+30 : f32
    %cst_8 = arith.constant 0.000000e+00 : f32
    %9 = vector.broadcast %cst_7 : f32 to vector<1x8xf32>
    %10 = vector.broadcast %cst_8 : f32 to vector<1x8xf32>
    %11 = arith.select %8, %9, %10 : vector<1x8xi1>, vector<1x8xf32>
    %cst_9 = arith.constant 0.000000e+00 : f32
    %12 = vector.broadcast %cst_9 : f32 to vector<8x32xf32>
    %13 = vector.extract_strided_slice %4 {offsets = [0, 0], sizes = [8, 8], strides = [1, 1]} : vector<96x8xbf16> to vector<8x8xbf16>
    %14 = vector.extract_strided_slice %4 {offsets = [32, 0], sizes = [8, 8], strides = [1, 1]} : vector<96x8xbf16> to vector<8x8xbf16>
    %15 = vector.extract_strided_slice %4 {offsets = [64, 0], sizes = [8, 8], strides = [1, 1]} : vector<96x8xbf16> to vector<8x8xbf16>
    %cst_10 = arith.constant dense<0.000000e+00> : vector<8x8xf32>
    %16 = tpu.matmul %13, %14, %cst_10 {dimension_numbers = #tpu.dot_dimension_numbers<[0], [0], [1], [1], [0, 1, 1, 1], [], []>} : vector<8x8xbf16>, vector<8x8xbf16>, vector<8x8xf32> -> vector<8x8xf32>
    %17 = vector.broadcast %11 : vector<1x8xf32> to vector<8x8xf32>
    %18 = arith.addf %16, %17 : vector<8x8xf32>
    %cst_11 = arith.constant dense<0xFF800000> : vector<8xf32>
    %19 = vector.multi_reduction <maximumf>, %18, %cst_11 [1] : vector<8x8xf32> to vector<8xf32>
    %20 = vector.shape_cast %19 : vector<8xf32> to vector<8x1xf32>
    %21 = vector.broadcast %20 : vector<8x1xf32> to vector<8x8xf32>
    %22 = arith.subf %18, %21 : vector<8x8xf32>
    %23 = math.exp %22 : vector<8x8xf32>
    %cst_12 = arith.constant dense<0.000000e+00> : vector<8xf32>
    %24 = vector.multi_reduction <add>, %23, %cst_12 [1] : vector<8x8xf32> to vector<8xf32>
    %25 = vector.shape_cast %24 : vector<8xf32> to vector<8x1xf32>
    %26 = tpu.reciprocal %25 {approx = true} : vector<8x1xf32> -> vector<8x1xf32>
    %27 = vector.broadcast %26 : vector<8x1xf32> to vector<8x8xf32>
    %28 = arith.mulf %23, %27 : vector<8x8xf32>
    %29 = arith.truncf %28 : vector<8x8xf32> to vector<8x8xbf16>
    %cst_13 = arith.constant dense<0.000000e+00> : vector<8x8xf32>
    %30 = tpu.matmul %29, %15, %cst_13 {dimension_numbers = #tpu.dot_dimension_numbers<[1], [1], [0], [0], [0, 0, 1, 0], [], []>} : vector<8x8xbf16>, vector<8x8xbf16>, vector<8x8xf32> -> vector<8x8xf32>
    %31 = arith.truncf %30 : vector<8x8xf32> to vector<8x8xbf16>
    %c0_14 = arith.constant 0 : index
    %c0_15 = arith.constant 0 : index
    %32 = vector.load %arg4[%c0_14, %c0_15] : memref<32x32xbf16, #tpu.memory_space<vmem>>, vector<8x32xbf16>
    %cst_16 = arith.constant dense<0.000000e+00> : vector<8x32xf32>
    %33 = tpu.matmul %31, %32, %cst_16 {dimension_numbers = #tpu.dot_dimension_numbers<[1], [0], [0], [1], [0, 0, 1, 1], [], []>} : vector<8x8xbf16>, vector<8x32xbf16>, vector<8x32xf32> -> vector<8x32xf32>
    %34 = arith.addf %12, %33 : vector<8x32xf32>
    %35 = vector.extract_strided_slice %4 {offsets = [8, 0], sizes = [8, 8], strides = [1, 1]} : vector<96x8xbf16> to vector<8x8xbf16>
    %36 = vector.extract_strided_slice %4 {offsets = [40, 0], sizes = [8, 8], strides = [1, 1]} : vector<96x8xbf16> to vector<8x8xbf16>
    %37 = vector.extract_strided_slice %4 {offsets = [72, 0], sizes = [8, 8], strides = [1, 1]} : vector<96x8xbf16> to vector<8x8xbf16>
    %cst_17 = arith.constant dense<0.000000e+00> : vector<8x8xf32>
    %38 = tpu.matmul %35, %36, %cst_17 {dimension_numbers = #tpu.dot_dimension_numbers<[0], [0], [1], [1], [0, 1, 1, 1], [], []>} : vector<8x8xbf16>, vector<8x8xbf16>, vector<8x8xf32> -> vector<8x8xf32>
    %39 = vector.broadcast %11 : vector<1x8xf32> to vector<8x8xf32>
    %40 = arith.addf %38, %39 : vector<8x8xf32>
    %cst_18 = arith.constant dense<0xFF800000> : vector<8xf32>
    %41 = vector.multi_reduction <maximumf>, %40, %cst_18 [1] : vector<8x8xf32> to vector<8xf32>
    %42 = vector.shape_cast %41 : vector<8xf32> to vector<8x1xf32>
    %43 = vector.broadcast %42 : vector<8x1xf32> to vector<8x8xf32>
    %44 = arith.subf %40, %43 : vector<8x8xf32>
    %45 = math.exp %44 : vector<8x8xf32>
    %cst_19 = arith.constant dense<0.000000e+00> : vector<8xf32>
    %46 = vector.multi_reduction <add>, %45, %cst_19 [1] : vector<8x8xf32> to vector<8xf32>
    %47 = vector.shape_cast %46 : vector<8xf32> to vector<8x1xf32>
    %48 = tpu.reciprocal %47 {approx = true} : vector<8x1xf32> -> vector<8x1xf32>
    %49 = vector.broadcast %48 : vector<8x1xf32> to vector<8x8xf32>
    %50 = arith.mulf %45, %49 : vector<8x8xf32>
    %51 = arith.truncf %50 : vector<8x8xf32> to vector<8x8xbf16>
    %cst_20 = arith.constant dense<0.000000e+00> : vector<8x8xf32>
    %52 = tpu.matmul %51, %37, %cst_20 {dimension_numbers = #tpu.dot_dimension_numbers<[1], [1], [0], [0], [0, 0, 1, 0], [], []>} : vector<8x8xbf16>, vector<8x8xbf16>, vector<8x8xf32> -> vector<8x8xf32>
    %53 = arith.truncf %52 : vector<8x8xf32> to vector<8x8xbf16>
    %c8 = arith.constant 8 : index
    %c0_21 = arith.constant 0 : index
    %54 = vector.load %arg4[%c8, %c0_21] : memref<32x32xbf16, #tpu.memory_space<vmem>>, vector<8x32xbf16>
    %cst_22 = arith.constant dense<0.000000e+00> : vector<8x32xf32>
    %55 = tpu.matmul %53, %54, %cst_22 {dimension_numbers = #tpu.dot_dimension_numbers<[1], [0], [0], [1], [0, 0, 1, 1], [], []>} : vector<8x8xbf16>, vector<8x32xbf16>, vector<8x32xf32> -> vector<8x32xf32>
    %56 = arith.addf %34, %55 : vector<8x32xf32>
    %57 = vector.extract_strided_slice %4 {offsets = [16, 0], sizes = [8, 8], strides = [1, 1]} : vector<96x8xbf16> to vector<8x8xbf16>
    %58 = vector.extract_strided_slice %4 {offsets = [48, 0], sizes = [8, 8], strides = [1, 1]} : vector<96x8xbf16> to vector<8x8xbf16>
    %59 = vector.extract_strided_slice %4 {offsets = [80, 0], sizes = [8, 8], strides = [1, 1]} : vector<96x8xbf16> to vector<8x8xbf16>
    %cst_23 = arith.constant dense<0.000000e+00> : vector<8x8xf32>
    %60 = tpu.matmul %57, %58, %cst_23 {dimension_numbers = #tpu.dot_dimension_numbers<[0], [0], [1], [1], [0, 1, 1, 1], [], []>} : vector<8x8xbf16>, vector<8x8xbf16>, vector<8x8xf32> -> vector<8x8xf32>
    %61 = vector.broadcast %11 : vector<1x8xf32> to vector<8x8xf32>
    %62 = arith.addf %60, %61 : vector<8x8xf32>
    %cst_24 = arith.constant dense<0xFF800000> : vector<8xf32>
    %63 = vector.multi_reduction <maximumf>, %62, %cst_24 [1] : vector<8x8xf32> to vector<8xf32>
    %64 = vector.shape_cast %63 : vector<8xf32> to vector<8x1xf32>
    %65 = vector.broadcast %64 : vector<8x1xf32> to vector<8x8xf32>
    %66 = arith.subf %62, %65 : vector<8x8xf32>
    %67 = math.exp %66 : vector<8x8xf32>
    %cst_25 = arith.constant dense<0.000000e+00> : vector<8xf32>
    %68 = vector.multi_reduction <add>, %67, %cst_25 [1] : vector<8x8xf32> to vector<8xf32>
    %69 = vector.shape_cast %68 : vector<8xf32> to vector<8x1xf32>
    %70 = tpu.reciprocal %69 {approx = true} : vector<8x1xf32> -> vector<8x1xf32>
    %71 = vector.broadcast %70 : vector<8x1xf32> to vector<8x8xf32>
    %72 = arith.mulf %67, %71 : vector<8x8xf32>
    %73 = arith.truncf %72 : vector<8x8xf32> to vector<8x8xbf16>
    %cst_26 = arith.constant dense<0.000000e+00> : vector<8x8xf32>
    %74 = tpu.matmul %73, %59, %cst_26 {dimension_numbers = #tpu.dot_dimension_numbers<[1], [1], [0], [0], [0, 0, 1, 0], [], []>} : vector<8x8xbf16>, vector<8x8xbf16>, vector<8x8xf32> -> vector<8x8xf32>
    %75 = arith.truncf %74 : vector<8x8xf32> to vector<8x8xbf16>
    %c16 = arith.constant 16 : index
    %c0_27 = arith.constant 0 : index
    %76 = vector.load %arg4[%c16, %c0_27] : memref<32x32xbf16, #tpu.memory_space<vmem>>, vector<8x32xbf16>
    %cst_28 = arith.constant dense<0.000000e+00> : vector<8x32xf32>
    %77 = tpu.matmul %75, %76, %cst_28 {dimension_numbers = #tpu.dot_dimension_numbers<[1], [0], [0], [1], [0, 0, 1, 1], [], []>} : vector<8x8xbf16>, vector<8x32xbf16>, vector<8x32xf32> -> vector<8x32xf32>
    %78 = arith.addf %56, %77 : vector<8x32xf32>
    %79 = vector.extract_strided_slice %4 {offsets = [24, 0], sizes = [8, 8], strides = [1, 1]} : vector<96x8xbf16> to vector<8x8xbf16>
    %80 = vector.extract_strided_slice %4 {offsets = [56, 0], sizes = [8, 8], strides = [1, 1]} : vector<96x8xbf16> to vector<8x8xbf16>
    %81 = vector.extract_strided_slice %4 {offsets = [88, 0], sizes = [8, 8], strides = [1, 1]} : vector<96x8xbf16> to vector<8x8xbf16>
    %cst_29 = arith.constant dense<0.000000e+00> : vector<8x8xf32>
    %82 = tpu.matmul %79, %80, %cst_29 {dimension_numbers = #tpu.dot_dimension_numbers<[0], [0], [1], [1], [0, 1, 1, 1], [], []>} : vector<8x8xbf16>, vector<8x8xbf16>, vector<8x8xf32> -> vector<8x8xf32>
    %83 = vector.broadcast %11 : vector<1x8xf32> to vector<8x8xf32>
    %84 = arith.addf %82, %83 : vector<8x8xf32>
    %cst_30 = arith.constant dense<0xFF800000> : vector<8xf32>
    %85 = vector.multi_reduction <maximumf>, %84, %cst_30 [1] : vector<8x8xf32> to vector<8xf32>
    %86 = vector.shape_cast %85 : vector<8xf32> to vector<8x1xf32>
    %87 = vector.broadcast %86 : vector<8x1xf32> to vector<8x8xf32>
    %88 = arith.subf %84, %87 : vector<8x8xf32>
    %89 = math.exp %88 : vector<8x8xf32>
    %cst_31 = arith.constant dense<0.000000e+00> : vector<8xf32>
    %90 = vector.multi_reduction <add>, %89, %cst_31 [1] : vector<8x8xf32> to vector<8xf32>
    %91 = vector.shape_cast %90 : vector<8xf32> to vector<8x1xf32>
    %92 = tpu.reciprocal %91 {approx = true} : vector<8x1xf32> -> vector<8x1xf32>
    %93 = vector.broadcast %92 : vector<8x1xf32> to vector<8x8xf32>
    %94 = arith.mulf %89, %93 : vector<8x8xf32>
    %95 = arith.truncf %94 : vector<8x8xf32> to vector<8x8xbf16>
    %cst_32 = arith.constant dense<0.000000e+00> : vector<8x8xf32>
    %96 = tpu.matmul %95, %81, %cst_32 {dimension_numbers = #tpu.dot_dimension_numbers<[1], [1], [0], [0], [0, 0, 1, 0], [], []>} : vector<8x8xbf16>, vector<8x8xbf16>, vector<8x8xf32> -> vector<8x8xf32>
    %97 = arith.truncf %96 : vector<8x8xf32> to vector<8x8xbf16>
    %c24 = arith.constant 24 : index
    %c0_33 = arith.constant 0 : index
    %98 = vector.load %arg4[%c24, %c0_33] : memref<32x32xbf16, #tpu.memory_space<vmem>>, vector<8x32xbf16>
    %cst_34 = arith.constant dense<0.000000e+00> : vector<8x32xf32>
    %99 = tpu.matmul %97, %98, %cst_34 {dimension_numbers = #tpu.dot_dimension_numbers<[1], [0], [0], [1], [0, 0, 1, 1], [], []>} : vector<8x8xbf16>, vector<8x32xbf16>, vector<8x32xf32> -> vector<8x32xf32>
    %100 = arith.addf %78, %99 : vector<8x32xf32>
    %101 = arith.addf %100, %0 : vector<8x32xf32>
    %cst_35 = arith.constant dense<0.000000e+00> : vector<8xf32>
    %102 = vector.multi_reduction <add>, %101, %cst_35 [1] : vector<8x32xf32> to vector<8xf32>
    %103 = vector.shape_cast %102 : vector<8xf32> to vector<8x1xf32>
    %cst_36 = arith.constant 3.200000e+01 : f32
    %104 = vector.broadcast %cst_36 : f32 to vector<8x1xf32>
    %105 = arith.divf %103, %104 : vector<8x1xf32>
    %106 = vector.broadcast %105 : vector<8x1xf32> to vector<8x32xf32>
    %107 = arith.subf %101, %106 : vector<8x32xf32>
    %108 = arith.mulf %107, %107 : vector<8x32xf32>
    %cst_37 = arith.constant dense<0.000000e+00> : vector<8xf32>
    %109 = vector.multi_reduction <add>, %108, %cst_37 [1] : vector<8x32xf32> to vector<8xf32>
    %110 = vector.shape_cast %109 : vector<8xf32> to vector<8x1xf32>
    %cst_38 = arith.constant 3.200000e+01 : f32
    %111 = vector.broadcast %cst_38 : f32 to vector<8x1xf32>
    %112 = arith.divf %110, %111 : vector<8x1xf32>
    %113 = vector.broadcast %105 : vector<8x1xf32> to vector<8x32xf32>
    %114 = arith.subf %101, %113 : vector<8x32xf32>
    %cst_39 = arith.constant 9.99999997E-7 : f32
    %115 = vector.broadcast %cst_39 : f32 to vector<8x1xf32>
    %116 = arith.addf %112, %115 : vector<8x1xf32>
    %117 = math.rsqrt %116 : vector<8x1xf32>
    %118 = vector.broadcast %117 : vector<8x1xf32> to vector<8x32xf32>
    %119 = arith.mulf %114, %118 : vector<8x32xf32>
    %c0_40 = arith.constant 0 : index
    %c0_41 = arith.constant 0 : index
    %120 = vector.load %arg5[%c0_40, %c0_41] : memref<1x32xf32, #tpu.memory_space<vmem>>, vector<1x32xf32>
    %121 = vector.broadcast %120 : vector<1x32xf32> to vector<8x32xf32>
    %122 = arith.mulf %119, %121 : vector<8x32xf32>
    %c0_42 = arith.constant 0 : index
    %c0_43 = arith.constant 0 : index
    %123 = vector.load %arg6[%c0_42, %c0_43] : memref<1x32xf32, #tpu.memory_space<vmem>>, vector<1x32xf32>
    %124 = vector.broadcast %123 : vector<1x32xf32> to vector<8x32xf32>
    %125 = arith.addf %122, %124 : vector<8x32xf32>
    %126 = arith.truncf %125 : vector<8x32xf32> to vector<8x32xbf16>
    %c0_44 = arith.constant 0 : index
    %c0_45 = arith.constant 0 : index
    %127 = vector.load %arg7[%c0_44, %c0_45] : memref<32x32xbf16, #tpu.memory_space<vmem>>, vector<32x32xbf16>
    %cst_46 = arith.constant dense<0.000000e+00> : vector<8x32xf32>
    %128 = tpu.matmul %126, %127, %cst_46 {dimension_numbers = #tpu.dot_dimension_numbers<[1], [0], [0], [1], [0, 0, 1, 1], [], []>} : vector<8x32xbf16>, vector<32x32xbf16>, vector<8x32xf32> -> vector<8x32xf32>
    %c0_47 = arith.constant 0 : index
    %c0_48 = arith.constant 0 : index
    %129 = vector.load %arg8[%c0_47, %c0_48] : memref<1x32xf32, #tpu.memory_space<vmem>>, vector<1x32xf32>
    %130 = vector.broadcast %129 : vector<1x32xf32> to vector<8x32xf32>
    %131 = arith.addf %128, %130 : vector<8x32xf32>
    %cst_49 = arith.constant 0.000000e+00 : f32
    %132 = vector.broadcast %cst_49 : f32 to vector<8x32xf32>
    %133 = arith.maximumf %131, %132 : vector<8x32xf32>
    %134 = arith.truncf %133 : vector<8x32xf32> to vector<8x32xbf16>
    %c0_50 = arith.constant 0 : index
    %c0_51 = arith.constant 0 : index
    %135 = vector.load %arg9[%c0_50, %c0_51] : memref<32x32xbf16, #tpu.memory_space<vmem>>, vector<32x32xbf16>
    %cst_52 = arith.constant dense<0.000000e+00> : vector<8x32xf32>
    %136 = tpu.matmul %134, %135, %cst_52 {dimension_numbers = #tpu.dot_dimension_numbers<[1], [0], [0], [1], [0, 0, 1, 1], [], []>} : vector<8x32xbf16>, vector<32x32xbf16>, vector<8x32xf32> -> vector<8x32xf32>
    %c0_53 = arith.constant 0 : index
    %c0_54 = arith.constant 0 : index
    %137 = vector.load %arg10[%c0_53, %c0_54] : memref<1x32xf32, #tpu.memory_space<vmem>>, vector<1x32xf32>
    %138 = vector.broadcast %137 : vector<1x32xf32> to vector<8x32xf32>
    %139 = arith.addf %136, %138 : vector<8x32xf32>
    %140 = arith.addf %139, %125 : vector<8x32xf32>
    %cst_55 = arith.constant dense<0.000000e+00> : vector<8xf32>
    %141 = vector.multi_reduction <add>, %140, %cst_55 [1] : vector<8x32xf32> to vector<8xf32>
    %142 = vector.shape_cast %141 : vector<8xf32> to vector<8x1xf32>
    %cst_56 = arith.constant 3.200000e+01 : f32
    %143 = vector.broadcast %cst_56 : f32 to vector<8x1xf32>
    %144 = arith.divf %142, %143 : vector<8x1xf32>
    %145 = vector.broadcast %144 : vector<8x1xf32> to vector<8x32xf32>
    %146 = arith.subf %140, %145 : vector<8x32xf32>
    %147 = arith.mulf %146, %146 : vector<8x32xf32>
    %cst_57 = arith.constant dense<0.000000e+00> : vector<8xf32>
    %148 = vector.multi_reduction <add>, %147, %cst_57 [1] : vector<8x32xf32> to vector<8xf32>
    %149 = vector.shape_cast %148 : vector<8xf32> to vector<8x1xf32>
    %cst_58 = arith.constant 3.200000e+01 : f32
    %150 = vector.broadcast %cst_58 : f32 to vector<8x1xf32>
    %151 = arith.divf %149, %150 : vector<8x1xf32>
    %152 = vector.broadcast %144 : vector<8x1xf32> to vector<8x32xf32>
    %153 = arith.subf %140, %152 : vector<8x32xf32>
    %cst_59 = arith.constant 9.99999997E-7 : f32
    %154 = vector.broadcast %cst_59 : f32 to vector<8x1xf32>
    %155 = arith.addf %151, %154 : vector<8x1xf32>
    %156 = math.rsqrt %155 : vector<8x1xf32>
    %157 = vector.broadcast %156 : vector<8x1xf32> to vector<8x32xf32>
    %158 = arith.mulf %153, %157 : vector<8x32xf32>
    %c0_60 = arith.constant 0 : index
    %c0_61 = arith.constant 0 : index
    %159 = vector.load %arg11[%c0_60, %c0_61] : memref<1x32xf32, #tpu.memory_space<vmem>>, vector<1x32xf32>
    %160 = vector.broadcast %159 : vector<1x32xf32> to vector<8x32xf32>
    %161 = arith.mulf %158, %160 : vector<8x32xf32>
    %c0_62 = arith.constant 0 : index
    %c0_63 = arith.constant 0 : index
    %162 = vector.load %arg12[%c0_62, %c0_63] : memref<1x32xf32, #tpu.memory_space<vmem>>, vector<1x32xf32>
    %163 = vector.broadcast %162 : vector<1x32xf32> to vector<8x32xf32>
    %164 = arith.addf %161, %163 : vector<8x32xf32>
    %c0_64 = arith.constant 0 : index
    %c0_65 = arith.constant 0 : index
    %165 = vector.load %arg13[%c0_64, %c0_65] : memref<8x32xf32, #tpu.memory_space<vmem>>, vector<8x32xf32>
    tpu.vector_store %arg13[%c0_64, %c0_65], %164 {strides = array<i32>} : memref<8x32xf32, #tpu.memory_space<vmem>>, vector<8x32xf32>,
    return
  }
  func.func @transform_0(%arg0: i32) -> (i32, i32) {
    %c0_i32 = arith.constant 0 : i32
    %c0_i32_0 = arith.constant 0 : i32
    return %arg0, %c0_i32 : i32, i32
  }
  func.func @transform_1(%arg0: i32) -> (i32, i32, i32) {
    %c0_i32 = arith.constant 0 : i32
    %c0_i32_0 = arith.constant 0 : i32
    %c0_i32_1 = arith.constant 0 : i32
    return %arg0, %c0_i32, %c0_i32_0 : i32, i32, i32
  }
  func.func @transform_2(%arg0: i32) -> (i32, i32) {
    %c0_i32 = arith.constant 0 : i32
    %c0_i32_0 = arith.constant 0 : i32
    %c0_i32_1 = arith.constant 0 : i32
    return %c0_i32, %c0_i32_0 : i32, i32
  }
  func.func @transform_3(%arg0: i32) -> (i32, i32) {
    %c0_i32 = arith.constant 0 : i32
    %c0_i32_0 = arith.constant 0 : i32
    %c0_i32_1 = arith.constant 0 : i32
    return %c0_i32, %c0_i32_0 : i32, i32
  }
  func.func @transform_4(%arg0: i32) -> (i32, i32) {
    %c0_i32 = arith.constant 0 : i32
    %c0_i32_0 = arith.constant 0 : i32
    %c0_i32_1 = arith.constant 0 : i32
    return %c0_i32, %c0_i32_0 : i32, i32
  }
  func.func @transform_5(%arg0: i32) -> (i32, i32) {
    %c0_i32 = arith.constant 0 : i32
    %c0_i32_0 = arith.constant 0 : i32
    %c0_i32_1 = arith.constant 0 : i32
    return %c0_i32, %c0_i32_0 : i32, i32
  }
  func.func @transform_6(%arg0: i32) -> (i32, i32) {
    %c0_i32 = arith.constant 0 : i32
    %c0_i32_0 = arith.constant 0 : i32
    %c0_i32_1 = arith.constant 0 : i32
    return %c0_i32, %c0_i32_0 : i32, i32
  }
  func.func @transform_7(%arg0: i32) -> (i32, i32) {
    %c0_i32 = arith.constant 0 : i32
    %c0_i32_0 = arith.constant 0 : i32
    %c0_i32_1 = arith.constant 0 : i32
    return %c0_i32, %c0_i32_0 : i32, i32
  }
  func.func @transform_8(%arg0: i32) -> (i32, i32) {
    %c0_i32 = arith.constant 0 : i32
    %c0_i32_0 = arith.constant 0 : i32
    %c0_i32_1 = arith.constant 0 : i32
    return %c0_i32, %c0_i32_0 : i32, i32
  }
  func.func @transform_9(%arg0: i32) -> (i32, i32) {
    %c0_i32 = arith.constant 0 : i32
    %c0_i32_0 = arith.constant 0 : i32
    %c0_i32_1 = arith.constant 0 : i32
    return %c0_i32, %c0_i32_0 : i32, i32
  }
  func.func @transform_10(%arg0: i32) -> (i32, i32) {
    %c0_i32 = arith.constant 0 : i32
    %c0_i32_0 = arith.constant 0 : i32
    %c0_i32_1 = arith.constant 0 : i32
    return %c0_i32, %c0_i32_0 : i32, i32
  }
  func.func @transform_11(%arg0: i32) -> (i32, i32) {
    %c0_i32 = arith.constant 0 : i32
    %c0_i32_0 = arith.constant 0 : i32
    %c0_i32_1 = arith.constant 0 : i32
    return %c0_i32, %c0_i32_0 : i32, i32
  }
  func.func @transform_12(%arg0: i32) -> (i32, i32) {
    %c0_i32 = arith.constant 0 : i32
    %c0_i32_0 = arith.constant 0 : i32
    return %arg0, %c0_i32 : i32, i32
  }
}

module attributes {stable_mosaic.version = 11 : i64} {
  func.func @_fused_block_kernel(%arg0: i32, %arg1: memref<8x32xf32, #tpu.memory_space<vmem>>, %arg2: memref<1x8x8xf32, #tpu.memory_space<vmem>>, %arg3: memref<96x32xbf16, #tpu.memory_space<vmem>>, %arg4: memref<32x32xbf16, #tpu.memory_space<vmem>>, %arg5: memref<1x32xf32, #tpu.memory_space<vmem>>, %arg6: memref<1x32xf32, #tpu.memory_space<vmem>>, %arg7: memref<32x32xbf16, #tpu.memory_space<vmem>>, %arg8: memref<1x32xf32, #tpu.memory_space<vmem>>, %arg9: memref<32x32xbf16, #tpu.memory_space<vmem>>, %arg10: memref<1x32xf32, #tpu.memory_space<vmem>>, %arg11: memref<1x32xf32, #tpu.memory_space<vmem>>, %arg12: memref<1x32xf32, #tpu.memory_space<vmem>>, %arg13: memref<8x32xf32, #tpu.memory_space<vmem>>) attributes {dimension_semantics = [#tpu.dimension_semantics<parallel>], iteration_bounds = array<i64: 2>, scalar_prefetch = 0 : i64, scratch_operands = 0 : i64, tpu.core_type = #tpu.core_type<tc>, window_params = [{transform_indices = @transform_0, window_bounds = array<i64: 8, 32>}, {transform_indices = @transform_1, window_bounds = array<i64: 1, 8, 8>}, {pipeline_mode = #tpu.pipeline_mode<synchronous>, transform_indices = @transform_2, window_bounds = array<i64: 96, 32>}, {pipeline_mode = #tpu.pipeline_mode<synchronous>, transform_indices = @transform_3, window_bounds = array<i64: 32, 32>}, {pipeline_mode = #tpu.pipeline_mode<synchronous>, transform_indices = @transform_4, window_bounds = array<i64: 1, 32>}, {pipeline_mode = #tpu.pipeline_mode<synchronous>, transform_indices = @transform_5, window_bounds = array<i64: 1, 32>}, {pipeline_mode = #tpu.pipeline_mode<synchronous>, transform_indices = @transform_6, window_bounds = array<i64: 32, 32>}, {pipeline_mode = #tpu.pipeline_mode<synchronous>, transform_indices = @transform_7, window_bounds = array<i64: 1, 32>}, {pipeline_mode = #tpu.pipeline_mode<synchronous>, transform_indices = @transform_8, window_bounds = array<i64: 32, 32>}, {pipeline_mode = #tpu.pipeline_mode<synchronous>, transform_indices = @transform_9, window_bounds = array<i64: 1, 32>}, {pipeline_mode = #tpu.pipeline_mode<synchronous>, transform_indices = @transform_10, window_bounds = array<i64: 1, 32>}, {pipeline_mode = #tpu.pipeline_mode<synchronous>, transform_indices = @transform_11, window_bounds = array<i64: 1, 32>}, {transform_indices = @transform_12, window_bounds = array<i64: 8, 32>}]} {
    %c0 = arith.constant 0 : index
    %c0_0 = arith.constant 0 : index
    %0 = vector.load %arg1[%c0, %c0_0] : memref<8x32xf32, #tpu.memory_space<vmem>>, vector<8x32xf32>
    %1 = arith.truncf %0 : vector<8x32xf32> to vector<8x32xbf16>
    %c0_1 = arith.constant 0 : index
    %c0_2 = arith.constant 0 : index
    %2 = vector.load %arg3[%c0_1, %c0_2] : memref<96x32xbf16, #tpu.memory_space<vmem>>, vector<96x32xbf16>
    %cst = arith.constant dense<0.000000e+00> : vector<96x8xf32>
    %3 = tpu.matmul %2, %1, %cst {dimension_numbers = #tpu.dot_dimension_numbers<[1], [1], [0], [0], [0, 0, 1, 0], [], []>} : vector<96x32xbf16>, vector<8x32xbf16>, vector<96x8xf32> -> vector<96x8xf32>
    %4 = arith.truncf %3 : vector<96x8xf32> to vector<96x8xbf16>
    %c0_3 = arith.constant 0 : index
    %c0_4 = arith.constant 0 : index
    %c0_5 = arith.constant 0 : index
    %5 = vector.load %arg2[%c0_3, %c0_4, %c0_5] : memref<1x8x8xf32, #tpu.memory_space<vmem>>, vector<1x1x8xf32>
    %6 = vector.shape_cast %5 : vector<1x1x8xf32> to vector<1x8xf32>
    %cst_6 = arith.constant 0.000000e+00 : f32
    %7 = vector.broadcast %cst_6 : f32 to vector<1x8xf32>
    %8 = arith.cmpf oeq, %6, %7 : vector<1x8xf32>
    %cst_7 = arith.constant -1.000000e+30 : f32
    %cst_8 = arith.constant 0.000000e+00 : f32
    %9 = vector.broadcast %cst_7 : f32 to vector<1x8xf32>
    %10 = vector.broadcast %cst_8 : f32 to vector<1x8xf32>
    %11 = arith.select %8, %9, %10 : vector<1x8xi1>, vector<1x8xf32>
    %cst_9 = arith.constant 0.000000e+00 : f32
    %12 = vector.broadcast %cst_9 : f32 to vector<8x32xf32>
    %13 = vector.extract_strided_slice %4 {offsets = [0, 0], sizes = [8, 8], strides = [1, 1]} : vector<96x8xbf16> to vector<8x8xbf16>
    %14 = vector.extract_strided_slice %4 {offsets = [32, 0], sizes = [8, 8], strides = [1, 1]} : vector<96x8xbf16> to vector<8x8xbf16>
    %15 = vector.extract_strided_slice %4 {offsets = [64, 0], sizes = [8, 8], strides = [1, 1]} : vector<96x8xbf16> to vector<8x8xbf16>
    %cst_10 = arith.constant dense<0.000000e+00> : vector<8x8xf32>
    %16 = tpu.matmul %13, %14, %cst_10 {dimension_numbers = #tpu.dot_dimension_numbers<[0], [0], [1], [1], [0, 1, 1, 1], [], []>} : vector<8x8xbf16>, vector<8x8xbf16>, vector<8x8xf32> -> vector<8x8xf32>
    %17 = vector.broadcast %11 : vector<1x8xf32> to vector<8x8xf32>
    %18 = arith.addf %16, %17 : vector<8x8xf32>
    %cst_11 = arith.constant dense<0xFF800000> : vector<8xf32>
    %19 = vector.multi_reduction <maximumf>, %18, %cst_11 [1] : vector<8x8xf32> to vector<8xf32>
    %20 = vector.shape_cast %19 : vector<8xf32> to vector<8x1xf32>
    %21 = vector.broadcast %20 : vector<8x1xf32> to vector<8x8xf32>
    %22 = arith.subf %18, %21 : vector<8x8xf32>
    %23 = math.exp %22 : vector<8x8xf32>
    %cst_12 = arith.constant dense<0.000000e+00> : vector<8xf32>
    %24 = vector.multi_reduction <add>, %23, %cst_12 [1] : vector<8x8xf32> to vector<8xf32>
    %25 = vector.shape_cast %24 : vector<8xf32> to vector<8x1xf32>
    %26 = tpu.reciprocal %25 {approx = true} : vector<8x1xf32> -> vector<8x1xf32>
    %27 = vector.broadcast %26 : vector<8x1xf32> to vector<8x8xf32>
    %28 = arith.mulf %23, %27 : vector<8x8xf32>
    %29 = arith.truncf %28 : vector<8x8xf32> to vector<8x8xbf16>
    %cst_13 = arith.constant dense<0.000000e+00> : vector<8x8xf32>
    %30 = tpu.matmul %29, %15, %cst_13 {dimension_numbers = #tpu.dot_dimension_numbers<[1], [1], [0], [0], [0, 0, 1, 0], [], []>} : vector<8x8xbf16>, vector<8x8xbf16>, vector<8x8xf32> -> vector<8x8xf32>
    %31 = arith.truncf %30 : vector<8x8xf32> to vector<8x8xbf16>
    %c0_14 = arith.constant 0 : index
    %c0_15 = arith.constant 0 : index
    %32 = vector.load %arg4[%c0_14, %c0_15] : memref<32x32xbf16, #tpu.memory_space<vmem>>, vector<8x32xbf16>
    %cst_16 = arith.constant dense<0.000000e+00> : vector<8x32xf32>
    %33 = tpu.matmul %31, %32, %cst_16 {dimension_numbers = #tpu.dot_dimension_numbers<[1], [0], [0], [1], [0, 0, 1, 1], [], []>} : vector<8x8xbf16>, vector<8x32xbf16>, vector<8x32xf32> -> vector<8x32xf32>
    %34 = arith.addf %12, %33 : vector<8x32xf32>
    %35 = vector.extract_strided_slice %4 {offsets = [8, 0], sizes = [8, 8], strides = [1, 1]} : vector<96x8xbf16> to vector<8x8xbf16>
    %36 = vector.extract_strided_slice %4 {offsets = [40, 0], sizes = [8, 8], strides = [1, 1]} : vector<96x8xbf16> to vector<8x8xbf16>
    %37 = vector.extract_strided_slice %4 {offsets = [72, 0], sizes = [8, 8], strides = [1, 1]} : vector<96x8xbf16> to vector<8x8xbf16>
    %cst_17 = arith.constant dense<0.000000e+00> : vector<8x8xf32>
    %38 = tpu.matmul %35, %36, %cst_17 {dimension_numbers = #tpu.dot_dimension_numbers<[0], [0], [1], [1], [0, 1, 1, 1], [], []>} : vector<8x8xbf16>, vector<8x8xbf16>, vector<8x8xf32> -> vector<8x8xf32>
    %39 = vector.broadcast %11 : vector<1x8xf32> to vector<8x8xf32>
    %40 = arith.addf %38, %39 : vector<8x8xf32>
    %cst_18 = arith.constant dense<0xFF800000> : vector<8xf32>
    %41 = vector.multi_reduction <maximumf>, %40, %cst_18 [1] : vector<8x8xf32> to vector<8xf32>
    %42 = vector.shape_cast %41 : vector<8xf32> to vector<8x1xf32>
    %43 = vector.broadcast %42 : vector<8x1xf32> to vector<8x8xf32>
    %44 = arith.subf %40, %43 : vector<8x8xf32>
    %45 = math.exp %44 : vector<8x8xf32>
    %cst_19 = arith.constant dense<0.000000e+00> : vector<8xf32>
    %46 = vector.multi_reduction <add>, %45, %cst_19 [1] : vector<8x8xf32> to vector<8xf32>
    %47 = vector.shape_cast %46 : vector<8xf32> to vector<8x1xf32>
    %48 = tpu.reciprocal %47 {approx = true} : vector<8x1xf32> -> vector<8x1xf32>
    %49 = vector.broadcast %48 : vector<8x1xf32> to vector<8x8xf32>
    %50 = arith.mulf %45, %49 : vector<8x8xf32>
    %51 = arith.truncf %50 : vector<8x8xf32> to vector<8x8xbf16>
    %cst_20 = arith.constant dense<0.000000e+00> : vector<8x8xf32>
    %52 = tpu.matmul %51, %37, %cst_20 {dimension_numbers = #tpu.dot_dimension_numbers<[1], [1], [0], [0], [0, 0, 1, 0], [], []>} : vector<8x8xbf16>, vector<8x8xbf16>, vector<8x8xf32> -> vector<8x8xf32>
    %53 = arith.truncf %52 : vector<8x8xf32> to vector<8x8xbf16>
    %c8 = arith.constant 8 : index
    %c0_21 = arith.constant 0 : index
    %54 = vector.load %arg4[%c8, %c0_21] : memref<32x32xbf16, #tpu.memory_space<vmem>>, vector<8x32xbf16>
    %cst_22 = arith.constant dense<0.000000e+00> : vector<8x32xf32>
    %55 = tpu.matmul %53, %54, %cst_22 {dimension_numbers = #tpu.dot_dimension_numbers<[1], [0], [0], [1], [0, 0, 1, 1], [], []>} : vector<8x8xbf16>, vector<8x32xbf16>, vector<8x32xf32> -> vector<8x32xf32>
    %56 = arith.addf %34, %55 : vector<8x32xf32>
    %57 = vector.extract_strided_slice %4 {offsets = [16, 0], sizes = [8, 8], strides = [1, 1]} : vector<96x8xbf16> to vector<8x8xbf16>
    %58 = vector.extract_strided_slice %4 {offsets = [48, 0], sizes = [8, 8], strides = [1, 1]} : vector<96x8xbf16> to vector<8x8xbf16>
    %59 = vector.extract_strided_slice %4 {offsets = [80, 0], sizes = [8, 8], strides = [1, 1]} : vector<96x8xbf16> to vector<8x8xbf16>
    %cst_23 = arith.constant dense<0.000000e+00> : vector<8x8xf32>
    %60 = tpu.matmul %57, %58, %cst_23 {dimension_numbers = #tpu.dot_dimension_numbers<[0], [0], [1], [1], [0, 1, 1, 1], [], []>} : vector<8x8xbf16>, vector<8x8xbf16>, vector<8x8xf32> -> vector<8x8xf32>
    %61 = vector.broadcast %11 : vector<1x8xf32> to vector<8x8xf32>
    %62 = arith.addf %60, %61 : vector<8x8xf32>
    %cst_24 = arith.constant dense<0xFF800000> : vector<8xf32>
    %63 = vector.multi_reduction <maximumf>, %62, %cst_24 [1] : vector<8x8xf32> to vector<8xf32>
    %64 = vector.shape_cast %63 : vector<8xf32> to vector<8x1xf32>
    %65 = vector.broadcast %64 : vector<8x1xf32> to vector<8x8xf32>
    %66 = arith.subf %62, %65 : vector<8x8xf32>
    %67 = math.exp %66 : vector<8x8xf32>
    %cst_25 = arith.constant dense<0.000000e+00> : vector<8xf32>
    %68 = vector.multi_reduction <add>, %67, %cst_25 [1] : vector<8x8xf32> to vector<8xf32>
    %69 = vector.shape_cast %68 : vector<8xf32> to vector<8x1xf32>
    %70 = tpu.reciprocal %69 {approx = true} : vector<8x1xf32> -> vector<8x1xf32>
    %71 = vector.broadcast %70 : vector<8x1xf32> to vector<8x8xf32>
    %72 = arith.mulf %67, %71 : vector<8x8xf32>
    %73 = arith.truncf %72 : vector<8x8xf32> to vector<8x8xbf16>
    %cst_26 = arith.constant dense<0.000000e+00> : vector<8x8xf32>
    %74 = tpu.matmul %73, %59, %cst_26 {dimension_numbers = #tpu.dot_dimension_numbers<[1], [1], [0], [0], [0, 0, 1, 0], [], []>} : vector<8x8xbf16>, vector<8x8xbf16>, vector<8x8xf32> -> vector<8x8xf32>
    %75 = arith.truncf %74 : vector<8x8xf32> to vector<8x8xbf16>
    %c16 = arith.constant 16 : index
    %c0_27 = arith.constant 0 : index
    %76 = vector.load %arg4[%c16, %c0_27] : memref<32x32xbf16, #tpu.memory_space<vmem>>, vector<8x32xbf16>
    %cst_28 = arith.constant dense<0.000000e+00> : vector<8x32xf32>
    %77 = tpu.matmul %75, %76, %cst_28 {dimension_numbers = #tpu.dot_dimension_numbers<[1], [0], [0], [1], [0, 0, 1, 1], [], []>} : vector<8x8xbf16>, vector<8x32xbf16>, vector<8x32xf32> -> vector<8x32xf32>
    %78 = arith.addf %56, %77 : vector<8x32xf32>
    %79 = vector.extract_strided_slice %4 {offsets = [24, 0], sizes = [8, 8], strides = [1, 1]} : vector<96x8xbf16> to vector<8x8xbf16>
    %80 = vector.extract_strided_slice %4 {offsets = [56, 0], sizes = [8, 8], strides = [1, 1]} : vector<96x8xbf16> to vector<8x8xbf16>
    %81 = vector.extract_strided_slice %4 {offsets = [88, 0], sizes = [8, 8], strides = [1, 1]} : vector<96x8xbf16> to vector<8x8xbf16>
    %cst_29 = arith.constant dense<0.000000e+00> : vector<8x8xf32>
    %82 = tpu.matmul %79, %80, %cst_29 {dimension_numbers = #tpu.dot_dimension_numbers<[0], [0], [1], [1], [0, 1, 1, 1], [], []>} : vector<8x8xbf16>, vector<8x8xbf16>, vector<8x8xf32> -> vector<8x8xf32>
    %83 = vector.broadcast %11 : vector<1x8xf32> to vector<8x8xf32>
    %84 = arith.addf %82, %83 : vector<8x8xf32>
    %cst_30 = arith.constant dense<0xFF800000> : vector<8xf32>
    %85 = vector.multi_reduction <maximumf>, %84, %cst_30 [1] : vector<8x8xf32> to vector<8xf32>
    %86 = vector.shape_cast %85 : vector<8xf32> to vector<8x1xf32>
    %87 = vector.broadcast %86 : vector<8x1xf32> to vector<8x8xf32>
    %88 = arith.subf %84, %87 : vector<8x8xf32>
    %89 = math.exp %88 : vector<8x8xf32>
    %cst_31 = arith.constant dense<0.000000e+00> : vector<8xf32>
    %90 = vector.multi_reduction <add>, %89, %cst_31 [1] : vector<8x8xf32> to vector<8xf32>
    %91 = vector.shape_cast %90 : vector<8xf32> to vector<8x1xf32>
    %92 = tpu.reciprocal %91 {approx = true} : vector<8x1xf32> -> vector<8x1xf32>
    %93 = vector.broadcast %92 : vector<8x1xf32> to vector<8x8xf32>
    %94 = arith.mulf %89, %93 : vector<8x8xf32>
    %95 = arith.truncf %94 : vector<8x8xf32> to vector<8x8xbf16>
    %cst_32 = arith.constant dense<0.000000e+00> : vector<8x8xf32>
    %96 = tpu.matmul %95, %81, %cst_32 {dimension_numbers = #tpu.dot_dimension_numbers<[1], [1], [0], [0], [0, 0, 1, 0], [], []>} : vector<8x8xbf16>, vector<8x8xbf16>, vector<8x8xf32> -> vector<8x8xf32>
    %97 = arith.truncf %96 : vector<8x8xf32> to vector<8x8xbf16>
    %c24 = arith.constant 24 : index
    %c0_33 = arith.constant 0 : index
    %98 = vector.load %arg4[%c24, %c0_33] : memref<32x32xbf16, #tpu.memory_space<vmem>>, vector<8x32xbf16>
    %cst_34 = arith.constant dense<0.000000e+00> : vector<8x32xf32>
    %99 = tpu.matmul %97, %98, %cst_34 {dimension_numbers = #tpu.dot_dimension_numbers<[1], [0], [0], [1], [0, 0, 1, 1], [], []>} : vector<8x8xbf16>, vector<8x32xbf16>, vector<8x32xf32> -> vector<8x32xf32>
    %100 = arith.addf %78, %99 : vector<8x32xf32>
    %101 = arith.addf %100, %0 : vector<8x32xf32>
    %cst_35 = arith.constant dense<0.000000e+00> : vector<8xf32>
    %102 = vector.multi_reduction <add>, %101, %cst_35 [1] : vector<8x32xf32> to vector<8xf32>
    %103 = vector.shape_cast %102 : vector<8xf32> to vector<8x1xf32>
    %cst_36 = arith.constant 3.200000e+01 : f32
    %104 = vector.broadcast %cst_36 : f32 to vector<8x1xf32>
    %105 = arith.divf %103, %104 : vector<8x1xf32>
    %106 = vector.broadcast %105 : vector<8x1xf32> to vector<8x32xf32>
    %107 = arith.subf %101, %106 : vector<8x32xf32>
    %108 = arith.mulf %107, %107 : vector<8x32xf32>
    %cst_37 = arith.constant dense<0.000000e+00> : vector<8xf32>
    %109 = vector.multi_reduction <add>, %108, %cst_37 [1] : vector<8x32xf32> to vector<8xf32>
    %110 = vector.shape_cast %109 : vector<8xf32> to vector<8x1xf32>
    %cst_38 = arith.constant 3.200000e+01 : f32
    %111 = vector.broadcast %cst_38 : f32 to vector<8x1xf32>
    %112 = arith.divf %110, %111 : vector<8x1xf32>
    %113 = vector.broadcast %105 : vector<8x1xf32> to vector<8x32xf32>
    %114 = arith.subf %101, %113 : vector<8x32xf32>
    %cst_39 = arith.constant 9.99999997E-7 : f32
    %115 = vector.broadcast %cst_39 : f32 to vector<8x1xf32>
    %116 = arith.addf %112, %115 : vector<8x1xf32>
    %117 = math.rsqrt %116 : vector<8x1xf32>
    %118 = vector.broadcast %117 : vector<8x1xf32> to vector<8x32xf32>
    %119 = arith.mulf %114, %118 : vector<8x32xf32>
    %c0_40 = arith.constant 0 : index
    %c0_41 = arith.constant 0 : index
    %120 = vector.load %arg5[%c0_40, %c0_41] : memref<1x32xf32, #tpu.memory_space<vmem>>, vector<1x32xf32>
    %121 = vector.broadcast %120 : vector<1x32xf32> to vector<8x32xf32>
    %122 = arith.mulf %119, %121 : vector<8x32xf32>
    %c0_42 = arith.constant 0 : index
    %c0_43 = arith.constant 0 : index
    %123 = vector.load %arg6[%c0_42, %c0_43] : memref<1x32xf32, #tpu.memory_space<vmem>>, vector<1x32xf32>
    %124 = vector.broadcast %123 : vector<1x32xf32> to vector<8x32xf32>
    %125 = arith.addf %122, %124 : vector<8x32xf32>
    %126 = arith.truncf %125 : vector<8x32xf32> to vector<8x32xbf16>
    %c0_44 = arith.constant 0 : index
    %c0_45 = arith.constant 0 : index
    %127 = vector.load %arg7[%c0_44, %c0_45] : memref<32x32xbf16, #tpu.memory_space<vmem>>, vector<32x32xbf16>
    %cst_46 = arith.constant dense<0.000000e+00> : vector<8x32xf32>
    %128 = tpu.matmul %126, %127, %cst_46 {dimension_numbers = #tpu.dot_dimension_numbers<[1], [0], [0], [1], [0, 0, 1, 1], [], []>} : vector<8x32xbf16>, vector<32x32xbf16>, vector<8x32xf32> -> vector<8x32xf32>
    %c0_47 = arith.constant 0 : index
    %c0_48 = arith.constant 0 : index
    %129 = vector.load %arg8[%c0_47, %c0_48] : memref<1x32xf32, #tpu.memory_space<vmem>>, vector<1x32xf32>
    %130 = vector.broadcast %129 : vector<1x32xf32> to vector<8x32xf32>
    %131 = arith.addf %128, %130 : vector<8x32xf32>
    %cst_49 = arith.constant 0.000000e+00 : f32
    %132 = vector.broadcast %cst_49 : f32 to vector<8x32xf32>
    %133 = arith.maximumf %131, %132 : vector<8x32xf32>
    %134 = arith.truncf %133 : vector<8x32xf32> to vector<8x32xbf16>
    %c0_50 = arith.constant 0 : index
    %c0_51 = arith.constant 0 : index
    %135 = vector.load %arg9[%c0_50, %c0_51] : memref<32x32xbf16, #tpu.memory_space<vmem>>, vector<32x32xbf16>
    %cst_52 = arith.constant dense<0.000000e+00> : vector<8x32xf32>
    %136 = tpu.matmul %134, %135, %cst_52 {dimension_numbers = #tpu.dot_dimension_numbers<[1], [0], [0], [1], [0, 0, 1, 1], [], []>} : vector<8x32xbf16>, vector<32x32xbf16>, vector<8x32xf32> -> vector<8x32xf32>
    %c0_53 = arith.constant 0 : index
    %c0_54 = arith.constant 0 : index
    %137 = vector.load %arg10[%c0_53, %c0_54] : memref<1x32xf32, #tpu.memory_space<vmem>>, vector<1x32xf32>
    %138 = vector.broadcast %137 : vector<1x32xf32> to vector<8x32xf32>
    %139 = arith.addf %136, %138 : vector<8x32xf32>
    %140 = arith.addf %139, %125 : vector<8x32xf32>
    %cst_55 = arith.constant dense<0.000000e+00> : vector<8xf32>
    %141 = vector.multi_reduction <add>, %140, %cst_55 [1] : vector<8x32xf32> to vector<8xf32>
    %142 = vector.shape_cast %141 : vector<8xf32> to vector<8x1xf32>
    %cst_56 = arith.constant 3.200000e+01 : f32
    %143 = vector.broadcast %cst_56 : f32 to vector<8x1xf32>
    %144 = arith.divf %142, %143 : vector<8x1xf32>
    %145 = vector.broadcast %144 : vector<8x1xf32> to vector<8x32xf32>
    %146 = arith.subf %140, %145 : vector<8x32xf32>
    %147 = arith.mulf %146, %146 : vector<8x32xf32>
    %cst_57 = arith.constant dense<0.000000e+00> : vector<8xf32>
    %148 = vector.multi_reduction <add>, %147, %cst_57 [1] : vector<8x32xf32> to vector<8xf32>
    %149 = vector.shape_cast %148 : vector<8xf32> to vector<8x1xf32>
    %cst_58 = arith.constant 3.200000e+01 : f32
    %150 = vector.broadcast %cst_58 : f32 to vector<8x1xf32>
    %151 = arith.divf %149, %150 : vector<8x1xf32>
    %152 = vector.broadcast %144 : vector<8x1xf32> to vector<8x32xf32>
    %153 = arith.subf %140, %152 : vector<8x32xf32>
    %cst_59 = arith.constant 9.99999997E-7 : f32
    %154 = vector.broadcast %cst_59 : f32 to vector<8x1xf32>
    %155 = arith.addf %151, %154 : vector<8x1xf32>
    %156 = math.rsqrt %155 : vector<8x1xf32>
    %157 = vector.broadcast %156 : vector<8x1xf32> to vector<8x32xf32>
    %158 = arith.mulf %153, %157 : vector<8x32xf32>
    %c0_60 = arith.constant 0 : index
    %c0_61 = arith.constant 0 : index
    %159 = vector.load %arg11[%c0_60, %c0_61] : memref<1x32xf32, #tpu.memory_space<vmem>>, vector<1x32xf32>
    %160 = vector.broadcast %159 : vector<1x32xf32> to vector<8x32xf32>
    %161 = arith.mulf %158, %160 : vector<8x32xf32>
    %c0_62 = arith.constant 0 : index
    %c0_63 = arith.constant 0 : index
    %162 = vector.load %arg12[%c0_62, %c0_63] : memref<1x32xf32, #tpu.memory_space<vmem>>, vector<1x32xf32>
    %163 = vector.broadcast %162 : vector<1x32xf32> to vector<8x32xf32>
    %164 = arith.addf %161, %163 : vector<8x32xf32>
    %c0_64 = arith.constant 0 : index
    %c0_65 = arith.constant 0 : index
    %165 = vector.load %arg13[%c0_64, %c0_65] : memref<8x32xf32, #tpu.memory_space<vmem>>, vector<8x32xf32>
    tpu.vector_store %arg13[%c0_64, %c0_65], %164 {strides = array<i32>} : memref<8x32xf32, #tpu.memory_space<vmem>>, vector<8x32xf32>,
    return
  }
  func.func @transform_0(%arg0: i32) -> (i32, i32) {
    %c0_i32 = arith.constant 0 : i32
    %c0_i32_0 = arith.constant 0 : i32
    return %arg0, %c0_i32 : i32, i32
  }
  func.func @transform_1(%arg0: i32) -> (i32, i32, i32) {
    %c0_i32 = arith.constant 0 : i32
    %c0_i32_0 = arith.constant 0 : i32
    %c0_i32_1 = arith.constant 0 : i32
    return %arg0, %c0_i32, %c0_i32_0 : i32, i32, i32
  }
  func.func @transform_2(%arg0: i32) -> (i32, i32) {
    %c0_i32 = arith.constant 0 : i32
    %c0_i32_0 = arith.constant 0 : i32
    %c0_i32_1 = arith.constant 0 : i32
    return %c0_i32, %c0_i32_0 : i32, i32
  }
  func.func @transform_3(%arg0: i32) -> (i32, i32) {
    %c0_i32 = arith.constant 0 : i32
    %c0_i32_0 = arith.constant 0 : i32
    %c0_i32_1 = arith.constant 0 : i32
    return %c0_i32, %c0_i32_0 : i32, i32
  }
  func.func @transform_4(%arg0: i32) -> (i32, i32) {
    %c0_i32 = arith.constant 0 : i32
    %c0_i32_0 = arith.constant 0 : i32
    %c0_i32_1 = arith.constant 0 : i32
    return %c0_i32, %c0_i32_0 : i32, i32
  }
  func.func @transform_5(%arg0: i32) -> (i32, i32) {
    %c0_i32 = arith.constant 0 : i32
    %c0_i32_0 = arith.constant 0 : i32
    %c0_i32_1 = arith.constant 0 : i32
    return %c0_i32, %c0_i32_0 : i32, i32
  }
  func.func @transform_6(%arg0: i32) -> (i32, i32) {
    %c0_i32 = arith.constant 0 : i32
    %c0_i32_0 = arith.constant 0 : i32
    %c0_i32_1 = arith.constant 0 : i32
    return %c0_i32, %c0_i32_0 : i32, i32
  }
  func.func @transform_7(%arg0: i32) -> (i32, i32) {
    %c0_i32 = arith.constant 0 : i32
    %c0_i32_0 = arith.constant 0 : i32
    %c0_i32_1 = arith.constant 0 : i32
    return %c0_i32, %c0_i32_0 : i32, i32
  }
  func.func @transform_8(%arg0: i32) -> (i32, i32) {
    %c0_i32 = arith.constant 0 : i32
    %c0_i32_0 = arith.constant 0 : i32
    %c0_i32_1 = arith.constant 0 : i32
    return %c0_i32, %c0_i32_0 : i32, i32
  }
  func.func @transform_9(%arg0: i32) -> (i32, i32) {
    %c0_i32 = arith.constant 0 : i32
    %c0_i32_0 = arith.constant 0 : i32
    %c0_i32_1 = arith.constant 0 : i32
    return %c0_i32, %c0_i32_0 : i32, i32
  }
  func.func @transform_10(%arg0: i32) -> (i32, i32) {
    %c0_i32 = arith.constant 0 : i32
    %c0_i32_0 = arith.constant 0 : i32
    %c0_i32_1 = arith.constant 0 : i32
    return %c0_i32, %c0_i32_0 : i32, i32
  }
  func.func @transform_11(%arg0: i32) -> (i32, i32) {
    %c0_i32 = arith.constant 0 : i32
    %c0_i32_0 = arith.constant 0 : i32
    %c0_i32_1 = arith.constant 0 : i32
    return %c0_i32, %c0_i32_0 : i32, i32
  }
  func.func @transform_12(%arg0: i32) -> (i32, i32) {
    %c0_i32 = arith.constant 0 : i32
    %c0_i32_0 = arith.constant 0 : i32
    return %arg0, %c0_i32 : i32, i32
  }
}

</mosaic_0001>

<llo_original>
// kernel: tpu_custom_call.1
$region0: #{tpu_custom_call.1}
  #allocation0 [shape = 'u32[]', space=smem, size = 0x4, offset = 0x4, fixed_abs, tag = 'smem constant byte address 0x4 - core index']
  #allocation1 [shape = 'u32[144,128]{1,0:T(1,128)}', space=vmem, size = 0x12000, scoped, tag = 'internal scratch']
  %s0 = inlined_call_operand.vmem [shape: f32[16,32], index: 0, kind: input, shape index: {}]
  %s1 = inlined_call_operand.vmem [shape: f32[2,8,8], index: 1, kind: input, shape index: {}]
  %s2 = inlined_call_operand.vmem [shape: bf16[96,32], index: 2, kind: input, shape index: {}]
  %s3 = inlined_call_operand.vmem [shape: bf16[32,32], index: 3, kind: input, shape index: {}]
  %s4 = inlined_call_operand.vmem [shape: f32[1,32], index: 4, kind: input, shape index: {}]
  %s5 = inlined_call_operand.vmem [shape: f32[1,32], index: 5, kind: input, shape index: {}]
  %s6 = inlined_call_operand.vmem [shape: bf16[32,32], index: 6, kind: input, shape index: {}]
  %s7 = inlined_call_operand.vmem [shape: f32[1,32], index: 7, kind: input, shape index: {}]
  %s8 = inlined_call_operand.vmem [shape: bf16[32,32], index: 8, kind: input, shape index: {}]
  %s9 = inlined_call_operand.vmem [shape: f32[1,32], index: 9, kind: input, shape index: {}]
  %s10 = inlined_call_operand.vmem [shape: f32[1,32], index: 10, kind: input, shape index: {}]
  %s11 = inlined_call_operand.vmem [shape: f32[1,32], index: 11, kind: input, shape index: {}]
  %s12 = inlined_call_operand.hbm [shape: f32[16,32], index: 12, kind: output, shape index: {}]
  %s13 = sld [smem:[#allocation0]]
  $region81: #{tpu_custom_call.1} parent=0
    _
  %s15 = ssub.s32 1, %s13
  %s16 = scalar_select 0, %s15, %s13
  $region1: #{tpu_custom_call.1} parent=0
    #allocation2 [shape = 'u8[8192]{0}', space=vmem, size = 0x2000, scoped, tag = 'output window, operand 0']
    #allocation3 [shape = 's32[2]{0}', space=sflag, size = 0x8, scoped, tag = 'scoped memory for tpu_custom_call.1']
    %17 = vsyncpa [#allocation3], 0
    %s18 = scalar_lea.sflag [#allocation3], 1
    %19 = vsyncpa %s18, 0
    loop: start=0, step=1, limit=4
    $region2: #{tpu_custom_call.1} parent=1 // loop_pre_header
      _
    $region3: #{tpu_custom_call.1} parent=1 // loop_header
      %s21 = sphi 0, %s25
      %p22 = scmp.ge.s32.totalorder %s21, 4
      %s31 = sphi 0, %s33
      %s34 = sphi 0, %s31
      %s35 = sphi 0, %s34
      %s51 = sphi 0, %s35
      %s57 = sphi 0, %s59
      %s60 = sphi 0, %s57
      %s61 = sphi 0, %s60
      %s77 = sphi 0, %s61
      %s81 = sphi 0, %s81
      %s83 = sphi 0, %s81
      %s84 = sphi 0, %s83
      %s98 = sphi 0, %s84
      %s102 = sphi 0, %s102
      %s104 = sphi 0, %s102
      %s105 = sphi 0, %s104
      %s119 = sphi 0, %s105
      %s123 = sphi 0, %s123
      %s125 = sphi 0, %s123
      %s126 = sphi 0, %s125
      %s140 = sphi 0, %s126
      %s144 = sphi 0, %s144
      %s146 = sphi 0, %s144
      %s147 = sphi 0, %s146
      %s161 = sphi 0, %s147
      %s165 = sphi 0, %s165
      %s167 = sphi 0, %s165
      %s168 = sphi 0, %s167
      %s182 = sphi 0, %s168
      %s186 = sphi 0, %s186
      %s188 = sphi 0, %s186
      %s189 = sphi 0, %s188
      %s203 = sphi 0, %s189
      %s207 = sphi 0, %s207
      %s209 = sphi 0, %s207
      %s210 = sphi 0, %s209
      %s224 = sphi 0, %s210
      %s228 = sphi 0, %s228
      %s230 = sphi 0, %s228
      %s231 = sphi 0, %s230
      %s245 = sphi 0, %s231
      %s249 = sphi 0, %s249
      %s251 = sphi 0, %s249
      %s252 = sphi 0, %s251
      %s266 = sphi 0, %s252
      %s270 = sphi 0, %s270
      %s272 = sphi 0, %s270
      %s273 = sphi 0, %s272
      %s287 = sphi 0, %s273
      %s293 = sphi 0, %s295
      %s296 = sphi 0, %s293
      %s297 = sphi 0, %s296
      %s313 = sphi 0, %s297
    $region4: #{tpu_custom_call.1} parent=1 // loop_header_branch
      %24 = sbr.rel (%p22) target = $region8
    $region5: #{tpu_custom_call.1} parent=1 // loop_body
      %s26 = ssub.s32 %s21, 1
      %s27 = ssub.s32 %s21, 2
      %s28 = sadd.s32 %s21, 1
      %s29 = ssub.s32 %s21, %s28
      %p30 = scmp.eq.s32.totalorder %s29, 0
      %s32 = sadd.s32 %s31, 1
      %s33 = scalar_select %p30, %s31, %s32
      %p36 = pneg %p30
      %p37 = scmp.eq.s32.totalorder %s21, 1
      %p38 = por %p36, %p37
      %p39 = scmp.ne.s32.totalorder %s31, %s34
      %p40 = scmp.eq.s32.totalorder %s21, 0
      %p41 = por %p39, %p40
      %p42 = scmp.ne.s32.totalorder %s31, %s34
      %p43 = scmp.eq.s32.totalorder %s26, 1
      %p44 = por %p42, %p43
      %p45 = scmp.ne.s32.totalorder %s34, %s35
      %p46 = scmp.eq.s32.totalorder %s26, 0
      %p47 = por %p45, %p46
      %p48 = scmp.ne.s32.totalorder %s34, %s35
      %p49 = scmp.eq.s32.totalorder %s27, 1
      %p50 = por %p48, %p49
      %p52 = scmp.ne.s32.totalorder %s35, %s51
      %p53 = scmp.eq.s32.totalorder %s27, 0
      %p54 = por %p52, %p53
      %s55 = ssub.s32 %s21, %s28
      %p56 = scmp.eq.s32.totalorder %s55, 0
      %s58 = sadd.s32 %s57, 1
      %s59 = scalar_select %p56, %s57, %s58
      %p62 = pneg %p56
      %p63 = scmp.eq.s32.totalorder %s21, 1
      %p64 = por %p62, %p63
      %p65 = scmp.ne.s32.totalorder %s57, %s60
      %p66 = scmp.eq.s32.totalorder %s21, 0
      %p67 = por %p65, %p66
      %p68 = scmp.ne.s32.totalorder %s57, %s60
      %p69 = scmp.eq.s32.totalorder %s26, 1
      %p70 = por %p68, %p69
      %p71 = scmp.ne.s32.totalorder %s60, %s61
      %p72 = scmp.eq.s32.totalorder %s26, 0
      %p73 = por %p71, %p72
      %p74 = scmp.ne.s32.totalorder %s60, %s61
      %p75 = scmp.eq.s32.totalorder %s27, 1
      %p76 = por %p74, %p75
      %p78 = scmp.ne.s32.totalorder %s61, %s77
      %p79 = scmp.eq.s32.totalorder %s27, 0
      %p80 = por %p78, %p79
      %s82 = sadd.s32 %s81, 1
      %p85 = scmp.eq.s32.totalorder %s21, 1
      %p86 = scmp.ne.s32.totalorder %s81, %s83
      %p87 = scmp.eq.s32.totalorder %s21, 0
      %p88 = por %p86, %p87
      %p89 = scmp.ne.s32.totalorder %s81, %s83
      %p90 = scmp.eq.s32.totalorder %s26, 1
      %p91 = por %p89, %p90
      %p92 = scmp.ne.s32.totalorder %s83, %s84
      %p93 = scmp.eq.s32.totalorder %s26, 0
      %p94 = por %p92, %p93
      %p95 = scmp.ne.s32.totalorder %s83, %s84
      %p96 = scmp.eq.s32.totalorder %s27, 1
      %p97 = por %p95, %p96
      %p99 = scmp.ne.s32.totalorder %s84, %s98
      %p100 = scmp.eq.s32.totalorder %s27, 0
      %p101 = por %p99, %p100
      %s103 = sadd.s32 %s102, 1
      %p106 = scmp.eq.s32.totalorder %s21, 1
      %p107 = scmp.ne.s32.totalorder %s102, %s104
      %p108 = scmp.eq.s32.totalorder %s21, 0
      %p109 = por %p107, %p108
      %p110 = scmp.ne.s32.totalorder %s102, %s104
      %p111 = scmp.eq.s32.totalorder %s26, 1
      %p112 = por %p110, %p111
      %p113 = scmp.ne.s32.totalorder %s104, %s105
      %p114 = scmp.eq.s32.totalorder %s26, 0
      %p115 = por %p113, %p114
      %p116 = scmp.ne.s32.totalorder %s104, %s105
      %p117 = scmp.eq.s32.totalorder %s27, 1
      %p118 = por %p116, %p117
      %p120 = scmp.ne.s32.totalorder %s105, %s119
      %p121 = scmp.eq.s32.totalorder %s27, 0
      %p122 = por %p120, %p121
      %s124 = sadd.s32 %s123, 1
      %p127 = scmp.eq.s32.totalorder %s21, 1
      %p128 = scmp.ne.s32.totalorder %s123, %s125
      %p129 = scmp.eq.s32.totalorder %s21, 0
      %p130 = por %p128, %p129
      %p131 = scmp.ne.s32.totalorder %s123, %s125
      %p132 = scmp.eq.s32.totalorder %s26, 1
      %p133 = por %p131, %p132
      %p134 = scmp.ne.s32.totalorder %s125, %s126
      %p135 = scmp.eq.s32.totalorder %s26, 0
      %p136 = por %p134, %p135
      %p137 = scmp.ne.s32.totalorder %s125, %s126
      %p138 = scmp.eq.s32.totalorder %s27, 1
      %p139 = por %p137, %p138
      %p141 = scmp.ne.s32.totalorder %s126, %s140
      %p142 = scmp.eq.s32.totalorder %s27, 0
      %p143 = por %p141, %p142
      %s145 = sadd.s32 %s144, 1
      %p148 = scmp.eq.s32.totalorder %s21, 1
      %p149 = scmp.ne.s32.totalorder %s144, %s146
      %p150 = scmp.eq.s32.totalorder %s21, 0
      %p151 = por %p149, %p150
      %p152 = scmp.ne.s32.totalorder %s144, %s146
      %p153 = scmp.eq.s32.totalorder %s26, 1
      %p154 = por %p152, %p153
      %p155 = scmp.ne.s32.totalorder %s146, %s147
      %p156 = scmp.eq.s32.totalorder %s26, 0
      %p157 = por %p155, %p156
      %p158 = scmp.ne.s32.totalorder %s146, %s147
      %p159 = scmp.eq.s32.totalorder %s27, 1
      %p160 = por %p158, %p159
      %p162 = scmp.ne.s32.totalorder %s147, %s161
      %p163 = scmp.eq.s32.totalorder %s27, 0
      %p164 = por %p162, %p163
      %s166 = sadd.s32 %s165, 1
      %p169 = scmp.eq.s32.totalorder %s21, 1
      %p170 = scmp.ne.s32.totalorder %s165, %s167
      %p171 = scmp.eq.s32.totalorder %s21, 0
      %p172 = por %p170, %p171
      %p173 = scmp.ne.s32.totalorder %s165, %s167
      %p174 = scmp.eq.s32.totalorder %s26, 1
      %p175 = por %p173, %p174
      %p176 = scmp.ne.s32.totalorder %s167, %s168
      %p177 = scmp.eq.s32.totalorder %s26, 0
      %p178 = por %p176, %p177
      %p179 = scmp.ne.s32.totalorder %s167, %s168
      %p180 = scmp.eq.s32.totalorder %s27, 1
      %p181 = por %p179, %p180
      %p183 = scmp.ne.s32.totalorder %s168, %s182
      %p184 = scmp.eq.s32.totalorder %s27, 0
      %p185 = por %p183, %p184
      %s187 = sadd.s32 %s186, 1
      %p190 = scmp.eq.s32.totalorder %s21, 1
      %p191 = scmp.ne.s32.totalorder %s186, %s188
      %p192 = scmp.eq.s32.totalorder %s21, 0
      %p193 = por %p191, %p192
      %p194 = scmp.ne.s32.totalorder %s186, %s188
      %p195 = scmp.eq.s32.totalorder %s26, 1
      %p196 = por %p194, %p195
      %p197 = scmp.ne.s32.totalorder %s188, %s189
      %p198 = scmp.eq.s32.totalorder %s26, 0
      %p199 = por %p197, %p198
      %p200 = scmp.ne.s32.totalorder %s188, %s189
      %p201 = scmp.eq.s32.totalorder %s27, 1
      %p202 = por %p200, %p201
      %p204 = scmp.ne.s32.totalorder %s189, %s203
      %p205 = scmp.eq.s32.totalorder %s27, 0
      %p206 = por %p204, %p205
      %s208 = sadd.s32 %s207, 1
      %p211 = scmp.eq.s32.totalorder %s21, 1
      %p212 = scmp.ne.s32.totalorder %s207, %s209
      %p213 = scmp.eq.s32.totalorder %s21, 0
      %p214 = por %p212, %p213
      %p215 = scmp.ne.s32.totalorder %s207, %s209
      %p216 = scmp.eq.s32.totalorder %s26, 1
      %p217 = por %p215, %p216
      %p218 = scmp.ne.s32.totalorder %s209, %s210
      %p219 = scmp.eq.s32.totalorder %s26, 0
      %p220 = por %p218, %p219
      %p221 = scmp.ne.s32.totalorder %s209, %s210
      %p222 = scmp.eq.s32.totalorder %s27, 1
      %p223 = por %p221, %p222
      %p225 = scmp.ne.s32.totalorder %s210, %s224
      %p226 = scmp.eq.s32.totalorder %s27, 0
      %p227 = por %p225, %p226
      %s229 = sadd.s32 %s228, 1
      %p232 = scmp.eq.s32.totalorder %s21, 1
      %p233 = scmp.ne.s32.totalorder %s228, %s230
      %p234 = scmp.eq.s32.totalorder %s21, 0
      %p235 = por %p233, %p234
      %p236 = scmp.ne.s32.totalorder %s228, %s230
      %p237 = scmp.eq.s32.totalorder %s26, 1
      %p238 = por %p236, %p237
      %p239 = scmp.ne.s32.totalorder %s230, %s231
      %p240 = scmp.eq.s32.totalorder %s26, 0
      %p241 = por %p239, %p240
      %p242 = scmp.ne.s32.totalorder %s230, %s231
      %p243 = scmp.eq.s32.totalorder %s27, 1
      %p244 = por %p242, %p243
      %p246 = scmp.ne.s32.totalorder %s231, %s245
      %p247 = scmp.eq.s32.totalorder %s27, 0
      %p248 = por %p246, %p247
      %s250 = sadd.s32 %s249, 1
      %p253 = scmp.eq.s32.totalorder %s21, 1
      %p254 = scmp.ne.s32.totalorder %s249, %s251
      %p255 = scmp.eq.s32.totalorder %s21, 0
      %p256 = por %p254, %p255
      %p257 = scmp.ne.s32.totalorder %s249, %s251
      %p258 = scmp.eq.s32.totalorder %s26, 1
      %p259 = por %p257, %p258
      %p260 = scmp.ne.s32.totalorder %s251, %s252
      %p261 = scmp.eq.s32.totalorder %s26, 0
      %p262 = por %p260, %p261
      %p263 = scmp.ne.s32.totalorder %s251, %s252
      %p264 = scmp.eq.s32.totalorder %s27, 1
      %p265 = por %p263, %p264
      %p267 = scmp.ne.s32.totalorder %s252, %s266
      %p268 = scmp.eq.s32.totalorder %s27, 0
      %p269 = por %p267, %p268
      %s271 = sadd.s32 %s270, 1
      %p274 = scmp.eq.s32.totalorder %s21, 1
      %p275 = scmp.ne.s32.totalorder %s270, %s272
      %p276 = scmp.eq.s32.totalorder %s21, 0
      %p277 = por %p275, %p276
      %p278 = scmp.ne.s32.totalorder %s270, %s272
      %p279 = scmp.eq.s32.totalorder %s26, 1
      %p280 = por %p278, %p279
      %p281 = scmp.ne.s32.totalorder %s272, %s273
      %p282 = scmp.eq.s32.totalorder %s26, 0
      %p283 = por %p281, %p282
      %p284 = scmp.ne.s32.totalorder %s272, %s273
      %p285 = scmp.eq.s32.totalorder %s27, 1
      %p286 = por %p284, %p285
      %p288 = scmp.ne.s32.totalorder %s273, %s287
      %p289 = scmp.eq.s32.totalorder %s27, 0
      %p290 = por %p288, %p289
      %s291 = ssub.s32 %s21, %s28
      %p292 = scmp.eq.s32.totalorder %s291, 0
      %s294 = sadd.s32 %s293, 1
      %s295 = scalar_select %p292, %s293, %s294
      %p298 = pneg %p292
      %p299 = scmp.eq.s32.totalorder %s21, 1
      %p300 = por %p298, %p299
      %p301 = scmp.ne.s32.totalorder %s293, %s296
      %p302 = scmp.eq.s32.totalorder %s21, 0
      %p303 = por %p301, %p302
      %p304 = scmp.ne.s32.totalorder %s293, %s296
      %p305 = scmp.eq.s32.totalorder %s26, 1
      %p306 = por %p304, %p305
      %p307 = scmp.ne.s32.totalorder %s296, %s297
      %p308 = scmp.eq.s32.totalorder %s26, 0
      %p309 = por %p307, %p308
      %p310 = scmp.ne.s32.totalorder %s296, %s297
      %p311 = scmp.eq.s32.totalorder %s27, 1
      %p312 = por %p310, %p311
      %p314 = scmp.ne.s32.totalorder %s297, %s313
      %p315 = scmp.eq.s32.totalorder %s27, 0
      %p316 = por %p314, %p315
      %p317 = scmp.le.s32.totalorder 1, %s21
      %p318 = scmp.lt.s32.totalorder %s21, 3
      %p319 = pnand %p317, %p318
      %p320 = pneg %p319
      // Predicated region
      $region9: #{tpu_custom_call.1} parent=5 // pred_check
        _
      $region10: #{tpu_custom_call.1} parent=5 // pred_check_branch
        %322 = sbr.rel (%p319) target = $region12
      $region11: #{tpu_custom_call.1} parent=5 // pred_region
        %s323 = ssub.s32 %s21, 1
        // Predicated region
        $region13: #{tpu_custom_call.1} parent=11 // pred_check
          %p324 = pneg %p94
        $region14: #{tpu_custom_call.1} parent=11 // pred_check_branch
          %326 = sbr.rel (%p324) target = $region16
        $region15: #{tpu_custom_call.1} parent=11 // pred_region
          _
        $region16: #{tpu_custom_call.1} parent=11 // pred_fallthru
          _
        // Predicated region
        $region17: #{tpu_custom_call.1} parent=11 // pred_check
          %p327 = pneg %p115
        $region18: #{tpu_custom_call.1} parent=11 // pred_check_branch
          %329 = sbr.rel (%p327) target = $region20
        $region19: #{tpu_custom_call.1} parent=11 // pred_region
          _
        $region20: #{tpu_custom_call.1} parent=11 // pred_fallthru
          _
        // Predicated region
        $region21: #{tpu_custom_call.1} parent=11 // pred_check
          %p330 = pneg %p136
        $region22: #{tpu_custom_call.1} parent=11 // pred_check_branch
          %332 = sbr.rel (%p330) target = $region24
        $region23: #{tpu_custom_call.1} parent=11 // pred_region
          _
        $region24: #{tpu_custom_call.1} parent=11 // pred_fallthru
          _
        // Predicated region
        $region25: #{tpu_custom_call.1} parent=11 // pred_check
          %p333 = pneg %p157
        $region26: #{tpu_custom_call.1} parent=11 // pred_check_branch
          %335 = sbr.rel (%p333) target = $region28
        $region27: #{tpu_custom_call.1} parent=11 // pred_region
          _
        $region28: #{tpu_custom_call.1} parent=11 // pred_fallthru
          _
        // Predicated region
        $region29: #{tpu_custom_call.1} parent=11 // pred_check
          %p336 = pneg %p178
        $region30: #{tpu_custom_call.1} parent=11 // pred_check_branch
          %338 = sbr.rel (%p336) target = $region32
        $region31: #{tpu_custom_call.1} parent=11 // pred_region
          _
        $region32: #{tpu_custom_call.1} parent=11 // pred_fallthru
          _
        // Predicated region
        $region33: #{tpu_custom_call.1} parent=11 // pred_check
          %p339 = pneg %p199
        $region34: #{tpu_custom_call.1} parent=11 // pred_check_branch
          %341 = sbr.rel (%p339) target = $region36
        $region35: #{tpu_custom_call.1} parent=11 // pred_region
          _
        $region36: #{tpu_custom_call.1} parent=11 // pred_fallthru
          _
        // Predicated region
        $region37: #{tpu_custom_call.1} parent=11 // pred_check
          %p342 = pneg %p220
        $region38: #{tpu_custom_call.1} parent=11 // pred_check_branch
          %344 = sbr.rel (%p342) target = $region40
        $region39: #{tpu_custom_call.1} parent=11 // pred_region
          _
        $region40: #{tpu_custom_call.1} parent=11 // pred_fallthru
          _
        // Predicated region
        $region41: #{tpu_custom_call.1} parent=11 // pred_check
          %p345 = pneg %p241
        $region42: #{tpu_custom_call.1} parent=11 // pred_check_branch
          %347 = sbr.rel (%p345) target = $region44
        $region43: #{tpu_custom_call.1} parent=11 // pred_region
          _
        $region44: #{tpu_custom_call.1} parent=11 // pred_fallthru
          _
        // Predicated region
        $region45: #{tpu_custom_call.1} parent=11 // pred_check
          %p348 = pneg %p262
        $region46: #{tpu_custom_call.1} parent=11 // pred_check_branch
          %350 = sbr.rel (%p348) target = $region48
        $region47: #{tpu_custom_call.1} parent=11 // pred_region
          _
        $region48: #{tpu_custom_call.1} parent=11 // pred_fallthru
          _
        // Predicated region
        $region49: #{tpu_custom_call.1} parent=11 // pred_check
          %p351 = pneg %p283
        $region50: #{tpu_custom_call.1} parent=11 // pred_check_branch
          %353 = sbr.rel (%p351) target = $region52
        $region51: #{tpu_custom_call.1} parent=11 // pred_region
          _
        $region52: #{tpu_custom_call.1} parent=11 // pred_fallthru
          _
      $region12: #{tpu_custom_call.1} parent=5 // pred_fallthru
        _
      %p354 = scmp.lt.s32.totalorder %s21, 2
      // Predicated region
      $region53: #{tpu_custom_call.1} parent=5 // pred_check
        %p355 = pneg %p354
      $region54: #{tpu_custom_call.1} parent=5 // pred_check_branch
        %357 = sbr.rel (%p355) target = $region56
      $region55: #{tpu_custom_call.1} parent=5 // pred_region
        // Predicated region
        $region57: #{tpu_custom_call.1} parent=55 // pred_check
          %p358 = pneg %p41
        $region58: #{tpu_custom_call.1} parent=55 // pred_check_branch
          %360 = sbr.rel (%p358) target = $region60
        $region59: #{tpu_custom_call.1} parent=55 // pred_region
          %p361 = scmp.lt.s32.totalorder %s21, 1
          %s362 = scalar_select %p361, %s21, 1
          %s363 = smul.addr %s362, 8
          %s364 = scalar_lea.vmem %s0, %s363
        $region60: #{tpu_custom_call.1} parent=55 // pred_fallthru
          _
        // Predicated region
        $region61: #{tpu_custom_call.1} parent=55 // pred_check
          %p365 = pneg %p67
        $region62: #{tpu_custom_call.1} parent=55 // pred_check_branch
          %367 = sbr.rel (%p365) target = $region64
        $region63: #{tpu_custom_call.1} parent=55 // pred_region
          %p368 = scmp.lt.s32.totalorder %s21, 1
          %s369 = scalar_select %p368, %s21, 1
          %s370 = smul.addr %s369, 8
          %s371 = scalar_lea.vmem %s1, %s370
        $region64: #{tpu_custom_call.1} parent=55 // pred_fallthru
          _
      $region56: #{tpu_custom_call.1} parent=5 // pred_fallthru
        _
      %p372 = scmp.le.s32.totalorder 1, %s21
      %p373 = scmp.lt.s32.totalorder %s21, 3
      %p374 = pnand %p372, %p373
      %p375 = pneg %p374
      // Predicated region
      $region65: #{tpu_custom_call.1} parent=5 // pred_check
        _
      $region66: #{tpu_custom_call.1} parent=5 // pred_check_branch
        %377 = sbr.rel (%p374) target = $region68
      $region67: #{tpu_custom_call.1} parent=5 // pred_region
        %s378 = ssub.s32 %s21, 1
        %p379 = scmp.lt.s32.totalorder %s26, 1
        %s380 = scalar_select %p379, %s26, 1
        %s381 = smul.addr %s380, 8
        %s382 = scalar_lea.vmem %s0, %s381
        %p383 = pneg %p47
        %p384 = pneg %p44
        %p385 = scmp.lt.s32.totalorder %s26, 1
        %s386 = scalar_select %p385, %s26, 1
        %s387 = smul.addr %s386, 8
        %s388 = scalar_lea.vmem %s1, %s387
        %p389 = pneg %p73
        %p390 = pneg %p70
        %p391 = pneg %p94
        %p392 = pneg %p91
        %p393 = pneg %p115
        %p394 = pneg %p112
        %p395 = pneg %p136
        %p396 = pneg %p133
        %p397 = pneg %p157
        %p398 = pneg %p154
        %p399 = pneg %p178
        %p400 = pneg %p175
        %p401 = pneg %p199
        %p402 = pneg %p196
        %p403 = pneg %p220
        %p404 = pneg %p217
        %p405 = pneg %p241
        %p406 = pneg %p238
        %p407 = pneg %p262
        %p408 = pneg %p259
        %p409 = pneg %p283
        %p410 = pneg %p280
        %p411 = pneg %p309
        %p412 = pneg %p306
        %s413 = sand.u32 %s296, 1
        %s414 = scalar_lea.sflag [#allocation3], %s413
        %s415 = sand.u32 %s296, 1
        %s416 = smul.addr %s415, 8
        %s417 = scalar_lea.vmem [#allocation2], %s416
        %p418 = scmp.lt.s32.totalorder %s26, 1
        %s419 = scalar_select %p418, %s26, 1
        %s420 = smul.addr %s419, 8
        %s421 = scalar_lea.vmem %s0, %s420
        %p422 = scmp.lt.s32.totalorder %s26, 1
        %s423 = scalar_select %p422, %s26, 1
        %s424 = smul.addr %s423, 8
        %s425 = scalar_lea.vmem %s1, %s424
        %v427 = vld [vmem:[%s421] sm:$0xff]
        %v428 = vpack.c.bf16 %v427, %v427
        %v429 = vld [vmem:[%s2] sm:$0xf]
        %v430 = vld [vmem:[%s2 + $0x4] sm:$0xf]
        %v431 = vld [vmem:[%s2 + $0x8] sm:$0xf]
        %v432 = vld [vmem:[%s2 + $0xc] sm:$0xf]
        %v433 = vld [vmem:[%s2 + $0x10] sm:$0xf]
        %v434 = vld [vmem:[%s2 + $0x14] sm:$0xf]
        %v435 = vld [vmem:[%s2 + $0x18] sm:$0xf]
        %v436 = vld [vmem:[%s2 + $0x1c] sm:$0xf]
        %v437 = vld [vmem:[%s2 + $0x20] sm:$0xf]
        %v438 = vld [vmem:[%s2 + $0x24] sm:$0xf]
        %v439 = vld [vmem:[%s2 + $0x28] sm:$0xf]
        %v440 = vld [vmem:[%s2 + $0x2c] sm:$0xf]
        %v453 = vunpack.c.l.b16 %v429
        %v454 = vunpack.c.l.b16 %v430
        %v455 = vunpack.c.l.b16 %v431
        %v456 = vunpack.c.l.b16 %v432
        %v457 = vunpack.c.l.b16 %v433
        %v458 = vunpack.c.l.b16 %v434
        %v459 = vunpack.c.l.b16 %v435
        %v460 = vunpack.c.l.b16 %v436
        %v461 = vunpack.c.l.b16 %v437
        %v462 = vunpack.c.l.b16 %v438
        %v463 = vunpack.c.l.b16 %v439
        %v464 = vunpack.c.l.b16 %v440
        %v465 = vpack.c.b16 %v454, %v453
        %v466 = vpack.c.b16 %v456, %v455
        %v467 = vpack.c.b16 %v458, %v457
        %v468 = vpack.c.b16 %v460, %v459
        %v469 = vpack.c.b16 %v462, %v461
        %v470 = vpack.c.b16 %v464, %v463
        %vm471 = vcmask 261120
        %v473 = vsel %vm471, %v465, 0
        %v476 = vsel %vm471, %v466, 0
        %v479 = vsel %vm471, %v467, 0
        %v482 = vsel %vm471, %v468, 0
        %v485 = vsel %vm471, %v469, 0
        %v488 = vsel %vm471, %v470, 0
        %v491 = vsel %vm471, %v428, 0
        %493 = vmatprep.subr.bf16.mxu0 0
        %494 = vmatpush1.bf16.xpose.msra.mxu0 %v491
        %495 = vmatprep.subr.bf16.mxu0 0
        %496 = vmatpush1.bf16.xpose.msra.mxu0 0
        %497 = vmatprep.subr.bf16.mxu0 0
        %498 = vmatpush1.bf16.xpose.msra.mxu0 0
        %499 = vmatprep.subr.bf16.mxu0 0
        %500 = vmatpush1.bf16.xpose.msra.mxu0 0
        %501 = vmatprep.subr.bf16.mxu0 0
        %502 = vmatpush1.bf16.xpose.msra.mxu0 0
        %503 = vmatprep.subr.bf16.mxu0 0
        %504 = vmatpush1.bf16.xpose.msra.mxu0 0
        %505 = vmatprep.subr.bf16.mxu0 0
        %506 = vmatpush1.bf16.xpose.msra.mxu0 0
        %507 = vmatprep.subr.bf16.mxu0 0
        %508 = vmatpush1.bf16.xpose.msra.mxu0 0
        %509 = vmatprep.subr.bf16.mxu0 0
        %510 = vmatpush1.bf16.xpose.msra.mxu0 0
        %511 = vmatprep.subr.bf16.mxu0 0
        %512 = vmatpush1.bf16.xpose.msra.mxu0 0
        %513 = vmatprep.subr.bf16.mxu0 0
        %514 = vmatpush1.bf16.xpose.msra.mxu0 0
        %515 = vmatprep.subr.bf16.mxu0 0
        %516 = vmatpush1.bf16.xpose.msra.mxu0 0
        %517 = vmatprep.subr.bf16.mxu0 0
        %518 = vmatpush1.bf16.xpose.msra.mxu0 0
        %519 = vmatprep.subr.bf16.mxu0 0
        %520 = vmatpush1.bf16.xpose.msra.mxu0 0
        %521 = vmatprep.subr.bf16.mxu0 0
        %522 = vmatpush1.bf16.xpose.msra.mxu0 0
        %523 = vmatprep.subr.bf16.mxu0 0
        %524 = vmatpush1.bf16.xpose.msra.mxu0 0
        %525 = vmatprep.mubr.bf16.mxu0 0
        %526 = vmatmul.mubr.bf16.gmra.mrb[0].mxu0 %v473
        %v527 = vpop.f32.mrb[0].mxu0
        %v528 = vadd.f32 0.0, %v527
        %v529 = vpop.f32.mrb[0].mxu0
        %v530 = vpop.f32.mrb[0].mxu0
        %v531 = vadd.f32 0.0, %v530
        %v532 = vpop.f32.mrb[0].mxu0
        %533 = vmatprep.mubr.bf16.mxu0 0
        %534 = vmatmul.mubr.bf16.gmra.mrb[0].mxu0 %v476
        %v535 = vpop.f32.mrb[0].mxu0
        %v536 = vadd.f32 0.0, %v535
        %v537 = vpop.f32.mrb[0].mxu0
        %v538 = vpop.f32.mrb[0].mxu0
        %v539 = vadd.f32 0.0, %v538
        %v540 = vpop.f32.mrb[0].mxu0
        %541 = vmatprep.mubr.bf16.mxu0 0
        %542 = vmatmul.mubr.bf16.gmra.mrb[0].mxu0 %v479
        %v543 = vpop.f32.mrb[0].mxu0
        %v544 = vadd.f32 0.0, %v543
        %v545 = vpop.f32.mrb[0].mxu0
        %v546 = vpop.f32.mrb[0].mxu0
        %v547 = vadd.f32 0.0, %v546
        %v548 = vpop.f32.mrb[0].mxu0
        %549 = vmatprep.mubr.bf16.mxu0 0
        %550 = vmatmul.mubr.bf16.gmra.mrb[0].mxu0 %v482
        %v551 = vpop.f32.mrb[0].mxu0
        %v552 = vadd.f32 0.0, %v551
        %v553 = vpop.f32.mrb[0].mxu0
        %v554 = vpop.f32.mrb[0].mxu0
        %v555 = vadd.f32 0.0, %v554
        %v556 = vpop.f32.mrb[0].mxu0
        %557 = vmatprep.mubr.bf16.mxu0 0
        %558 = vmatmul.mubr.bf16.gmra.mrb[0].mxu0 %v485
        %v559 = vpop.f32.mrb[0].mxu0
        %v560 = vadd.f32 0.0, %v559
        %v561 = vpop.f32.mrb[0].mxu0
        %v562 = vpop.f32.mrb[0].mxu0
        %v563 = vadd.f32 0.0, %v562
        %v564 = vpop.f32.mrb[0].mxu0
        %565 = vmatprep.mubr.bf16.mxu0 0
        %566 = vmatmul.mubr.bf16.gmra.mrb[0].mxu0 %v488
        %v567 = vpop.f32.mrb[0].mxu0
        %v568 = vadd.f32 0.0, %v567
        %v569 = vpop.f32.mrb[0].mxu0
        %v570 = vpop.f32.mrb[0].mxu0
        %v571 = vadd.f32 0.0, %v570
        %v572 = vpop.f32.mrb[0].mxu0
        %573 = vdwg.mxu0
        %v574 = vpack.c.bf16 %v531, %v528
        %v575 = vpack.c.bf16 %v539, %v536
        %v576 = vpack.c.bf16 %v547, %v544
        %v577 = vpack.c.bf16 %v555, %v552
        %v578 = vpack.c.bf16 %v563, %v560
        %v579 = vpack.c.bf16 %v571, %v568
        %v580 = vld [vmem:[%s425] sm:$0x1]
        %vm581 = vcmp.eq.f32.partialorder %v580, 0.0
        %v582 = vsel %vm581, -1e+30, 0.0
        %v583 = vlaneseq
        %v584 = vshrl.u32 %v583, 7
        %v585 = vsub.s32 0, %v584
        %v586 = vrot.slane %v582, %v585
        %587 = vxpose.xlu0.c.b16.start [1/8] %v574, 128
        %588 = vxpose.xlu0.c.b16.cont [2/8] 0, 128
        %589 = vxpose.xlu0.c.b16.cont [3/8] 0, 128
        %590 = vxpose.xlu0.c.b16.cont [4/8] 0, 128
        %591 = vxpose.xlu0.c.b16.cont [5/8] 0, 128
        %592 = vxpose.xlu0.c.b16.cont [6/8] 0, 128
        %593 = vxpose.xlu0.c.b16.cont [7/8] 0, 128
        %594 = vxpose.xlu0.c.b16.end [8/8] 0, 128
        %v595 = vpop.trf.xlu0
        %v596 = vpop.trf.xlu0
        %v597 = vpop.trf.xlu0
        %v598 = vpop.trf.xlu0
        %v599 = vpop.trf.xlu0
        %v600 = vpop.trf.xlu0
        %v601 = vpop.trf.xlu0
        %v602 = vpop.trf.xlu0
        %vm603 = vcmask 64512
        %v605 = vsel %vm603, %v595, 0
        %vm607 = vcmask 1043456
        %v609 = vsel %vm607, %v576, 0
        %611 = vmatprep.subr.bf16.mxu0 0
        %612 = vmatpush1.bf16.msra.mxu0 %v609
        %613 = vmatprep.subr.bf16.mxu0 0
        %614 = vmatpush1.bf16.msra.mxu0 0
        %615 = vmatprep.subr.bf16.mxu0 0
        %616 = vmatpush1.bf16.msra.mxu0 0
        %617 = vmatprep.subr.bf16.mxu0 0
        %618 = vmatpush1.bf16.msra.mxu0 0
        %619 = vmatprep.subr.bf16.mxu0 0
        %620 = vmatpush1.bf16.msra.mxu0 0
        %621 = vmatprep.subr.bf16.mxu0 0
        %622 = vmatpush1.bf16.msra.mxu0 0
        %623 = vmatprep.subr.bf16.mxu0 0
        %624 = vmatpush1.bf16.msra.mxu0 0
        %625 = vmatprep.subr.bf16.mxu0 0
        %626 = vmatpush1.bf16.msra.mxu0 0
        %627 = vmatprep.subr.bf16.mxu0 0
        %628 = vmatpush1.bf16.msra.mxu0 0
        %629 = vmatprep.subr.bf16.mxu0 0
        %630 = vmatpush1.bf16.msra.mxu0 0
        %631 = vmatprep.subr.bf16.mxu0 0
        %632 = vmatpush1.bf16.msra.mxu0 0
        %633 = vmatprep.subr.bf16.mxu0 0
        %634 = vmatpush1.bf16.msra.mxu0 0
        %635 = vmatprep.subr.bf16.mxu0 0
        %636 = vmatpush1.bf16.msra.mxu0 0
        %637 = vmatprep.subr.bf16.mxu0 0
        %638 = vmatpush1.bf16.msra.mxu0 0
        %639 = vmatprep.subr.bf16.mxu0 0
        %640 = vmatpush1.bf16.msra.mxu0 0
        %641 = vmatprep.subr.bf16.mxu0 0
        %642 = vmatpush1.bf16.msra.mxu0 0
        %643 = vmatprep.mubr.bf16.mxu0 0
        %644 = vmatmul.mubr.bf16.gmra.mrb[0].mxu0 %v605
        %v645 = vpop.f32.mrb[0].mxu0
        %v646 = vadd.f32 %v586, %v645
        %v647 = vpop.f32.mrb[0].mxu0
        %v648 = vpop.f32.mrb[0].mxu0
        %v649 = vpop.f32.mrb[0].mxu0
        %650 = vdwg.mxu0
        %v651 = vsel %vm603, %v646, -inf
        %652 = vmax.xlane.f32.xlu0 %v651
        %v653 = vpop.xlane.xlu0 %652
        %v654 = vsub.f32 %v646, %v653
        %v655 = vmul.f32 %v654, 1.442695
        %v656 = vpow.pop %v655
        %v657 = vsel %vm603, %v656, 0.0
        %658 = vadd.xlane.f32.xlu0 %v657
        %v659 = vpop.xlane.xlu0 %658
        %v660 = vrcp.pop %v659
        %v661 = vmul.f32 %v656, %v660
        %v662 = vpack.c.bf16 %v661, %v661
        %v664 = vsel %vm603, %v662, 0
        %v667 = vsel %vm603, %v578, 0
        %669 = vmatprep.subr.bf16.mxu0 0
        %670 = vmatpush1.bf16.xpose.msra.mxu0 %v667
        %671 = vmatprep.subr.bf16.mxu0 0
        %672 = vmatpush1.bf16.xpose.msra.mxu0 0
        %673 = vmatprep.subr.bf16.mxu0 0
        %674 = vmatpush1.bf16.xpose.msra.mxu0 0
        %675 = vmatprep.subr.bf16.mxu0 0
        %676 = vmatpush1.bf16.xpose.msra.mxu0 0
        %677 = vmatprep.subr.bf16.mxu0 0
        %678 = vmatpush1.bf16.xpose.msra.mxu0 0
        %679 = vmatprep.subr.bf16.mxu0 0
        %680 = vmatpush1.bf16.xpose.msra.mxu0 0
        %681 = vmatprep.subr.bf16.mxu0 0
        %682 = vmatpush1.bf16.xpose.msra.mxu0 0
        %683 = vmatprep.subr.bf16.mxu0 0
        %684 = vmatpush1.bf16.xpose.msra.mxu0 0
        %685 = vmatprep.subr.bf16.mxu0 0
        %686 = vmatpush1.bf16.xpose.msra.mxu0 0
        %687 = vmatprep.subr.bf16.mxu0 0
        %688 = vmatpush1.bf16.xpose.msra.mxu0 0
        %689 = vmatprep.subr.bf16.mxu0 0
        %690 = vmatpush1.bf16.xpose.msra.mxu0 0
        %691 = vmatprep.subr.bf16.mxu0 0
        %692 = vmatpush1.bf16.xpose.msra.mxu0 0
        %693 = vmatprep.subr.bf16.mxu0 0
        %694 = vmatpush1.bf16.xpose.msra.mxu0 0
        %695 = vmatprep.subr.bf16.mxu0 0
        %696 = vmatpush1.bf16.xpose.msra.mxu0 0
        %697 = vmatprep.subr.bf16.mxu0 0
        %698 = vmatpush1.bf16.xpose.msra.mxu0 0
        %699 = vmatprep.subr.bf16.mxu0 0
        %700 = vmatpush1.bf16.xpose.msra.mxu0 0
        %701 = vmatprep.mubr.bf16.mxu0 0
        %702 = vmatmul.mubr.bf16.gmra.mrb[0].mxu0 %v664
        %v703 = vpop.f32.mrb[0].mxu0
        %v704 = vadd.f32 0.0, %v703
        %v705 = vpop.f32.mrb[0].mxu0
        %v706 = vpop.f32.mrb[0].mxu0
        %v707 = vpop.f32.mrb[0].mxu0
        %708 = vdwg.mxu0
        %v709 = vpack.c.bf16 %v704, %v704
        %v710 = vld [vmem:[%s3] sm:$0xf]
        %v712 = vrot.slane %v574, 4
        %714 = vxpose.xlu0.c.b16.start [1/8] %v712, 128
        %715 = vxpose.xlu0.c.b16.cont [2/8] 0, 128
        %716 = vxpose.xlu0.c.b16.cont [3/8] 0, 128
        %717 = vxpose.xlu0.c.b16.cont [4/8] 0, 128
        %718 = vxpose.xlu0.c.b16.cont [5/8] 0, 128
        %719 = vxpose.xlu0.c.b16.cont [6/8] 0, 128
        %720 = vxpose.xlu0.c.b16.cont [7/8] 0, 128
        %721 = vxpose.xlu0.c.b16.end [8/8] 0, 128
        %v722 = vpop.trf.xlu0
        %v723 = vpop.trf.xlu0
        %v724 = vpop.trf.xlu0
        %v725 = vpop.trf.xlu0
        %v726 = vpop.trf.xlu0
        %v727 = vpop.trf.xlu0
        %v728 = vpop.trf.xlu0
        %v729 = vpop.trf.xlu0
        %v731 = vrot.slane %v576, 4
        %v733 = vsel %vm603, %v722, 0
        %v736 = vsel %vm607, %v731, 0
        %738 = vmatprep.subr.bf16.mxu0 0
        %739 = vmatpush1.bf16.msra.mxu0 %v736
        %740 = vmatprep.subr.bf16.mxu0 0
        %741 = vmatpush1.bf16.msra.mxu0 0
        %742 = vmatprep.subr.bf16.mxu0 0
        %743 = vmatpush1.bf16.msra.mxu0 0
        %744 = vmatprep.subr.bf16.mxu0 0
        %745 = vmatpush1.bf16.msra.mxu0 0
        %746 = vmatprep.subr.bf16.mxu0 0
        %747 = vmatpush1.bf16.msra.mxu0 0
        %748 = vmatprep.subr.bf16.mxu0 0
        %749 = vmatpush1.bf16.msra.mxu0 0
        %750 = vmatprep.subr.bf16.mxu0 0
        %751 = vmatpush1.bf16.msra.mxu0 0
        %752 = vmatprep.subr.bf16.mxu0 0
        %753 = vmatpush1.bf16.msra.mxu0 0
        %754 = vmatprep.subr.bf16.mxu0 0
        %755 = vmatpush1.bf16.msra.mxu0 0
        %756 = vmatprep.subr.bf16.mxu0 0
        %757 = vmatpush1.bf16.msra.mxu0 0
        %758 = vmatprep.subr.bf16.mxu0 0
        %759 = vmatpush1.bf16.msra.mxu0 0
        %760 = vmatprep.subr.bf16.mxu0 0
        %761 = vmatpush1.bf16.msra.mxu0 0
        %762 = vmatprep.subr.bf16.mxu0 0
        %763 = vmatpush1.bf16.msra.mxu0 0
        %764 = vmatprep.subr.bf16.mxu0 0
        %765 = vmatpush1.bf16.msra.mxu0 0
        %766 = vmatprep.subr.bf16.mxu0 0
        %767 = vmatpush1.bf16.msra.mxu0 0
        %768 = vmatprep.subr.bf16.mxu0 0
        %769 = vmatpush1.bf16.msra.mxu0 0
        %770 = vmatprep.mubr.bf16.mxu0 0
        %771 = vmatmul.mubr.bf16.gmra.mrb[0].mxu0 %v733
        %v772 = vpop.f32.mrb[0].mxu0
        %v773 = vadd.f32 %v586, %v772
        %v774 = vpop.f32.mrb[0].mxu0
        %v775 = vpop.f32.mrb[0].mxu0
        %v776 = vpop.f32.mrb[0].mxu0
        %777 = vdwg.mxu0
        %v778 = vsel %vm603, %v773, -inf
        %779 = vmax.xlane.f32.xlu0 %v778
        %v780 = vpop.xlane.xlu0 %779
        %v781 = vsub.f32 %v773, %v780
        %v782 = vmul.f32 %v781, 1.442695
        %v783 = vpow.pop %v782
        %v784 = vsel %vm603, %v783, 0.0
        %785 = vadd.xlane.f32.xlu0 %v784
        %v786 = vpop.xlane.xlu0 %785
        %v787 = vrcp.pop %v786
        %v788 = vmul.f32 %v783, %v787
        %v789 = vpack.c.bf16 %v788, %v788
        %v791 = vrot.slane %v578, 4
        %v793 = vsel %vm603, %v789, 0
        %v796 = vsel %vm603, %v791, 0
        %798 = vmatprep.subr.bf16.mxu0 0
        %799 = vmatpush1.bf16.xpose.msra.mxu0 %v796
        %800 = vmatprep.subr.bf16.mxu0 0
        %801 = vmatpush1.bf16.xpose.msra.mxu0 0
        %802 = vmatprep.subr.bf16.mxu0 0
        %803 = vmatpush1.bf16.xpose.msra.mxu0 0
        %804 = vmatprep.subr.bf16.mxu0 0
        %805 = vmatpush1.bf16.xpose.msra.mxu0 0
        %806 = vmatprep.subr.bf16.mxu0 0
        %807 = vmatpush1.bf16.xpose.msra.mxu0 0
        %808 = vmatprep.subr.bf16.mxu0 0
        %809 = vmatpush1.bf16.xpose.msra.mxu0 0
        %810 = vmatprep.subr.bf16.mxu0 0
        %811 = vmatpush1.bf16.xpose.msra.mxu0 0
        %812 = vmatprep.subr.bf16.mxu0 0
        %813 = vmatpush1.bf16.xpose.msra.mxu0 0
        %814 = vmatprep.subr.bf16.mxu0 0
        %815 = vmatpush1.bf16.xpose.msra.mxu0 0
        %816 = vmatprep.subr.bf16.mxu0 0
        %817 = vmatpush1.bf16.xpose.msra.mxu0 0
        %818 = vmatprep.subr.bf16.mxu0 0
        %819 = vmatpush1.bf16.xpose.msra.mxu0 0
        %820 = vmatprep.subr.bf16.mxu0 0
        %821 = vmatpush1.bf16.xpose.msra.mxu0 0
        %822 = vmatprep.subr.bf16.mxu0 0
        %823 = vmatpush1.bf16.xpose.msra.mxu0 0
        %824 = vmatprep.subr.bf16.mxu0 0
        %825 = vmatpush1.bf16.xpose.msra.mxu0 0
        %826 = vmatprep.subr.bf16.mxu0 0
        %827 = vmatpush1.bf16.xpose.msra.mxu0 0
        %828 = vmatprep.subr.bf16.mxu0 0
        %829 = vmatpush1.bf16.xpose.msra.mxu0 0
        %830 = vmatprep.mubr.bf16.mxu0 0
        %831 = vmatmul.mubr.bf16.gmra.mrb[0].mxu0 %v793
        %v832 = vpop.f32.mrb[0].mxu0
        %v833 = vadd.f32 0.0, %v832
        %v834 = vpop.f32.mrb[0].mxu0
        %v835 = vpop.f32.mrb[0].mxu0
        %v836 = vpop.f32.mrb[0].mxu0
        %837 = vdwg.mxu0
        %v838 = vpack.c.bf16 %v833, %v833
        %v839 = vld [vmem:[%s3 + $0x4] sm:$0xf]
        %v841 = vsel %vm603, %v838, 0
        %v844 = vsel %vm607, %v839, 0
        %846 = vmatprep.subr.bf16.mxu0 0
        %847 = vmatpush1.bf16.msra.mxu0 %v844
        %848 = vmatprep.subr.bf16.mxu0 0
        %849 = vmatpush1.bf16.msra.mxu0 0
        %850 = vmatprep.subr.bf16.mxu0 0
        %851 = vmatpush1.bf16.msra.mxu0 0
        %852 = vmatprep.subr.bf16.mxu0 0
        %853 = vmatpush1.bf16.msra.mxu0 0
        %854 = vmatprep.subr.bf16.mxu0 0
        %855 = vmatpush1.bf16.msra.mxu0 0
        %856 = vmatprep.subr.bf16.mxu0 0
        %857 = vmatpush1.bf16.msra.mxu0 0
        %858 = vmatprep.subr.bf16.mxu0 0
        %859 = vmatpush1.bf16.msra.mxu0 0
        %860 = vmatprep.subr.bf16.mxu0 0
        %861 = vmatpush1.bf16.msra.mxu0 0
        %862 = vmatprep.subr.bf16.mxu0 0
        %863 = vmatpush1.bf16.msra.mxu0 0
        %864 = vmatprep.subr.bf16.mxu0 0
        %865 = vmatpush1.bf16.msra.mxu0 0
        %866 = vmatprep.subr.bf16.mxu0 0
        %867 = vmatpush1.bf16.msra.mxu0 0
        %868 = vmatprep.subr.bf16.mxu0 0
        %869 = vmatpush1.bf16.msra.mxu0 0
        %870 = vmatprep.subr.bf16.mxu0 0
        %871 = vmatpush1.bf16.msra.mxu0 0
        %872 = vmatprep.subr.bf16.mxu0 0
        %873 = vmatpush1.bf16.msra.mxu0 0
        %874 = vmatprep.subr.bf16.mxu0 0
        %875 = vmatpush1.bf16.msra.mxu0 0
        %876 = vmatprep.subr.bf16.mxu0 0
        %877 = vmatpush1.bf16.msra.mxu0 0
        %878 = vmatprep.mubr.bf16.mxu0 0
        %879 = vmatmul.mubr.bf16.gmra.mrb[0].mxu0 %v841
        %v880 = vpop.f32.mrb[0].mxu0
        %v881 = vadd.f32 0.0, %v880
        %v882 = vpop.f32.mrb[0].mxu0
        %v883 = vpop.f32.mrb[0].mxu0
        %v884 = vpop.f32.mrb[0].mxu0
        %885 = vdwg.mxu0
        %v887 = vsel %vm603, %v709, 0
        %v890 = vsel %vm607, %v710, 0
        %892 = vmatprep.subr.bf16.mxu0 0
        %893 = vmatpush1.bf16.msra.mxu0 %v890
        %894 = vmatprep.subr.bf16.mxu0 0
        %895 = vmatpush1.bf16.msra.mxu0 0
        %896 = vmatprep.subr.bf16.mxu0 0
        %897 = vmatpush1.bf16.msra.mxu0 0
        %898 = vmatprep.subr.bf16.mxu0 0
        %899 = vmatpush1.bf16.msra.mxu0 0
        %900 = vmatprep.subr.bf16.mxu0 0
        %901 = vmatpush1.bf16.msra.mxu0 0
        %902 = vmatprep.subr.bf16.mxu0 0
        %903 = vmatpush1.bf16.msra.mxu0 0
        %904 = vmatprep.subr.bf16.mxu0 0
        %905 = vmatpush1.bf16.msra.mxu0 0
        %906 = vmatprep.subr.bf16.mxu0 0
        %907 = vmatpush1.bf16.msra.mxu0 0
        %908 = vmatprep.subr.bf16.mxu0 0
        %909 = vmatpush1.bf16.msra.mxu0 0
        %910 = vmatprep.subr.bf16.mxu0 0
        %911 = vmatpush1.bf16.msra.mxu0 0
        %912 = vmatprep.subr.bf16.mxu0 0
        %913 = vmatpush1.bf16.msra.mxu0 0
        %914 = vmatprep.subr.bf16.mxu0 0
        %915 = vmatpush1.bf16.msra.mxu0 0
        %916 = vmatprep.subr.bf16.mxu0 0
        %917 = vmatpush1.bf16.msra.mxu0 0
        %918 = vmatprep.subr.bf16.mxu0 0
        %919 = vmatpush1.bf16.msra.mxu0 0
        %920 = vmatprep.subr.bf16.mxu0 0
        %921 = vmatpush1.bf16.msra.mxu0 0
        %922 = vmatprep.subr.bf16.mxu0 0
        %923 = vmatpush1.bf16.msra.mxu0 0
        %924 = vmatprep.mubr.bf16.mxu0 0
        %925 = vmatmul.mubr.bf16.gmra.mrb[0].mxu0 %v887
        %v926 = vpop.f32.mrb[0].mxu0
        %v927 = vadd.f32 %v881, %v926
        %v928 = vpop.f32.mrb[0].mxu0
        %v929 = vpop.f32.mrb[0].mxu0
        %v930 = vpop.f32.mrb[0].mxu0
        %931 = vdwg.mxu0
        %932 = vxpose.xlu0.c.b16.start [1/8] %v575, 128
        %933 = vxpose.xlu0.c.b16.cont [2/8] 0, 128
        %934 = vxpose.xlu0.c.b16.cont [3/8] 0, 128
        %935 = vxpose.xlu0.c.b16.cont [4/8] 0, 128
        %936 = vxpose.xlu0.c.b16.cont [5/8] 0, 128
        %937 = vxpose.xlu0.c.b16.cont [6/8] 0, 128
        %938 = vxpose.xlu0.c.b16.cont [7/8] 0, 128
        %939 = vxpose.xlu0.c.b16.end [8/8] 0, 128
        %v940 = vpop.trf.xlu0
        %v941 = vpop.trf.xlu0
        %v942 = vpop.trf.xlu0
        %v943 = vpop.trf.xlu0
        %v944 = vpop.trf.xlu0
        %v945 = vpop.trf.xlu0
        %v946 = vpop.trf.xlu0
        %v947 = vpop.trf.xlu0
        %v949 = vsel %vm603, %v940, 0
        %v952 = vsel %vm607, %v577, 0
        %954 = vmatprep.subr.bf16.mxu0 0
        %955 = vmatpush1.bf16.msra.mxu0 %v952
        %956 = vmatprep.subr.bf16.mxu0 0
        %957 = vmatpush1.bf16.msra.mxu0 0
        %958 = vmatprep.subr.bf16.mxu0 0
        %959 = vmatpush1.bf16.msra.mxu0 0
        %960 = vmatprep.subr.bf16.mxu0 0
        %961 = vmatpush1.bf16.msra.mxu0 0
        %962 = vmatprep.subr.bf16.mxu0 0
        %963 = vmatpush1.bf16.msra.mxu0 0
        %964 = vmatprep.subr.bf16.mxu0 0
        %965 = vmatpush1.bf16.msra.mxu0 0
        %966 = vmatprep.subr.bf16.mxu0 0
        %967 = vmatpush1.bf16.msra.mxu0 0
        %968 = vmatprep.subr.bf16.mxu0 0
        %969 = vmatpush1.bf16.msra.mxu0 0
        %970 = vmatprep.subr.bf16.mxu0 0
        %971 = vmatpush1.bf16.msra.mxu0 0
        %972 = vmatprep.subr.bf16.mxu0 0
        %973 = vmatpush1.bf16.msra.mxu0 0
        %974 = vmatprep.subr.bf16.mxu0 0
        %975 = vmatpush1.bf16.msra.mxu0 0
        %976 = vmatprep.subr.bf16.mxu0 0
        %977 = vmatpush1.bf16.msra.mxu0 0
        %978 = vmatprep.subr.bf16.mxu0 0
        %979 = vmatpush1.bf16.msra.mxu0 0
        %980 = vmatprep.subr.bf16.mxu0 0
        %981 = vmatpush1.bf16.msra.mxu0 0
        %982 = vmatprep.subr.bf16.mxu0 0
        %983 = vmatpush1.bf16.msra.mxu0 0
        %984 = vmatprep.subr.bf16.mxu0 0
        %985 = vmatpush1.bf16.msra.mxu0 0
        %986 = vmatprep.mubr.bf16.mxu0 0
        %987 = vmatmul.mubr.bf16.gmra.mrb[0].mxu0 %v949
        %v988 = vpop.f32.mrb[0].mxu0
        %v989 = vadd.f32 %v586, %v988
        %v990 = vpop.f32.mrb[0].mxu0
        %v991 = vpop.f32.mrb[0].mxu0
        %v992 = vpop.f32.mrb[0].mxu0
        %993 = vdwg.mxu0
        %v994 = vsel %vm603, %v989, -inf
        %995 = vmax.xlane.f32.xlu0 %v994
        %v996 = vpop.xlane.xlu0 %995
        %v997 = vsub.f32 %v989, %v996
        %v998 = vmul.f32 %v997, 1.442695
        %v999 = vpow.pop %v998
        %v1000 = vsel %vm603, %v999, 0.0
        %1001 = vadd.xlane.f32.xlu0 %v1000
        %v1002 = vpop.xlane.xlu0 %1001
        %v1003 = vrcp.pop %v1002
        %v1004 = vmul.f32 %v999, %v1003
        %v1005 = vpack.c.bf16 %v1004, %v1004
        %v1007 = vsel %vm603, %v1005, 0
        %v1010 = vsel %vm603, %v579, 0
        %1012 = vmatprep.subr.bf16.mxu0 0
        %1013 = vmatpush1.bf16.xpose.msra.mxu0 %v1010
        %1014 = vmatprep.subr.bf16.mxu0 0
        %1015 = vmatpush1.bf16.xpose.msra.mxu0 0
        %1016 = vmatprep.subr.bf16.mxu0 0
        %1017 = vmatpush1.bf16.xpose.msra.mxu0 0
        %1018 = vmatprep.subr.bf16.mxu0 0
        %1019 = vmatpush1.bf16.xpose.msra.mxu0 0
        %1020 = vmatprep.subr.bf16.mxu0 0
        %1021 = vmatpush1.bf16.xpose.msra.mxu0 0
        %1022 = vmatprep.subr.bf16.mxu0 0
        %1023 = vmatpush1.bf16.xpose.msra.mxu0 0
        %1024 = vmatprep.subr.bf16.mxu0 0
        %1025 = vmatpush1.bf16.xpose.msra.mxu0 0
        %1026 = vmatprep.subr.bf16.mxu0 0
        %1027 = vmatpush1.bf16.xpose.msra.mxu0 0
        %1028 = vmatprep.subr.bf16.mxu0 0
        %1029 = vmatpush1.bf16.xpose.msra.mxu0 0
        %1030 = vmatprep.subr.bf16.mxu0 0
        %1031 = vmatpush1.bf16.xpose.msra.mxu0 0
        %1032 = vmatprep.subr.bf16.mxu0 0
        %1033 = vmatpush1.bf16.xpose.msra.mxu0 0
        %1034 = vmatprep.subr.bf16.mxu0 0
        %1035 = vmatpush1.bf16.xpose.msra.mxu0 0
        %1036 = vmatprep.subr.bf16.mxu0 0
        %1037 = vmatpush1.bf16.xpose.msra.mxu0 0
        %1038 = vmatprep.subr.bf16.mxu0 0
        %1039 = vmatpush1.bf16.xpose.msra.mxu0 0
        %1040 = vmatprep.subr.bf16.mxu0 0
        %1041 = vmatpush1.bf16.xpose.msra.mxu0 0
        %1042 = vmatprep.subr.bf16.mxu0 0
        %1043 = vmatpush1.bf16.xpose.msra.mxu0 0
        %1044 = vmatprep.mubr.bf16.mxu0 0
        %1045 = vmatmul.mubr.bf16.gmra.mrb[0].mxu0 %v1007
        %v1046 = vpop.f32.mrb[0].mxu0
        %v1047 = vadd.f32 0.0, %v1046
        %v1048 = vpop.f32.mrb[0].mxu0
        %v1049 = vpop.f32.mrb[0].mxu0
        %v1050 = vpop.f32.mrb[0].mxu0
        %1051 = vdwg.mxu0
        %v1052 = vpack.c.bf16 %v1047, %v1047
        %v1053 = vld [vmem:[%s3 + $0x8] sm:$0xf]
        %v1055 = vsel %vm603, %v1052, 0
        %v1058 = vsel %vm607, %v1053, 0
        %1060 = vmatprep.subr.bf16.mxu0 0
        %1061 = vmatpush1.bf16.msra.mxu0 %v1058
        %1062 = vmatprep.subr.bf16.mxu0 0
        %1063 = vmatpush1.bf16.msra.mxu0 0
        %1064 = vmatprep.subr.bf16.mxu0 0
        %1065 = vmatpush1.bf16.msra.mxu0 0
        %1066 = vmatprep.subr.bf16.mxu0 0
        %1067 = vmatpush1.bf16.msra.mxu0 0
        %1068 = vmatprep.subr.bf16.mxu0 0
        %1069 = vmatpush1.bf16.msra.mxu0 0
        %1070 = vmatprep.subr.bf16.mxu0 0
        %1071 = vmatpush1.bf16.msra.mxu0 0
        %1072 = vmatprep.subr.bf16.mxu0 0
        %1073 = vmatpush1.bf16.msra.mxu0 0
        %1074 = vmatprep.subr.bf16.mxu0 0
        %1075 = vmatpush1.bf16.msra.mxu0 0
        %1076 = vmatprep.subr.bf16.mxu0 0
        %1077 = vmatpush1.bf16.msra.mxu0 0
        %1078 = vmatprep.subr.bf16.mxu0 0
        %1079 = vmatpush1.bf16.msra.mxu0 0
        %1080 = vmatprep.subr.bf16.mxu0 0
        %1081 = vmatpush1.bf16.msra.mxu0 0
        %1082 = vmatprep.subr.bf16.mxu0 0
        %1083 = vmatpush1.bf16.msra.mxu0 0
        %1084 = vmatprep.subr.bf16.mxu0 0
        %1085 = vmatpush1.bf16.msra.mxu0 0
        %1086 = vmatprep.subr.bf16.mxu0 0
        %1087 = vmatpush1.bf16.msra.mxu0 0
        %1088 = vmatprep.subr.bf16.mxu0 0
        %1089 = vmatpush1.bf16.msra.mxu0 0
        %1090 = vmatprep.subr.bf16.mxu0 0
        %1091 = vmatpush1.bf16.msra.mxu0 0
        %1092 = vmatprep.mubr.bf16.mxu0 0
        %1093 = vmatmul.mubr.bf16.gmra.mrb[0].mxu0 %v1055
        %v1094 = vpop.f32.mrb[0].mxu0
        %v1095 = vadd.f32 0.0, %v1094
        %v1096 = vpop.f32.mrb[0].mxu0
        %v1097 = vpop.f32.mrb[0].mxu0
        %v1098 = vpop.f32.mrb[0].mxu0
        %1099 = vdwg.mxu0
        %v1100 = vadd.f32 %v927, %v1095
        %v1102 = vrot.slane %v575, 4
        %1104 = vxpose.xlu0.c.b16.start [1/8] %v1102, 128
        %1105 = vxpose.xlu0.c.b16.cont [2/8] 0, 128
        %1106 = vxpose.xlu0.c.b16.cont [3/8] 0, 128
        %1107 = vxpose.xlu0.c.b16.cont [4/8] 0, 128
        %1108 = vxpose.xlu0.c.b16.cont [5/8] 0, 128
        %1109 = vxpose.xlu0.c.b16.cont [6/8] 0, 128
        %1110 = vxpose.xlu0.c.b16.cont [7/8] 0, 128
        %1111 = vxpose.xlu0.c.b16.end [8/8] 0, 128
        %v1112 = vpop.trf.xlu0
        %v1113 = vpop.trf.xlu0
        %v1114 = vpop.trf.xlu0
        %v1115 = vpop.trf.xlu0
        %v1116 = vpop.trf.xlu0
        %v1117 = vpop.trf.xlu0
        %v1118 = vpop.trf.xlu0
        %v1119 = vpop.trf.xlu0
        %v1121 = vrot.slane %v577, 4
        %v1123 = vsel %vm603, %v1112, 0
        %v1126 = vsel %vm607, %v1121, 0
        %1128 = vmatprep.subr.bf16.mxu0 0
        %1129 = vmatpush1.bf16.msra.mxu0 %v1126
        %1130 = vmatprep.subr.bf16.mxu0 0
        %1131 = vmatpush1.bf16.msra.mxu0 0
        %1132 = vmatprep.subr.bf16.mxu0 0
        %1133 = vmatpush1.bf16.msra.mxu0 0
        %1134 = vmatprep.subr.bf16.mxu0 0
        %1135 = vmatpush1.bf16.msra.mxu0 0
        %1136 = vmatprep.subr.bf16.mxu0 0
        %1137 = vmatpush1.bf16.msra.mxu0 0
        %1138 = vmatprep.subr.bf16.mxu0 0
        %1139 = vmatpush1.bf16.msra.mxu0 0
        %1140 = vmatprep.subr.bf16.mxu0 0
        %1141 = vmatpush1.bf16.msra.mxu0 0
        %1142 = vmatprep.subr.bf16.mxu0 0
        %1143 = vmatpush1.bf16.msra.mxu0 0
        %1144 = vmatprep.subr.bf16.mxu0 0
        %1145 = vmatpush1.bf16.msra.mxu0 0
        %1146 = vmatprep.subr.bf16.mxu0 0
        %1147 = vmatpush1.bf16.msra.mxu0 0
        %1148 = vmatprep.subr.bf16.mxu0 0
        %1149 = vmatpush1.bf16.msra.mxu0 0
        %1150 = vmatprep.subr.bf16.mxu0 0
        %1151 = vmatpush1.bf16.msra.mxu0 0
        %1152 = vmatprep.subr.bf16.mxu0 0
        %1153 = vmatpush1.bf16.msra.mxu0 0
        %1154 = vmatprep.subr.bf16.mxu0 0
        %1155 = vmatpush1.bf16.msra.mxu0 0
        %1156 = vmatprep.subr.bf16.mxu0 0
        %1157 = vmatpush1.bf16.msra.mxu0 0
        %1158 = vmatprep.subr.bf16.mxu0 0
        %1159 = vmatpush1.bf16.msra.mxu0 0
        %1160 = vmatprep.mubr.bf16.mxu0 0
        %1161 = vmatmul.mubr.bf16.gmra.mrb[0].mxu0 %v1123
        %v1162 = vpop.f32.mrb[0].mxu0
        %v1163 = vadd.f32 %v586, %v1162
        %v1164 = vpop.f32.mrb[0].mxu0
        %v1165 = vpop.f32.mrb[0].mxu0
        %v1166 = vpop.f32.mrb[0].mxu0
        %1167 = vdwg.mxu0
        %v1168 = vsel %vm603, %v1163, -inf
        %1169 = vmax.xlane.f32.xlu0 %v1168
        %v1170 = vpop.xlane.xlu0 %1169
        %v1171 = vsub.f32 %v1163, %v1170
        %v1172 = vmul.f32 %v1171, 1.442695
        %v1173 = vpow.pop %v1172
        %v1174 = vsel %vm603, %v1173, 0.0
        %1175 = vadd.xlane.f32.xlu0 %v1174
        %v1176 = vpop.xlane.xlu0 %1175
        %v1177 = vrcp.pop %v1176
        %v1178 = vmul.f32 %v1173, %v1177
        %v1179 = vpack.c.bf16 %v1178, %v1178
        %v1181 = vrot.slane %v579, 4
        %v1183 = vsel %vm603, %v1179, 0
        %v1186 = vsel %vm603, %v1181, 0
        %1188 = vmatprep.subr.bf16.mxu0 0
        %1189 = vmatpush1.bf16.xpose.msra.mxu0 %v1186
        %1190 = vmatprep.subr.bf16.mxu0 0
        %1191 = vmatpush1.bf16.xpose.msra.mxu0 0
        %1192 = vmatprep.subr.bf16.mxu0 0
        %1193 = vmatpush1.bf16.xpose.msra.mxu0 0
        %1194 = vmatprep.subr.bf16.mxu0 0
        %1195 = vmatpush1.bf16.xpose.msra.mxu0 0
        %1196 = vmatprep.subr.bf16.mxu0 0
        %1197 = vmatpush1.bf16.xpose.msra.mxu0 0
        %1198 = vmatprep.subr.bf16.mxu0 0
        %1199 = vmatpush1.bf16.xpose.msra.mxu0 0
        %1200 = vmatprep.subr.bf16.mxu0 0
        %1201 = vmatpush1.bf16.xpose.msra.mxu0 0
        %1202 = vmatprep.subr.bf16.mxu0 0
        %1203 = vmatpush1.bf16.xpose.msra.mxu0 0
        %1204 = vmatprep.subr.bf16.mxu0 0
        %1205 = vmatpush1.bf16.xpose.msra.mxu0 0
        %1206 = vmatprep.subr.bf16.mxu0 0
        %1207 = vmatpush1.bf16.xpose.msra.mxu0 0
        %1208 = vmatprep.subr.bf16.mxu0 0
        %1209 = vmatpush1.bf16.xpose.msra.mxu0 0
        %1210 = vmatprep.subr.bf16.mxu0 0
        %1211 = vmatpush1.bf16.xpose.msra.mxu0 0
        %1212 = vmatprep.subr.bf16.mxu0 0
        %1213 = vmatpush1.bf16.xpose.msra.mxu0 0
        %1214 = vmatprep.subr.bf16.mxu0 0
        %1215 = vmatpush1.bf16.xpose.msra.mxu0 0
        %1216 = vmatprep.subr.bf16.mxu0 0
        %1217 = vmatpush1.bf16.xpose.msra.mxu0 0
        %1218 = vmatprep.subr.bf16.mxu0 0
        %1219 = vmatpush1.bf16.xpose.msra.mxu0 0
        %1220 = vmatprep.mubr.bf16.mxu0 0
        %1221 = vmatmul.mubr.bf16.gmra.mrb[0].mxu0 %v1183
        %v1222 = vpop.f32.mrb[0].mxu0
        %v1223 = vadd.f32 0.0, %v1222
        %v1224 = vpop.f32.mrb[0].mxu0
        %v1225 = vpop.f32.mrb[0].mxu0
        %v1226 = vpop.f32.mrb[0].mxu0
        %1227 = vdwg.mxu0
        %v1228 = vpack.c.bf16 %v1223, %v1223
        %v1229 = vld [vmem:[%s3 + $0xc] sm:$0xf]
        %v1231 = vsel %vm603, %v1228, 0
        %v1234 = vsel %vm607, %v1229, 0
        %1236 = vmatprep.subr.bf16.mxu0 0
        %1237 = vmatpush1.bf16.msra.mxu0 %v1234
        %1238 = vmatprep.subr.bf16.mxu0 0
        %1239 = vmatpush1.bf16.msra.mxu0 0
        %1240 = vmatprep.subr.bf16.mxu0 0
        %1241 = vmatpush1.bf16.msra.mxu0 0
        %1242 = vmatprep.subr.bf16.mxu0 0
        %1243 = vmatpush1.bf16.msra.mxu0 0
        %1244 = vmatprep.subr.bf16.mxu0 0
        %1245 = vmatpush1.bf16.msra.mxu0 0
        %1246 = vmatprep.subr.bf16.mxu0 0
        %1247 = vmatpush1.bf16.msra.mxu0 0
        %1248 = vmatprep.subr.bf16.mxu0 0
        %1249 = vmatpush1.bf16.msra.mxu0 0
        %1250 = vmatprep.subr.bf16.mxu0 0
        %1251 = vmatpush1.bf16.msra.mxu0 0
        %1252 = vmatprep.subr.bf16.mxu0 0
        %1253 = vmatpush1.bf16.msra.mxu0 0
        %1254 = vmatprep.subr.bf16.mxu0 0
        %1255 = vmatpush1.bf16.msra.mxu0 0
        %1256 = vmatprep.subr.bf16.mxu0 0
        %1257 = vmatpush1.bf16.msra.mxu0 0
        %1258 = vmatprep.subr.bf16.mxu0 0
        %1259 = vmatpush1.bf16.msra.mxu0 0
        %1260 = vmatprep.subr.bf16.mxu0 0
        %1261 = vmatpush1.bf16.msra.mxu0 0
        %1262 = vmatprep.subr.bf16.mxu0 0
        %1263 = vmatpush1.bf16.msra.mxu0 0
        %1264 = vmatprep.subr.bf16.mxu0 0
        %1265 = vmatpush1.bf16.msra.mxu0 0
        %1266 = vmatprep.subr.bf16.mxu0 0
        %1267 = vmatpush1.bf16.msra.mxu0 0
        %1268 = vmatprep.mubr.bf16.mxu0 0
        %1269 = vmatmul.mubr.bf16.gmra.mrb[0].mxu0 %v1231
        %v1270 = vpop.f32.mrb[0].mxu0
        %v1271 = vadd.f32 0.0, %v1270
        %v1272 = vpop.f32.mrb[0].mxu0
        %v1273 = vpop.f32.mrb[0].mxu0
        %v1274 = vpop.f32.mrb[0].mxu0
        %1275 = vdwg.mxu0
        %v1276 = vadd.f32 %v1100, %v1271
        %v1277 = vadd.f32 %v1276, %v427
        %v1278 = vsel %vm471, %v1277, 0.0
        %1279 = vadd.xlane.f32.xlu0 %v1278
        %v1280 = vpop.xlane.xlu0 %1279
        %v1281 = vrcp.pop 32.0
        %v1282 = vmul.f32 %v1280, %v1281
        %v1283 = vsub.f32 %v1277, %v1282
        %v1284 = vmul.f32 %v1283, %v1283
        %v1285 = vsel %vm471, %v1284, 0.0
        %1286 = vadd.xlane.f32.xlu0 %v1285
        %v1287 = vpop.xlane.xlu0 %1286
        %v1288 = vmul.f32 %v1287, %v1281
        %v1289 = vadd.f32 %v1288, 1e-06
        %v1290 = vrsqrt.pop %v1289
        %v1291 = vmul.f32 %v1283, %v1290
        %v1292 = vld [vmem:[%s4] sm:$0x1]
        %v1294 = vlaneseq
        %v1295 = vshrl.u32 %v1294, 7
        %v1296 = vsub.s32 0, %v1295
        %v1297 = vrot.slane %v1292, %v1296
        %v1299 = vmul.f32 %v1291, %v1297
        %v1300 = vld [vmem:[%s5] sm:$0x1]
        %v1302 = vlaneseq
        %v1303 = vshrl.u32 %v1302, 7
        %v1304 = vsub.s32 0, %v1303
        %v1305 = vrot.slane %v1300, %v1304
        %v1307 = vadd.f32 %v1299, %v1305
        %v1308 = vpack.c.bf16 %v1307, %v1307
        %v1309 = vld [vmem:[%s6] sm:$0xf]
        %v1310 = vld [vmem:[%s6 + $0x4] sm:$0xf]
        %v1311 = vld [vmem:[%s6 + $0x8] sm:$0xf]
        %v1312 = vld [vmem:[%s6 + $0xc] sm:$0xf]
        %v1313 = vld [vmem:[%s7] sm:$0x1]
        %v1315 = vlaneseq
        %v1316 = vshrl.u32 %v1315, 7
        %v1317 = vsub.s32 0, %v1316
        %v1318 = vrot.slane %v1313, %v1317
        %v1324 = vunpack.c.l.b16 %v1309
        %v1325 = vunpack.c.l.b16 %v1310
        %v1326 = vunpack.c.l.b16 %v1311
        %v1327 = vunpack.c.l.b16 %v1312
        %v1328 = vpack.c.b16 %v1325, %v1324
        %v1329 = vpack.c.b16 %v1327, %v1326
        %v1333 = vsel %vm471, %v1308, 0
        %1335 = vmatprep.subr.bf16.mxu0 0
        %1336 = vmatpush1.bf16.msra.mxu0 %v1328
        %1337 = vmatprep.subr.bf16.mxu0 0
        %1338 = vmatpush1.bf16.msra.mxu0 %v1329
        %1339 = vmatprep.subr.bf16.mxu0 0
        %1340 = vmatpush1.bf16.msra.mxu0 0
        %1341 = vmatprep.subr.bf16.mxu0 0
        %1342 = vmatpush1.bf16.msra.mxu0 0
        %1343 = vmatprep.subr.bf16.mxu0 0
        %1344 = vmatpush1.bf16.msra.mxu0 0
        %1345 = vmatprep.subr.bf16.mxu0 0
        %1346 = vmatpush1.bf16.msra.mxu0 0
        %1347 = vmatprep.subr.bf16.mxu0 0
        %1348 = vmatpush1.bf16.msra.mxu0 0
        %1349 = vmatprep.subr.bf16.mxu0 0
        %1350 = vmatpush1.bf16.msra.mxu0 0
        %1351 = vmatprep.subr.bf16.mxu0 0
        %1352 = vmatpush1.bf16.msra.mxu0 0
        %1353 = vmatprep.subr.bf16.mxu0 0
        %1354 = vmatpush1.bf16.msra.mxu0 0
        %1355 = vmatprep.subr.bf16.mxu0 0
        %1356 = vmatpush1.bf16.msra.mxu0 0
        %1357 = vmatprep.subr.bf16.mxu0 0
        %1358 = vmatpush1.bf16.msra.mxu0 0
        %1359 = vmatprep.subr.bf16.mxu0 0
        %1360 = vmatpush1.bf16.msra.mxu0 0
        %1361 = vmatprep.subr.bf16.mxu0 0
        %1362 = vmatpush1.bf16.msra.mxu0 0
        %1363 = vmatprep.subr.bf16.mxu0 0
        %1364 = vmatpush1.bf16.msra.mxu0 0
        %1365 = vmatprep.subr.bf16.mxu0 0
        %1366 = vmatpush1.bf16.msra.mxu0 0
        %1367 = vmatprep.mubr.bf16.mxu0 0
        %1368 = vmatmul.mubr.bf16.gmra.mrb[0].mxu0 %v1333
        %v1369 = vpop.f32.mrb[0].mxu0
        %v1370 = vadd.f32 %v1318, %v1369
        %v1371 = vpop.f32.mrb[0].mxu0
        %v1372 = vpop.f32.mrb[0].mxu0
        %v1373 = vpop.f32.mrb[0].mxu0
        %1374 = vdwg.mxu0
        %v1375 = vmax.f32 %v1370, 0.0
        %v1376 = vpack.c.bf16 %v1375, %v1375
        %v1377 = vld [vmem:[%s8] sm:$0xf]
        %v1378 = vld [vmem:[%s8 + $0x4] sm:$0xf]
        %v1379 = vld [vmem:[%s8 + $0x8] sm:$0xf]
        %v1380 = vld [vmem:[%s8 + $0xc] sm:$0xf]
        %v1381 = vld [vmem:[%s9] sm:$0x1]
        %v1383 = vlaneseq
        %v1384 = vshrl.u32 %v1383, 7
        %v1385 = vsub.s32 0, %v1384
        %v1386 = vrot.slane %v1381, %v1385
        %v1392 = vunpack.c.l.b16 %v1377
        %v1393 = vunpack.c.l.b16 %v1378
        %v1394 = vunpack.c.l.b16 %v1379
        %v1395 = vunpack.c.l.b16 %v1380
        %v1396 = vpack.c.b16 %v1393, %v1392
        %v1397 = vpack.c.b16 %v1395, %v1394
        %v1401 = vsel %vm471, %v1376, 0
        %1403 = vmatprep.subr.bf16.mxu0 0
        %1404 = vmatpush1.bf16.msra.mxu0 %v1396
        %1405 = vmatprep.subr.bf16.mxu0 0
        %1406 = vmatpush1.bf16.msra.mxu0 %v1397
        %1407 = vmatprep.subr.bf16.mxu0 0
        %1408 = vmatpush1.bf16.msra.mxu0 0
        %1409 = vmatprep.subr.bf16.mxu0 0
        %1410 = vmatpush1.bf16.msra.mxu0 0
        %1411 = vmatprep.subr.bf16.mxu0 0
        %1412 = vmatpush1.bf16.msra.mxu0 0
        %1413 = vmatprep.subr.bf16.mxu0 0
        %1414 = vmatpush1.bf16.msra.mxu0 0
        %1415 = vmatprep.subr.bf16.mxu0 0
        %1416 = vmatpush1.bf16.msra.mxu0 0
        %1417 = vmatprep.subr.bf16.mxu0 0
        %1418 = vmatpush1.bf16.msra.mxu0 0
        %1419 = vmatprep.subr.bf16.mxu0 0
        %1420 = vmatpush1.bf16.msra.mxu0 0
        %1421 = vmatprep.subr.bf16.mxu0 0
        %1422 = vmatpush1.bf16.msra.mxu0 0
        %1423 = vmatprep.subr.bf16.mxu0 0
        %1424 = vmatpush1.bf16.msra.mxu0 0
        %1425 = vmatprep.subr.bf16.mxu0 0
        %1426 = vmatpush1.bf16.msra.mxu0 0
        %1427 = vmatprep.subr.bf16.mxu0 0
        %1428 = vmatpush1.bf16.msra.mxu0 0
        %1429 = vmatprep.subr.bf16.mxu0 0
        %1430 = vmatpush1.bf16.msra.mxu0 0
        %1431 = vmatprep.subr.bf16.mxu0 0
        %1432 = vmatpush1.bf16.msra.mxu0 0
        %1433 = vmatprep.subr.bf16.mxu0 0
        %1434 = vmatpush1.bf16.msra.mxu0 0
        %1435 = vmatprep.mubr.bf16.mxu0 0
        %1436 = vmatmul.mubr.bf16.gmra.mrb[0].mxu0 %v1401
        %v1437 = vpop.f32.mrb[0].mxu0
        %v1438 = vadd.f32 %v1386, %v1437
        %v1439 = vpop.f32.mrb[0].mxu0
        %v1440 = vpop.f32.mrb[0].mxu0
        %v1441 = vpop.f32.mrb[0].mxu0
        %1442 = vdwg.mxu0
        %v1443 = vadd.f32 %v1438, %v1307
        %v1444 = vsel %vm471, %v1443, 0.0
        %1445 = vadd.xlane.f32.xlu0 %v1444
        %v1446 = vpop.xlane.xlu0 %1445
        %v1447 = vmul.f32 %v1446, %v1281
        %v1448 = vsub.f32 %v1443, %v1447
        %v1449 = vmul.f32 %v1448, %v1448
        %v1450 = vsel %vm471, %v1449, 0.0
        %1451 = vadd.xlane.f32.xlu0 %v1450
        %v1452 = vpop.xlane.xlu0 %1451
        %v1453 = vmul.f32 %v1452, %v1281
        %v1454 = vadd.f32 %v1453, 1e-06
        %v1455 = vrsqrt.pop %v1454
        %v1456 = vmul.f32 %v1448, %v1455
        %v1457 = vld [vmem:[%s10] sm:$0x1]
        %v1459 = vlaneseq
        %v1460 = vshrl.u32 %v1459, 7
        %v1461 = vsub.s32 0, %v1460
        %v1462 = vrot.slane %v1457, %v1461
        %v1464 = vmul.f32 %v1456, %v1462
        %v1465 = vld [vmem:[%s11] sm:$0x1]
        %v1467 = vlaneseq
        %v1468 = vshrl.u32 %v1467, 7
        %v1469 = vsub.s32 0, %v1468
        %v1470 = vrot.slane %v1465, %v1469
        %v1472 = vadd.f32 %v1464, %v1470
        %1473 = vst.msk [vmem:[%s417] sm:$0xff] %vm471, %v1472
        %s1474 = sand.u32 %s296, 1
        %s1475 = scalar_lea.sflag [#allocation3], %s1474
        %s1476 = sand.u32 %s296, 1
        %s1477 = smul.addr %s1476, 8
        %s1478 = scalar_lea.vmem [#allocation2], %s1477
        // Predicated region
        $region69: #{tpu_custom_call.1} parent=67 // pred_check
          %p1479 = pneg %p306
        $region70: #{tpu_custom_call.1} parent=67 // pred_check_branch
          %1481 = sbr.rel (%p1479) target = $region72
        $region71: #{tpu_custom_call.1} parent=67 // pred_region
          %s1483 = ssub.s32 128, 128
          %1484 = vsyncadd %s1475, %s1483
          %s1485 = smul.addr %s26, 128
          %s1486 = scalar_lea.hbm %s12, %s1485
          %s1488 = sshll.u32 %s1478, 4
          %s1489 = int_to_ptr.vmem [resolvable:$true] %s1488
          %1491 = dma.vmem_to_hbm [thread:$0]  %s1489, 128, %s1486, %s1475
        $region72: #{tpu_custom_call.1} parent=67 // pred_fallthru
          _
      $region68: #{tpu_custom_call.1} parent=5 // pred_fallthru
        _
      %p1492 = scmp.le.s32.totalorder 2, %s21
      // Predicated region
      $region73: #{tpu_custom_call.1} parent=5 // pred_check
        %p1493 = pneg %p1492
      $region74: #{tpu_custom_call.1} parent=5 // pred_check_branch
        %1495 = sbr.rel (%p1493) target = $region76
      $region75: #{tpu_custom_call.1} parent=5 // pred_region
        %s1496 = ssub.s32 %s21, 2
        // Predicated region
        $region77: #{tpu_custom_call.1} parent=75 // pred_check
          %p1497 = pneg %p312
        $region78: #{tpu_custom_call.1} parent=75 // pred_check_branch
          %1499 = sbr.rel (%p1497) target = $region80
        $region79: #{tpu_custom_call.1} parent=75 // pred_region
          %s1500 = sand.u32 %s297, 1
          %s1501 = scalar_lea.sflag [#allocation3], %s1500
          %s1502 = sand.u32 %s297, 1
          %s1503 = smul.addr %s1502, 8
          %s1504 = scalar_lea.vmem [#allocation2], %s1503
          %1505 = dma.done %s1501, 128
        $region80: #{tpu_custom_call.1} parent=75 // pred_fallthru
          _
      $region76: #{tpu_custom_call.1} parent=5 // pred_fallthru
        _
    $region6: #{tpu_custom_call.1} parent=1 // loop_footer
      %s25 = sadd.s32 1, %s21
    $region7: #{tpu_custom_call.1} parent=1 // loop_footer_branch
      %20 = sbr.rel target = $region3
    $region8: #{tpu_custom_call.1} parent=1 // loop_exit
      _
    %1506 = vsyncpa [#allocation3], 1
    %s1507 = scalar_lea.sflag [#allocation3], 1
    %1508 = vsyncpa %s1507, 1

// kernel: tpu_custom_call.1
$region0: #{tpu_custom_call.1}
  #allocation0 [shape = 'u32[]', space=smem, size = 0x4, offset = 0x4, fixed_abs, tag = 'smem constant byte address 0x4 - core index']
  #allocation1 [shape = 'u32[144,128]{1,0:T(1,128)}', space=vmem, size = 0x12000, scoped, tag = 'internal scratch']
  %s0 = inlined_call_operand.vmem [shape: f32[16,32], index: 0, kind: input, shape index: {}]
  %s1 = inlined_call_operand.vmem [shape: f32[2,8,8], index: 1, kind: input, shape index: {}]
  %s2 = inlined_call_operand.vmem [shape: bf16[96,32], index: 2, kind: input, shape index: {}]
  %s3 = inlined_call_operand.vmem [shape: bf16[32,32], index: 3, kind: input, shape index: {}]
  %s4 = inlined_call_operand.vmem [shape: f32[1,32], index: 4, kind: input, shape index: {}]
  %s5 = inlined_call_operand.vmem [shape: f32[1,32], index: 5, kind: input, shape index: {}]
  %s6 = inlined_call_operand.vmem [shape: bf16[32,32], index: 6, kind: input, shape index: {}]
  %s7 = inlined_call_operand.vmem [shape: f32[1,32], index: 7, kind: input, shape index: {}]
  %s8 = inlined_call_operand.vmem [shape: bf16[32,32], index: 8, kind: input, shape index: {}]
  %s9 = inlined_call_operand.vmem [shape: f32[1,32], index: 9, kind: input, shape index: {}]
  %s10 = inlined_call_operand.vmem [shape: f32[1,32], index: 10, kind: input, shape index: {}]
  %s11 = inlined_call_operand.vmem [shape: f32[1,32], index: 11, kind: input, shape index: {}]
  %s12 = inlined_call_operand.hbm [shape: f32[16,32], index: 12, kind: output, shape index: {}]
  %s13 = sld [smem:[#allocation0]]
  $region81: #{tpu_custom_call.1} parent=0
    _
  %s15 = ssub.s32 1, %s13
  %s16 = scalar_select 0, %s15, %s13
  $region1: #{tpu_custom_call.1} parent=0
    #allocation2 [shape = 'u8[8192]{0}', space=vmem, size = 0x2000, scoped, tag = 'output window, operand 0']
    #allocation3 [shape = 's32[2]{0}', space=sflag, size = 0x8, scoped, tag = 'scoped memory for tpu_custom_call.1']
    %17 = vsyncpa [#allocation3], 0
    %s18 = scalar_lea.sflag [#allocation3], 1
    %19 = vsyncpa %s18, 0
    loop: start=0, step=1, limit=4
    $region2: #{tpu_custom_call.1} parent=1 // loop_pre_header
      _
    $region3: #{tpu_custom_call.1} parent=1 // loop_header
      %s21 = sphi 0, %s25
      %p22 = scmp.ge.s32.totalorder %s21, 4
      %s31 = sphi 0, %s33
      %s34 = sphi 0, %s31
      %s35 = sphi 0, %s34
      %s51 = sphi 0, %s35
      %s57 = sphi 0, %s59
      %s60 = sphi 0, %s57
      %s61 = sphi 0, %s60
      %s77 = sphi 0, %s61
      %s81 = sphi 0, %s81
      %s83 = sphi 0, %s81
      %s84 = sphi 0, %s83
      %s98 = sphi 0, %s84
      %s102 = sphi 0, %s102
      %s104 = sphi 0, %s102
      %s105 = sphi 0, %s104
      %s119 = sphi 0, %s105
      %s123 = sphi 0, %s123
      %s125 = sphi 0, %s123
      %s126 = sphi 0, %s125
      %s140 = sphi 0, %s126
      %s144 = sphi 0, %s144
      %s146 = sphi 0, %s144
      %s147 = sphi 0, %s146
      %s161 = sphi 0, %s147
      %s165 = sphi 0, %s165
      %s167 = sphi 0, %s165
      %s168 = sphi 0, %s167
      %s182 = sphi 0, %s168
      %s186 = sphi 0, %s186
      %s188 = sphi 0, %s186
      %s189 = sphi 0, %s188
      %s203 = sphi 0, %s189
      %s207 = sphi 0, %s207
      %s209 = sphi 0, %s207
      %s210 = sphi 0, %s209
      %s224 = sphi 0, %s210
      %s228 = sphi 0, %s228
      %s230 = sphi 0, %s228
      %s231 = sphi 0, %s230
      %s245 = sphi 0, %s231
      %s249 = sphi 0, %s249
      %s251 = sphi 0, %s249
      %s252 = sphi 0, %s251
      %s266 = sphi 0, %s252
      %s270 = sphi 0, %s270
      %s272 = sphi 0, %s270
      %s273 = sphi 0, %s272
      %s287 = sphi 0, %s273
      %s293 = sphi 0, %s295
      %s296 = sphi 0, %s293
      %s297 = sphi 0, %s296
      %s313 = sphi 0, %s297
    $region4: #{tpu_custom_call.1} parent=1 // loop_header_branch
      %24 = sbr.rel (%p22) target = $region8
    $region5: #{tpu_custom_call.1} parent=1 // loop_body
      %s26 = ssub.s32 %s21, 1
      %s27 = ssub.s32 %s21, 2
      %s28 = sadd.s32 %s21, 1
      %s29 = ssub.s32 %s21, %s28
      %p30 = scmp.eq.s32.totalorder %s29, 0
      %s32 = sadd.s32 %s31, 1
      %s33 = scalar_select %p30, %s31, %s32
      %p36 = pneg %p30
      %p37 = scmp.eq.s32.totalorder %s21, 1
      %p38 = por %p36, %p37
      %p39 = scmp.ne.s32.totalorder %s31, %s34
      %p40 = scmp.eq.s32.totalorder %s21, 0
      %p41 = por %p39, %p40
      %p42 = scmp.ne.s32.totalorder %s31, %s34
      %p43 = scmp.eq.s32.totalorder %s26, 1
      %p44 = por %p42, %p43
      %p45 = scmp.ne.s32.totalorder %s34, %s35
      %p46 = scmp.eq.s32.totalorder %s26, 0
      %p47 = por %p45, %p46
      %p48 = scmp.ne.s32.totalorder %s34, %s35
      %p49 = scmp.eq.s32.totalorder %s27, 1
      %p50 = por %p48, %p49
      %p52 = scmp.ne.s32.totalorder %s35, %s51
      %p53 = scmp.eq.s32.totalorder %s27, 0
      %p54 = por %p52, %p53
      %s55 = ssub.s32 %s21, %s28
      %p56 = scmp.eq.s32.totalorder %s55, 0
      %s58 = sadd.s32 %s57, 1
      %s59 = scalar_select %p56, %s57, %s58
      %p62 = pneg %p56
      %p63 = scmp.eq.s32.totalorder %s21, 1
      %p64 = por %p62, %p63
      %p65 = scmp.ne.s32.totalorder %s57, %s60
      %p66 = scmp.eq.s32.totalorder %s21, 0
      %p67 = por %p65, %p66
      %p68 = scmp.ne.s32.totalorder %s57, %s60
      %p69 = scmp.eq.s32.totalorder %s26, 1
      %p70 = por %p68, %p69
      %p71 = scmp.ne.s32.totalorder %s60, %s61
      %p72 = scmp.eq.s32.totalorder %s26, 0
      %p73 = por %p71, %p72
      %p74 = scmp.ne.s32.totalorder %s60, %s61
      %p75 = scmp.eq.s32.totalorder %s27, 1
      %p76 = por %p74, %p75
      %p78 = scmp.ne.s32.totalorder %s61, %s77
      %p79 = scmp.eq.s32.totalorder %s27, 0
      %p80 = por %p78, %p79
      %s82 = sadd.s32 %s81, 1
      %p85 = scmp.eq.s32.totalorder %s21, 1
      %p86 = scmp.ne.s32.totalorder %s81, %s83
      %p87 = scmp.eq.s32.totalorder %s21, 0
      %p88 = por %p86, %p87
      %p89 = scmp.ne.s32.totalorder %s81, %s83
      %p90 = scmp.eq.s32.totalorder %s26, 1
      %p91 = por %p89, %p90
      %p92 = scmp.ne.s32.totalorder %s83, %s84
      %p93 = scmp.eq.s32.totalorder %s26, 0
      %p94 = por %p92, %p93
      %p95 = scmp.ne.s32.totalorder %s83, %s84
      %p96 = scmp.eq.s32.totalorder %s27, 1
      %p97 = por %p95, %p96
      %p99 = scmp.ne.s32.totalorder %s84, %s98
      %p100 = scmp.eq.s32.totalorder %s27, 0
      %p101 = por %p99, %p100
      %s103 = sadd.s32 %s102, 1
      %p106 = scmp.eq.s32.totalorder %s21, 1
      %p107 = scmp.ne.s32.totalorder %s102, %s104
      %p108 = scmp.eq.s32.totalorder %s21, 0
      %p109 = por %p107, %p108
      %p110 = scmp.ne.s32.totalorder %s102, %s104
      %p111 = scmp.eq.s32.totalorder %s26, 1
      %p112 = por %p110, %p111
      %p113 = scmp.ne.s32.totalorder %s104, %s105
      %p114 = scmp.eq.s32.totalorder %s26, 0
      %p115 = por %p113, %p114
      %p116 = scmp.ne.s32.totalorder %s104, %s105
      %p117 = scmp.eq.s32.totalorder %s27, 1
      %p118 = por %p116, %p117
      %p120 = scmp.ne.s32.totalorder %s105, %s119
      %p121 = scmp.eq.s32.totalorder %s27, 0
      %p122 = por %p120, %p121
      %s124 = sadd.s32 %s123, 1
      %p127 = scmp.eq.s32.totalorder %s21, 1
      %p128 = scmp.ne.s32.totalorder %s123, %s125
      %p129 = scmp.eq.s32.totalorder %s21, 0
      %p130 = por %p128, %p129
      %p131 = scmp.ne.s32.totalorder %s123, %s125
      %p132 = scmp.eq.s32.totalorder %s26, 1
      %p133 = por %p131, %p132
      %p134 = scmp.ne.s32.totalorder %s125, %s126
      %p135 = scmp.eq.s32.totalorder %s26, 0
      %p136 = por %p134, %p135
      %p137 = scmp.ne.s32.totalorder %s125, %s126
      %p138 = scmp.eq.s32.totalorder %s27, 1
      %p139 = por %p137, %p138
      %p141 = scmp.ne.s32.totalorder %s126, %s140
      %p142 = scmp.eq.s32.totalorder %s27, 0
      %p143 = por %p141, %p142
      %s145 = sadd.s32 %s144, 1
      %p148 = scmp.eq.s32.totalorder %s21, 1
      %p149 = scmp.ne.s32.totalorder %s144, %s146
      %p150 = scmp.eq.s32.totalorder %s21, 0
      %p151 = por %p149, %p150
      %p152 = scmp.ne.s32.totalorder %s144, %s146
      %p153 = scmp.eq.s32.totalorder %s26, 1
      %p154 = por %p152, %p153
      %p155 = scmp.ne.s32.totalorder %s146, %s147
      %p156 = scmp.eq.s32.totalorder %s26, 0
      %p157 = por %p155, %p156
      %p158 = scmp.ne.s32.totalorder %s146, %s147
      %p159 = scmp.eq.s32.totalorder %s27, 1
      %p160 = por %p158, %p159
      %p162 = scmp.ne.s32.totalorder %s147, %s161
      %p163 = scmp.eq.s32.totalorder %s27, 0
      %p164 = por %p162, %p163
      %s166 = sadd.s32 %s165, 1
      %p169 = scmp.eq.s32.totalorder %s21, 1
      %p170 = scmp.ne.s32.totalorder %s165, %s167
      %p171 = scmp.eq.s32.totalorder %s21, 0
      %p172 = por %p170, %p171
      %p173 = scmp.ne.s32.totalorder %s165, %s167
      %p174 = scmp.eq.s32.totalorder %s26, 1
      %p175 = por %p173, %p174
      %p176 = scmp.ne.s32.totalorder %s167, %s168
      %p177 = scmp.eq.s32.totalorder %s26, 0
      %p178 = por %p176, %p177
      %p179 = scmp.ne.s32.totalorder %s167, %s168
      %p180 = scmp.eq.s32.totalorder %s27, 1
      %p181 = por %p179, %p180
      %p183 = scmp.ne.s32.totalorder %s168, %s182
      %p184 = scmp.eq.s32.totalorder %s27, 0
      %p185 = por %p183, %p184
      %s187 = sadd.s32 %s186, 1
      %p190 = scmp.eq.s32.totalorder %s21, 1
      %p191 = scmp.ne.s32.totalorder %s186, %s188
      %p192 = scmp.eq.s32.totalorder %s21, 0
      %p193 = por %p191, %p192
      %p194 = scmp.ne.s32.totalorder %s186, %s188
      %p195 = scmp.eq.s32.totalorder %s26, 1
      %p196 = por %p194, %p195
      %p197 = scmp.ne.s32.totalorder %s188, %s189
      %p198 = scmp.eq.s32.totalorder %s26, 0
      %p199 = por %p197, %p198
      %p200 = scmp.ne.s32.totalorder %s188, %s189
      %p201 = scmp.eq.s32.totalorder %s27, 1
      %p202 = por %p200, %p201
      %p204 = scmp.ne.s32.totalorder %s189, %s203
      %p205 = scmp.eq.s32.totalorder %s27, 0
      %p206 = por %p204, %p205
      %s208 = sadd.s32 %s207, 1
      %p211 = scmp.eq.s32.totalorder %s21, 1
      %p212 = scmp.ne.s32.totalorder %s207, %s209
      %p213 = scmp.eq.s32.totalorder %s21, 0
      %p214 = por %p212, %p213
      %p215 = scmp.ne.s32.totalorder %s207, %s209
      %p216 = scmp.eq.s32.totalorder %s26, 1
      %p217 = por %p215, %p216
      %p218 = scmp.ne.s32.totalorder %s209, %s210
      %p219 = scmp.eq.s32.totalorder %s26, 0
      %p220 = por %p218, %p219
      %p221 = scmp.ne.s32.totalorder %s209, %s210
      %p222 = scmp.eq.s32.totalorder %s27, 1
      %p223 = por %p221, %p222
      %p225 = scmp.ne.s32.totalorder %s210, %s224
      %p226 = scmp.eq.s32.totalorder %s27, 0
      %p227 = por %p225, %p226
      %s229 = sadd.s32 %s228, 1
      %p232 = scmp.eq.s32.totalorder %s21, 1
      %p233 = scmp.ne.s32.totalorder %s228, %s230
      %p234 = scmp.eq.s32.totalorder %s21, 0
      %p235 = por %p233, %p234
      %p236 = scmp.ne.s32.totalorder %s228, %s230
      %p237 = scmp.eq.s32.totalorder %s26, 1
      %p238 = por %p236, %p237
      %p239 = scmp.ne.s32.totalorder %s230, %s231
      %p240 = scmp.eq.s32.totalorder %s26, 0
      %p241 = por %p239, %p240
      %p242 = scmp.ne.s32.totalorder %s230, %s231
      %p243 = scmp.eq.s32.totalorder %s27, 1
      %p244 = por %p242, %p243
      %p246 = scmp.ne.s32.totalorder %s231, %s245
      %p247 = scmp.eq.s32.totalorder %s27, 0
      %p248 = por %p246, %p247
      %s250 = sadd.s32 %s249, 1
      %p253 = scmp.eq.s32.totalorder %s21, 1
      %p254 = scmp.ne.s32.totalorder %s249, %s251
      %p255 = scmp.eq.s32.totalorder %s21, 0
      %p256 = por %p254, %p255
      %p257 = scmp.ne.s32.totalorder %s249, %s251
      %p258 = scmp.eq.s32.totalorder %s26, 1
      %p259 = por %p257, %p258
      %p260 = scmp.ne.s32.totalorder %s251, %s252
      %p261 = scmp.eq.s32.totalorder %s26, 0
      %p262 = por %p260, %p261
      %p263 = scmp.ne.s32.totalorder %s251, %s252
      %p264 = scmp.eq.s32.totalorder %s27, 1
      %p265 = por %p263, %p264
      %p267 = scmp.ne.s32.totalorder %s252, %s266
      %p268 = scmp.eq.s32.totalorder %s27, 0
      %p269 = por %p267, %p268
      %s271 = sadd.s32 %s270, 1
      %p274 = scmp.eq.s32.totalorder %s21, 1
      %p275 = scmp.ne.s32.totalorder %s270, %s272
      %p276 = scmp.eq.s32.totalorder %s21, 0
      %p277 = por %p275, %p276
      %p278 = scmp.ne.s32.totalorder %s270, %s272
      %p279 = scmp.eq.s32.totalorder %s26, 1
      %p280 = por %p278, %p279
      %p281 = scmp.ne.s32.totalorder %s272, %s273
      %p282 = scmp.eq.s32.totalorder %s26, 0
      %p283 = por %p281, %p282
      %p284 = scmp.ne.s32.totalorder %s272, %s273
      %p285 = scmp.eq.s32.totalorder %s27, 1
      %p286 = por %p284, %p285
      %p288 = scmp.ne.s32.totalorder %s273, %s287
      %p289 = scmp.eq.s32.totalorder %s27, 0
      %p290 = por %p288, %p289
      %s291 = ssub.s32 %s21, %s28
      %p292 = scmp.eq.s32.totalorder %s291, 0
      %s294 = sadd.s32 %s293, 1
      %s295 = scalar_select %p292, %s293, %s294
      %p298 = pneg %p292
      %p299 = scmp.eq.s32.totalorder %s21, 1
      %p300 = por %p298, %p299
      %p301 = scmp.ne.s32.totalorder %s293, %s296
      %p302 = scmp.eq.s32.totalorder %s21, 0
      %p303 = por %p301, %p302
      %p304 = scmp.ne.s32.totalorder %s293, %s296
      %p305 = scmp.eq.s32.totalorder %s26, 1
      %p306 = por %p304, %p305
      %p307 = scmp.ne.s32.totalorder %s296, %s297
      %p308 = scmp.eq.s32.totalorder %s26, 0
      %p309 = por %p307, %p308
      %p310 = scmp.ne.s32.totalorder %s296, %s297
      %p311 = scmp.eq.s32.totalorder %s27, 1
      %p312 = por %p310, %p311
      %p314 = scmp.ne.s32.totalorder %s297, %s313
      %p315 = scmp.eq.s32.totalorder %s27, 0
      %p316 = por %p314, %p315
      %p317 = scmp.le.s32.totalorder 1, %s21
      %p318 = scmp.lt.s32.totalorder %s21, 3
      %p319 = pnand %p317, %p318
      %p320 = pneg %p319
      // Predicated region
      $region9: #{tpu_custom_call.1} parent=5 // pred_check
        _
      $region10: #{tpu_custom_call.1} parent=5 // pred_check_branch
        %322 = sbr.rel (%p319) target = $region12
      $region11: #{tpu_custom_call.1} parent=5 // pred_region
        %s323 = ssub.s32 %s21, 1
        // Predicated region
        $region13: #{tpu_custom_call.1} parent=11 // pred_check
          %p324 = pneg %p94
        $region14: #{tpu_custom_call.1} parent=11 // pred_check_branch
          %326 = sbr.rel (%p324) target = $region16
        $region15: #{tpu_custom_call.1} parent=11 // pred_region
          _
        $region16: #{tpu_custom_call.1} parent=11 // pred_fallthru
          _
        // Predicated region
        $region17: #{tpu_custom_call.1} parent=11 // pred_check
          %p327 = pneg %p115
        $region18: #{tpu_custom_call.1} parent=11 // pred_check_branch
          %329 = sbr.rel (%p327) target = $region20
        $region19: #{tpu_custom_call.1} parent=11 // pred_region
          _
        $region20: #{tpu_custom_call.1} parent=11 // pred_fallthru
          _
        // Predicated region
        $region21: #{tpu_custom_call.1} parent=11 // pred_check
          %p330 = pneg %p136
        $region22: #{tpu_custom_call.1} parent=11 // pred_check_branch
          %332 = sbr.rel (%p330) target = $region24
        $region23: #{tpu_custom_call.1} parent=11 // pred_region
          _
        $region24: #{tpu_custom_call.1} parent=11 // pred_fallthru
          _
        // Predicated region
        $region25: #{tpu_custom_call.1} parent=11 // pred_check
          %p333 = pneg %p157
        $region26: #{tpu_custom_call.1} parent=11 // pred_check_branch
          %335 = sbr.rel (%p333) target = $region28
        $region27: #{tpu_custom_call.1} parent=11 // pred_region
          _
        $region28: #{tpu_custom_call.1} parent=11 // pred_fallthru
          _
        // Predicated region
        $region29: #{tpu_custom_call.1} parent=11 // pred_check
          %p336 = pneg %p178
        $region30: #{tpu_custom_call.1} parent=11 // pred_check_branch
          %338 = sbr.rel (%p336) target = $region32
        $region31: #{tpu_custom_call.1} parent=11 // pred_region
          _
        $region32: #{tpu_custom_call.1} parent=11 // pred_fallthru
          _
        // Predicated region
        $region33: #{tpu_custom_call.1} parent=11 // pred_check
          %p339 = pneg %p199
        $region34: #{tpu_custom_call.1} parent=11 // pred_check_branch
          %341 = sbr.rel (%p339) target = $region36
        $region35: #{tpu_custom_call.1} parent=11 // pred_region
          _
        $region36: #{tpu_custom_call.1} parent=11 // pred_fallthru
          _
        // Predicated region
        $region37: #{tpu_custom_call.1} parent=11 // pred_check
          %p342 = pneg %p220
        $region38: #{tpu_custom_call.1} parent=11 // pred_check_branch
          %344 = sbr.rel (%p342) target = $region40
        $region39: #{tpu_custom_call.1} parent=11 // pred_region
          _
        $region40: #{tpu_custom_call.1} parent=11 // pred_fallthru
          _
        // Predicated region
        $region41: #{tpu_custom_call.1} parent=11 // pred_check
          %p345 = pneg %p241
        $region42: #{tpu_custom_call.1} parent=11 // pred_check_branch
          %347 = sbr.rel (%p345) target = $region44
        $region43: #{tpu_custom_call.1} parent=11 // pred_region
          _
        $region44: #{tpu_custom_call.1} parent=11 // pred_fallthru
          _
        // Predicated region
        $region45: #{tpu_custom_call.1} parent=11 // pred_check
          %p348 = pneg %p262
        $region46: #{tpu_custom_call.1} parent=11 // pred_check_branch
          %350 = sbr.rel (%p348) target = $region48
        $region47: #{tpu_custom_call.1} parent=11 // pred_region
          _
        $region48: #{tpu_custom_call.1} parent=11 // pred_fallthru
          _
        // Predicated region
        $region49: #{tpu_custom_call.1} parent=11 // pred_check
          %p351 = pneg %p283
        $region50: #{tpu_custom_call.1} parent=11 // pred_check_branch
          %353 = sbr.rel (%p351) target = $region52
        $region51: #{tpu_custom_call.1} parent=11 // pred_region
          _
        $region52: #{tpu_custom_call.1} parent=11 // pred_fallthru
          _
      $region12: #{tpu_custom_call.1} parent=5 // pred_fallthru
        _
      %p354 = scmp.lt.s32.totalorder %s21, 2
      // Predicated region
      $region53: #{tpu_custom_call.1} parent=5 // pred_check
        %p355 = pneg %p354
      $region54: #{tpu_custom_call.1} parent=5 // pred_check_branch
        %357 = sbr.rel (%p355) target = $region56
      $region55: #{tpu_custom_call.1} parent=5 // pred_region
        // Predicated region
        $region57: #{tpu_custom_call.1} parent=55 // pred_check
          %p358 = pneg %p41
        $region58: #{tpu_custom_call.1} parent=55 // pred_check_branch
          %360 = sbr.rel (%p358) target = $region60
        $region59: #{tpu_custom_call.1} parent=55 // pred_region
          %p361 = scmp.lt.s32.totalorder %s21, 1
          %s362 = scalar_select %p361, %s21, 1
          %s363 = smul.addr %s362, 8
          %s364 = scalar_lea.vmem %s0, %s363
        $region60: #{tpu_custom_call.1} parent=55 // pred_fallthru
          _
        // Predicated region
        $region61: #{tpu_custom_call.1} parent=55 // pred_check
          %p365 = pneg %p67
        $region62: #{tpu_custom_call.1} parent=55 // pred_check_branch
          %367 = sbr.rel (%p365) target = $region64
        $region63: #{tpu_custom_call.1} parent=55 // pred_region
          %p368 = scmp.lt.s32.totalorder %s21, 1
          %s369 = scalar_select %p368, %s21, 1
          %s370 = smul.addr %s369, 8
          %s371 = scalar_lea.vmem %s1, %s370
        $region64: #{tpu_custom_call.1} parent=55 // pred_fallthru
          _
      $region56: #{tpu_custom_call.1} parent=5 // pred_fallthru
        _
      %p372 = scmp.le.s32.totalorder 1, %s21
      %p373 = scmp.lt.s32.totalorder %s21, 3
      %p374 = pnand %p372, %p373
      %p375 = pneg %p374
      // Predicated region
      $region65: #{tpu_custom_call.1} parent=5 // pred_check
        _
      $region66: #{tpu_custom_call.1} parent=5 // pred_check_branch
        %377 = sbr.rel (%p374) target = $region68
      $region67: #{tpu_custom_call.1} parent=5 // pred_region
        %s378 = ssub.s32 %s21, 1
        %p379 = scmp.lt.s32.totalorder %s26, 1
        %s380 = scalar_select %p379, %s26, 1
        %s381 = smul.addr %s380, 8
        %s382 = scalar_lea.vmem %s0, %s381
        %p383 = pneg %p47
        %p384 = pneg %p44
        %p385 = scmp.lt.s32.totalorder %s26, 1
        %s386 = scalar_select %p385, %s26, 1
        %s387 = smul.addr %s386, 8
        %s388 = scalar_lea.vmem %s1, %s387
        %p389 = pneg %p73
        %p390 = pneg %p70
        %p391 = pneg %p94
        %p392 = pneg %p91
        %p393 = pneg %p115
        %p394 = pneg %p112
        %p395 = pneg %p136
        %p396 = pneg %p133
        %p397 = pneg %p157
        %p398 = pneg %p154
        %p399 = pneg %p178
        %p400 = pneg %p175
        %p401 = pneg %p199
        %p402 = pneg %p196
        %p403 = pneg %p220
        %p404 = pneg %p217
        %p405 = pneg %p241
        %p406 = pneg %p238
        %p407 = pneg %p262
        %p408 = pneg %p259
        %p409 = pneg %p283
        %p410 = pneg %p280
        %p411 = pneg %p309
        %p412 = pneg %p306
        %s413 = sand.u32 %s296, 1
        %s414 = scalar_lea.sflag [#allocation3], %s413
        %s415 = sand.u32 %s296, 1
        %s416 = smul.addr %s415, 8
        %s417 = scalar_lea.vmem [#allocation2], %s416
        %p418 = scmp.lt.s32.totalorder %s26, 1
        %s419 = scalar_select %p418, %s26, 1
        %s420 = smul.addr %s419, 8
        %s421 = scalar_lea.vmem %s0, %s420
        %p422 = scmp.lt.s32.totalorder %s26, 1
        %s423 = scalar_select %p422, %s26, 1
        %s424 = smul.addr %s423, 8
        %s425 = scalar_lea.vmem %s1, %s424
        %v427 = vld [vmem:[%s421] sm:$0xff]
        %v428 = vpack.c.bf16 %v427, %v427
        %v429 = vld [vmem:[%s2] sm:$0xf]
        %v430 = vld [vmem:[%s2 + $0x4] sm:$0xf]
        %v431 = vld [vmem:[%s2 + $0x8] sm:$0xf]
        %v432 = vld [vmem:[%s2 + $0xc] sm:$0xf]
        %v433 = vld [vmem:[%s2 + $0x10] sm:$0xf]
        %v434 = vld [vmem:[%s2 + $0x14] sm:$0xf]
        %v435 = vld [vmem:[%s2 + $0x18] sm:$0xf]
        %v436 = vld [vmem:[%s2 + $0x1c] sm:$0xf]
        %v437 = vld [vmem:[%s2 + $0x20] sm:$0xf]
        %v438 = vld [vmem:[%s2 + $0x24] sm:$0xf]
        %v439 = vld [vmem:[%s2 + $0x28] sm:$0xf]
        %v440 = vld [vmem:[%s2 + $0x2c] sm:$0xf]
        %v453 = vunpack.c.l.b16 %v429
        %v454 = vunpack.c.l.b16 %v430
        %v455 = vunpack.c.l.b16 %v431
        %v456 = vunpack.c.l.b16 %v432
        %v457 = vunpack.c.l.b16 %v433
        %v458 = vunpack.c.l.b16 %v434
        %v459 = vunpack.c.l.b16 %v435
        %v460 = vunpack.c.l.b16 %v436
        %v461 = vunpack.c.l.b16 %v437
        %v462 = vunpack.c.l.b16 %v438
        %v463 = vunpack.c.l.b16 %v439
        %v464 = vunpack.c.l.b16 %v440
        %v465 = vpack.c.b16 %v454, %v453
        %v466 = vpack.c.b16 %v456, %v455
        %v467 = vpack.c.b16 %v458, %v457
        %v468 = vpack.c.b16 %v460, %v459
        %v469 = vpack.c.b16 %v462, %v461
        %v470 = vpack.c.b16 %v464, %v463
        %vm471 = vcmask 261120
        %v473 = vsel %vm471, %v465, 0
        %v476 = vsel %vm471, %v466, 0
        %v479 = vsel %vm471, %v467, 0
        %v482 = vsel %vm471, %v468, 0
        %v485 = vsel %vm471, %v469, 0
        %v488 = vsel %vm471, %v470, 0
        %v491 = vsel %vm471, %v428, 0
        %493 = vmatprep.subr.bf16.mxu0 0
        %494 = vmatpush1.bf16.xpose.msra.mxu0 %v491
        %495 = vmatprep.subr.bf16.mxu0 0
        %496 = vmatpush1.bf16.xpose.msra.mxu0 0
        %497 = vmatprep.subr.bf16.mxu0 0
        %498 = vmatpush1.bf16.xpose.msra.mxu0 0
        %499 = vmatprep.subr.bf16.mxu0 0
        %500 = vmatpush1.bf16.xpose.msra.mxu0 0
        %501 = vmatprep.subr.bf16.mxu0 0
        %502 = vmatpush1.bf16.xpose.msra.mxu0 0
        %503 = vmatprep.subr.bf16.mxu0 0
        %504 = vmatpush1.bf16.xpose.msra.mxu0 0
        %505 = vmatprep.subr.bf16.mxu0 0
        %506 = vmatpush1.bf16.xpose.msra.mxu0 0
        %507 = vmatprep.subr.bf16.mxu0 0
        %508 = vmatpush1.bf16.xpose.msra.mxu0 0
        %509 = vmatprep.subr.bf16.mxu0 0
        %510 = vmatpush1.bf16.xpose.msra.mxu0 0
        %511 = vmatprep.subr.bf16.mxu0 0
        %512 = vmatpush1.bf16.xpose.msra.mxu0 0
        %513 = vmatprep.subr.bf16.mxu0 0
        %514 = vmatpush1.bf16.xpose.msra.mxu0 0
        %515 = vmatprep.subr.bf16.mxu0 0
        %516 = vmatpush1.bf16.xpose.msra.mxu0 0
        %517 = vmatprep.subr.bf16.mxu0 0
        %518 = vmatpush1.bf16.xpose.msra.mxu0 0
        %519 = vmatprep.subr.bf16.mxu0 0
        %520 = vmatpush1.bf16.xpose.msra.mxu0 0
        %521 = vmatprep.subr.bf16.mxu0 0
        %522 = vmatpush1.bf16.xpose.msra.mxu0 0
        %523 = vmatprep.subr.bf16.mxu0 0
        %524 = vmatpush1.bf16.xpose.msra.mxu0 0
        %525 = vmatprep.mubr.bf16.mxu0 0
        %526 = vmatmul.mubr.bf16.gmra.mrb[0].mxu0 %v473
        %v527 = vpop.f32.mrb[0].mxu0
        %v528 = vadd.f32 0.0, %v527
        %v529 = vpop.f32.mrb[0].mxu0
        %v530 = vpop.f32.mrb[0].mxu0
        %v531 = vadd.f32 0.0, %v530
        %v532 = vpop.f32.mrb[0].mxu0
        %533 = vmatprep.mubr.bf16.mxu0 0
        %534 = vmatmul.mubr.bf16.gmra.mrb[0].mxu0 %v476
        %v535 = vpop.f32.mrb[0].mxu0
        %v536 = vadd.f32 0.0, %v535
        %v537 = vpop.f32.mrb[0].mxu0
        %v538 = vpop.f32.mrb[0].mxu0
        %v539 = vadd.f32 0.0, %v538
        %v540 = vpop.f32.mrb[0].mxu0
        %541 = vmatprep.mubr.bf16.mxu0 0
        %542 = vmatmul.mubr.bf16.gmra.mrb[0].mxu0 %v479
        %v543 = vpop.f32.mrb[0].mxu0
        %v544 = vadd.f32 0.0, %v543
        %v545 = vpop.f32.mrb[0].mxu0
        %v546 = vpop.f32.mrb[0].mxu0
        %v547 = vadd.f32 0.0, %v546
        %v548 = vpop.f32.mrb[0].mxu0
        %549 = vmatprep.mubr.bf16.mxu0 0
        %550 = vmatmul.mubr.bf16.gmra.mrb[0].mxu0 %v482
        %v551 = vpop.f32.mrb[0].mxu0
        %v552 = vadd.f32 0.0, %v551
        %v553 = vpop.f32.mrb[0].mxu0
        %v554 = vpop.f32.mrb[0].mxu0
        %v555 = vadd.f32 0.0, %v554
        %v556 = vpop.f32.mrb[0].mxu0
        %557 = vmatprep.mubr.bf16.mxu0 0
        %558 = vmatmul.mubr.bf16.gmra.mrb[0].mxu0 %v485
        %v559 = vpop.f32.mrb[0].mxu0
        %v560 = vadd.f32 0.0, %v559
        %v561 = vpop.f32.mrb[0].mxu0
        %v562 = vpop.f32.mrb[0].mxu0
        %v563 = vadd.f32 0.0, %v562
        %v564 = vpop.f32.mrb[0].mxu0
        %565 = vmatprep.mubr.bf16.mxu0 0
        %566 = vmatmul.mubr.bf16.gmra.mrb[0].mxu0 %v488
        %v567 = vpop.f32.mrb[0].mxu0
        %v568 = vadd.f32 0.0, %v567
        %v569 = vpop.f32.mrb[0].mxu0
        %v570 = vpop.f32.mrb[0].mxu0
        %v571 = vadd.f32 0.0, %v570
        %v572 = vpop.f32.mrb[0].mxu0
        %573 = vdwg.mxu0
        %v574 = vpack.c.bf16 %v531, %v528
        %v575 = vpack.c.bf16 %v539, %v536
        %v576 = vpack.c.bf16 %v547, %v544
        %v577 = vpack.c.bf16 %v555, %v552
        %v578 = vpack.c.bf16 %v563, %v560
        %v579 = vpack.c.bf16 %v571, %v568
        %v580 = vld [vmem:[%s425] sm:$0x1]
        %vm581 = vcmp.eq.f32.partialorder %v580, 0.0
        %v582 = vsel %vm581, -1e+30, 0.0
        %v583 = vlaneseq
        %v584 = vshrl.u32 %v583, 7
        %v585 = vsub.s32 0, %v584
        %v586 = vrot.slane %v582, %v585
        %587 = vxpose.xlu0.c.b16.start [1/8] %v574, 128
        %588 = vxpose.xlu0.c.b16.cont [2/8] 0, 128
        %589 = vxpose.xlu0.c.b16.cont [3/8] 0, 128
        %590 = vxpose.xlu0.c.b16.cont [4/8] 0, 128
        %591 = vxpose.xlu0.c.b16.cont [5/8] 0, 128
        %592 = vxpose.xlu0.c.b16.cont [6/8] 0, 128
        %593 = vxpose.xlu0.c.b16.cont [7/8] 0, 128
        %594 = vxpose.xlu0.c.b16.end [8/8] 0, 128
        %v595 = vpop.trf.xlu0
        %v596 = vpop.trf.xlu0
        %v597 = vpop.trf.xlu0
        %v598 = vpop.trf.xlu0
        %v599 = vpop.trf.xlu0
        %v600 = vpop.trf.xlu0
        %v601 = vpop.trf.xlu0
        %v602 = vpop.trf.xlu0
        %vm603 = vcmask 64512
        %v605 = vsel %vm603, %v595, 0
        %vm607 = vcmask 1043456
        %v609 = vsel %vm607, %v576, 0
        %611 = vmatprep.subr.bf16.mxu0 0
        %612 = vmatpush1.bf16.msra.mxu0 %v609
        %613 = vmatprep.subr.bf16.mxu0 0
        %614 = vmatpush1.bf16.msra.mxu0 0
        %615 = vmatprep.subr.bf16.mxu0 0
        %616 = vmatpush1.bf16.msra.mxu0 0
        %617 = vmatprep.subr.bf16.mxu0 0
        %618 = vmatpush1.bf16.msra.mxu0 0
        %619 = vmatprep.subr.bf16.mxu0 0
        %620 = vmatpush1.bf16.msra.mxu0 0
        %621 = vmatprep.subr.bf16.mxu0 0
        %622 = vmatpush1.bf16.msra.mxu0 0
        %623 = vmatprep.subr.bf16.mxu0 0
        %624 = vmatpush1.bf16.msra.mxu0 0
        %625 = vmatprep.subr.bf16.mxu0 0
        %626 = vmatpush1.bf16.msra.mxu0 0
        %627 = vmatprep.subr.bf16.mxu0 0
        %628 = vmatpush1.bf16.msra.mxu0 0
        %629 = vmatprep.subr.bf16.mxu0 0
        %630 = vmatpush1.bf16.msra.mxu0 0
        %631 = vmatprep.subr.bf16.mxu0 0
        %632 = vmatpush1.bf16.msra.mxu0 0
        %633 = vmatprep.subr.bf16.mxu0 0
        %634 = vmatpush1.bf16.msra.mxu0 0
        %635 = vmatprep.subr.bf16.mxu0 0
        %636 = vmatpush1.bf16.msra.mxu0 0
        %637 = vmatprep.subr.bf16.mxu0 0
        %638 = vmatpush1.bf16.msra.mxu0 0
        %639 = vmatprep.subr.bf16.mxu0 0
        %640 = vmatpush1.bf16.msra.mxu0 0
        %641 = vmatprep.subr.bf16.mxu0 0
        %642 = vmatpush1.bf16.msra.mxu0 0
        %643 = vmatprep.mubr.bf16.mxu0 0
        %644 = vmatmul.mubr.bf16.gmra.mrb[0].mxu0 %v605
        %v645 = vpop.f32.mrb[0].mxu0
        %v646 = vadd.f32 %v586, %v645
        %v647 = vpop.f32.mrb[0].mxu0
        %v648 = vpop.f32.mrb[0].mxu0
        %v649 = vpop.f32.mrb[0].mxu0
        %650 = vdwg.mxu0
        %v651 = vsel %vm603, %v646, -inf
        %652 = vmax.xlane.f32.xlu0 %v651
        %v653 = vpop.xlane.xlu0 %652
        %v654 = vsub.f32 %v646, %v653
        %v655 = vmul.f32 %v654, 1.442695
        %v656 = vpow.pop %v655
        %v657 = vsel %vm603, %v656, 0.0
        %658 = vadd.xlane.f32.xlu0 %v657
        %v659 = vpop.xlane.xlu0 %658
        %v660 = vrcp.pop %v659
        %v661 = vmul.f32 %v656, %v660
        %v662 = vpack.c.bf16 %v661, %v661
        %v664 = vsel %vm603, %v662, 0
        %v667 = vsel %vm603, %v578, 0
        %669 = vmatprep.subr.bf16.mxu0 0
        %670 = vmatpush1.bf16.xpose.msra.mxu0 %v667
        %671 = vmatprep.subr.bf16.mxu0 0
        %672 = vmatpush1.bf16.xpose.msra.mxu0 0
        %673 = vmatprep.subr.bf16.mxu0 0
        %674 = vmatpush1.bf16.xpose.msra.mxu0 0
        %675 = vmatprep.subr.bf16.mxu0 0
        %676 = vmatpush1.bf16.xpose.msra.mxu0 0
        %677 = vmatprep.subr.bf16.mxu0 0
        %678 = vmatpush1.bf16.xpose.msra.mxu0 0
        %679 = vmatprep.subr.bf16.mxu0 0
        %680 = vmatpush1.bf16.xpose.msra.mxu0 0
        %681 = vmatprep.subr.bf16.mxu0 0
        %682 = vmatpush1.bf16.xpose.msra.mxu0 0
        %683 = vmatprep.subr.bf16.mxu0 0
        %684 = vmatpush1.bf16.xpose.msra.mxu0 0
        %685 = vmatprep.subr.bf16.mxu0 0
        %686 = vmatpush1.bf16.xpose.msra.mxu0 0
        %687 = vmatprep.subr.bf16.mxu0 0
        %688 = vmatpush1.bf16.xpose.msra.mxu0 0
        %689 = vmatprep.subr.bf16.mxu0 0
        %690 = vmatpush1.bf16.xpose.msra.mxu0 0
        %691 = vmatprep.subr.bf16.mxu0 0
        %692 = vmatpush1.bf16.xpose.msra.mxu0 0
        %693 = vmatprep.subr.bf16.mxu0 0
        %694 = vmatpush1.bf16.xpose.msra.mxu0 0
        %695 = vmatprep.subr.bf16.mxu0 0
        %696 = vmatpush1.bf16.xpose.msra.mxu0 0
        %697 = vmatprep.subr.bf16.mxu0 0
        %698 = vmatpush1.bf16.xpose.msra.mxu0 0
        %699 = vmatprep.subr.bf16.mxu0 0
        %700 = vmatpush1.bf16.xpose.msra.mxu0 0
        %701 = vmatprep.mubr.bf16.mxu0 0
        %702 = vmatmul.mubr.bf16.gmra.mrb[0].mxu0 %v664
        %v703 = vpop.f32.mrb[0].mxu0
        %v704 = vadd.f32 0.0, %v703
        %v705 = vpop.f32.mrb[0].mxu0
        %v706 = vpop.f32.mrb[0].mxu0
        %v707 = vpop.f32.mrb[0].mxu0
        %708 = vdwg.mxu0
        %v709 = vpack.c.bf16 %v704, %v704
        %v710 = vld [vmem:[%s3] sm:$0xf]
        %v712 = vrot.slane %v574, 4
        %714 = vxpose.xlu0.c.b16.start [1/8] %v712, 128
        %715 = vxpose.xlu0.c.b16.cont [2/8] 0, 128
        %716 = vxpose.xlu0.c.b16.cont [3/8] 0, 128
        %717 = vxpose.xlu0.c.b16.cont [4/8] 0, 128
        %718 = vxpose.xlu0.c.b16.cont [5/8] 0, 128
        %719 = vxpose.xlu0.c.b16.cont [6/8] 0, 128
        %720 = vxpose.xlu0.c.b16.cont [7/8] 0, 128
        %721 = vxpose.xlu0.c.b16.end [8/8] 0, 128
        %v722 = vpop.trf.xlu0
        %v723 = vpop.trf.xlu0
        %v724 = vpop.trf.xlu0
        %v725 = vpop.trf.xlu0
        %v726 = vpop.trf.xlu0
        %v727 = vpop.trf.xlu0
        %v728 = vpop.trf.xlu0
        %v729 = vpop.trf.xlu0
        %v731 = vrot.slane %v576, 4
        %v733 = vsel %vm603, %v722, 0
        %v736 = vsel %vm607, %v731, 0
        %738 = vmatprep.subr.bf16.mxu0 0
        %739 = vmatpush1.bf16.msra.mxu0 %v736
        %740 = vmatprep.subr.bf16.mxu0 0
        %741 = vmatpush1.bf16.msra.mxu0 0
        %742 = vmatprep.subr.bf16.mxu0 0
        %743 = vmatpush1.bf16.msra.mxu0 0
        %744 = vmatprep.subr.bf16.mxu0 0
        %745 = vmatpush1.bf16.msra.mxu0 0
        %746 = vmatprep.subr.bf16.mxu0 0
        %747 = vmatpush1.bf16.msra.mxu0 0
        %748 = vmatprep.subr.bf16.mxu0 0
        %749 = vmatpush1.bf16.msra.mxu0 0
        %750 = vmatprep.subr.bf16.mxu0 0
        %751 = vmatpush1.bf16.msra.mxu0 0
        %752 = vmatprep.subr.bf16.mxu0 0
        %753 = vmatpush1.bf16.msra.mxu0 0
        %754 = vmatprep.subr.bf16.mxu0 0
        %755 = vmatpush1.bf16.msra.mxu0 0
        %756 = vmatprep.subr.bf16.mxu0 0
        %757 = vmatpush1.bf16.msra.mxu0 0
        %758 = vmatprep.subr.bf16.mxu0 0
        %759 = vmatpush1.bf16.msra.mxu0 0
        %760 = vmatprep.subr.bf16.mxu0 0
        %761 = vmatpush1.bf16.msra.mxu0 0
        %762 = vmatprep.subr.bf16.mxu0 0
        %763 = vmatpush1.bf16.msra.mxu0 0
        %764 = vmatprep.subr.bf16.mxu0 0
        %765 = vmatpush1.bf16.msra.mxu0 0
        %766 = vmatprep.subr.bf16.mxu0 0
        %767 = vmatpush1.bf16.msra.mxu0 0
        %768 = vmatprep.subr.bf16.mxu0 0
        %769 = vmatpush1.bf16.msra.mxu0 0
        %770 = vmatprep.mubr.bf16.mxu0 0
        %771 = vmatmul.mubr.bf16.gmra.mrb[0].mxu0 %v733
        %v772 = vpop.f32.mrb[0].mxu0
        %v773 = vadd.f32 %v586, %v772
        %v774 = vpop.f32.mrb[0].mxu0
        %v775 = vpop.f32.mrb[0].mxu0
        %v776 = vpop.f32.mrb[0].mxu0
        %777 = vdwg.mxu0
        %v778 = vsel %vm603, %v773, -inf
        %779 = vmax.xlane.f32.xlu0 %v778
        %v780 = vpop.xlane.xlu0 %779
        %v781 = vsub.f32 %v773, %v780
        %v782 = vmul.f32 %v781, 1.442695
        %v783 = vpow.pop %v782
        %v784 = vsel %vm603, %v783, 0.0
        %785 = vadd.xlane.f32.xlu0 %v784
        %v786 = vpop.xlane.xlu0 %785
        %v787 = vrcp.pop %v786
        %v788 = vmul.f32 %v783, %v787
        %v789 = vpack.c.bf16 %v788, %v788
        %v791 = vrot.slane %v578, 4
        %v793 = vsel %vm603, %v789, 0
        %v796 = vsel %vm603, %v791, 0
        %798 = vmatprep.subr.bf16.mxu0 0
        %799 = vmatpush1.bf16.xpose.msra.mxu0 %v796
        %800 = vmatprep.subr.bf16.mxu0 0
        %801 = vmatpush1.bf16.xpose.msra.mxu0 0
        %802 = vmatprep.subr.bf16.mxu0 0
        %803 = vmatpush1.bf16.xpose.msra.mxu0 0
        %804 = vmatprep.subr.bf16.mxu0 0
        %805 = vmatpush1.bf16.xpose.msra.mxu0 0
        %806 = vmatprep.subr.bf16.mxu0 0
        %807 = vmatpush1.bf16.xpose.msra.mxu0 0
        %808 = vmatprep.subr.bf16.mxu0 0
        %809 = vmatpush1.bf16.xpose.msra.mxu0 0
        %810 = vmatprep.subr.bf16.mxu0 0
        %811 = vmatpush1.bf16.xpose.msra.mxu0 0
        %812 = vmatprep.subr.bf16.mxu0 0
        %813 = vmatpush1.bf16.xpose.msra.mxu0 0
        %814 = vmatprep.subr.bf16.mxu0 0
        %815 = vmatpush1.bf16.xpose.msra.mxu0 0
        %816 = vmatprep.subr.bf16.mxu0 0
        %817 = vmatpush1.bf16.xpose.msra.mxu0 0
        %818 = vmatprep.subr.bf16.mxu0 0
        %819 = vmatpush1.bf16.xpose.msra.mxu0 0
        %820 = vmatprep.subr.bf16.mxu0 0
        %821 = vmatpush1.bf16.xpose.msra.mxu0 0
        %822 = vmatprep.subr.bf16.mxu0 0
        %823 = vmatpush1.bf16.xpose.msra.mxu0 0
        %824 = vmatprep.subr.bf16.mxu0 0
        %825 = vmatpush1.bf16.xpose.msra.mxu0 0
        %826 = vmatprep.subr.bf16.mxu0 0
        %827 = vmatpush1.bf16.xpose.msra.mxu0 0
        %828 = vmatprep.subr.bf16.mxu0 0
        %829 = vmatpush1.bf16.xpose.msra.mxu0 0
        %830 = vmatprep.mubr.bf16.mxu0 0
        %831 = vmatmul.mubr.bf16.gmra.mrb[0].mxu0 %v793
        %v832 = vpop.f32.mrb[0].mxu0
        %v833 = vadd.f32 0.0, %v832
        %v834 = vpop.f32.mrb[0].mxu0
        %v835 = vpop.f32.mrb[0].mxu0
        %v836 = vpop.f32.mrb[0].mxu0
        %837 = vdwg.mxu0
        %v838 = vpack.c.bf16 %v833, %v833
        %v839 = vld [vmem:[%s3 + $0x4] sm:$0xf]
        %v841 = vsel %vm603, %v838, 0
        %v844 = vsel %vm607, %v839, 0
        %846 = vmatprep.subr.bf16.mxu0 0
        %847 = vmatpush1.bf16.msra.mxu0 %v844
        %848 = vmatprep.subr.bf16.mxu0 0
        %849 = vmatpush1.bf16.msra.mxu0 0
        %850 = vmatprep.subr.bf16.mxu0 0
        %851 = vmatpush1.bf16.msra.mxu0 0
        %852 = vmatprep.subr.bf16.mxu0 0
        %853 = vmatpush1.bf16.msra.mxu0 0
        %854 = vmatprep.subr.bf16.mxu0 0
        %855 = vmatpush1.bf16.msra.mxu0 0
        %856 = vmatprep.subr.bf16.mxu0 0
        %857 = vmatpush1.bf16.msra.mxu0 0
        %858 = vmatprep.subr.bf16.mxu0 0
        %859 = vmatpush1.bf16.msra.mxu0 0
        %860 = vmatprep.subr.bf16.mxu0 0
        %861 = vmatpush1.bf16.msra.mxu0 0
        %862 = vmatprep.subr.bf16.mxu0 0
        %863 = vmatpush1.bf16.msra.mxu0 0
        %864 = vmatprep.subr.bf16.mxu0 0
        %865 = vmatpush1.bf16.msra.mxu0 0
        %866 = vmatprep.subr.bf16.mxu0 0
        %867 = vmatpush1.bf16.msra.mxu0 0
        %868 = vmatprep.subr.bf16.mxu0 0
        %869 = vmatpush1.bf16.msra.mxu0 0
        %870 = vmatprep.subr.bf16.mxu0 0
        %871 = vmatpush1.bf16.msra.mxu0 0
        %872 = vmatprep.subr.bf16.mxu0 0
        %873 = vmatpush1.bf16.msra.mxu0 0
        %874 = vmatprep.subr.bf16.mxu0 0
        %875 = vmatpush1.bf16.msra.mxu0 0
        %876 = vmatprep.subr.bf16.mxu0 0
        %877 = vmatpush1.bf16.msra.mxu0 0
        %878 = vmatprep.mubr.bf16.mxu0 0
        %879 = vmatmul.mubr.bf16.gmra.mrb[0].mxu0 %v841
        %v880 = vpop.f32.mrb[0].mxu0
        %v881 = vadd.f32 0.0, %v880
        %v882 = vpop.f32.mrb[0].mxu0
        %v883 = vpop.f32.mrb[0].mxu0
        %v884 = vpop.f32.mrb[0].mxu0
        %885 = vdwg.mxu0
        %v887 = vsel %vm603, %v709, 0
        %v890 = vsel %vm607, %v710, 0
        %892 = vmatprep.subr.bf16.mxu0 0
        %893 = vmatpush1.bf16.msra.mxu0 %v890
        %894 = vmatprep.subr.bf16.mxu0 0
        %895 = vmatpush1.bf16.msra.mxu0 0
        %896 = vmatprep.subr.bf16.mxu0 0
        %897 = vmatpush1.bf16.msra.mxu0 0
        %898 = vmatprep.subr.bf16.mxu0 0
        %899 = vmatpush1.bf16.msra.mxu0 0
        %900 = vmatprep.subr.bf16.mxu0 0
        %901 = vmatpush1.bf16.msra.mxu0 0
        %902 = vmatprep.subr.bf16.mxu0 0
        %903 = vmatpush1.bf16.msra.mxu0 0
        %904 = vmatprep.subr.bf16.mxu0 0
        %905 = vmatpush1.bf16.msra.mxu0 0
        %906 = vmatprep.subr.bf16.mxu0 0
        %907 = vmatpush1.bf16.msra.mxu0 0
        %908 = vmatprep.subr.bf16.mxu0 0
        %909 = vmatpush1.bf16.msra.mxu0 0
        %910 = vmatprep.subr.bf16.mxu0 0
        %911 = vmatpush1.bf16.msra.mxu0 0
        %912 = vmatprep.subr.bf16.mxu0 0
        %913 = vmatpush1.bf16.msra.mxu0 0
        %914 = vmatprep.subr.bf16.mxu0 0
        %915 = vmatpush1.bf16.msra.mxu0 0
        %916 = vmatprep.subr.bf16.mxu0 0
        %917 = vmatpush1.bf16.msra.mxu0 0
        %918 = vmatprep.subr.bf16.mxu0 0
        %919 = vmatpush1.bf16.msra.mxu0 0
        %920 = vmatprep.subr.bf16.mxu0 0
        %921 = vmatpush1.bf16.msra.mxu0 0
        %922 = vmatprep.subr.bf16.mxu0 0
        %923 = vmatpush1.bf16.msra.mxu0 0
        %924 = vmatprep.mubr.bf16.mxu0 0
        %925 = vmatmul.mubr.bf16.gmra.mrb[0].mxu0 %v887
        %v926 = vpop.f32.mrb[0].mxu0
        %v927 = vadd.f32 %v881, %v926
        %v928 = vpop.f32.mrb[0].mxu0
        %v929 = vpop.f32.mrb[0].mxu0
        %v930 = vpop.f32.mrb[0].mxu0
        %931 = vdwg.mxu0
        %932 = vxpose.xlu0.c.b16.start [1/8] %v575, 128
        %933 = vxpose.xlu0.c.b16.cont [2/8] 0, 128
        %934 = vxpose.xlu0.c.b16.cont [3/8] 0, 128
        %935 = vxpose.xlu0.c.b16.cont [4/8] 0, 128
        %936 = vxpose.xlu0.c.b16.cont [5/8] 0, 128
        %937 = vxpose.xlu0.c.b16.cont [6/8] 0, 128
        %938 = vxpose.xlu0.c.b16.cont [7/8] 0, 128
        %939 = vxpose.xlu0.c.b16.end [8/8] 0, 128
        %v940 = vpop.trf.xlu0
        %v941 = vpop.trf.xlu0
        %v942 = vpop.trf.xlu0
        %v943 = vpop.trf.xlu0
        %v944 = vpop.trf.xlu0
        %v945 = vpop.trf.xlu0
        %v946 = vpop.trf.xlu0
        %v947 = vpop.trf.xlu0
        %v949 = vsel %vm603, %v940, 0
        %v952 = vsel %vm607, %v577, 0
        %954 = vmatprep.subr.bf16.mxu0 0
        %955 = vmatpush1.bf16.msra.mxu0 %v952
        %956 = vmatprep.subr.bf16.mxu0 0
        %957 = vmatpush1.bf16.msra.mxu0 0
        %958 = vmatprep.subr.bf16.mxu0 0
        %959 = vmatpush1.bf16.msra.mxu0 0
        %960 = vmatprep.subr.bf16.mxu0 0
        %961 = vmatpush1.bf16.msra.mxu0 0
        %962 = vmatprep.subr.bf16.mxu0 0
        %963 = vmatpush1.bf16.msra.mxu0 0
        %964 = vmatprep.subr.bf16.mxu0 0
        %965 = vmatpush1.bf16.msra.mxu0 0
        %966 = vmatprep.subr.bf16.mxu0 0
        %967 = vmatpush1.bf16.msra.mxu0 0
        %968 = vmatprep.subr.bf16.mxu0 0
        %969 = vmatpush1.bf16.msra.mxu0 0
        %970 = vmatprep.subr.bf16.mxu0 0
        %971 = vmatpush1.bf16.msra.mxu0 0
        %972 = vmatprep.subr.bf16.mxu0 0
        %973 = vmatpush1.bf16.msra.mxu0 0
        %974 = vmatprep.subr.bf16.mxu0 0
        %975 = vmatpush1.bf16.msra.mxu0 0
        %976 = vmatprep.subr.bf16.mxu0 0
        %977 = vmatpush1.bf16.msra.mxu0 0
        %978 = vmatprep.subr.bf16.mxu0 0
        %979 = vmatpush1.bf16.msra.mxu0 0
        %980 = vmatprep.subr.bf16.mxu0 0
        %981 = vmatpush1.bf16.msra.mxu0 0
        %982 = vmatprep.subr.bf16.mxu0 0
        %983 = vmatpush1.bf16.msra.mxu0 0
        %984 = vmatprep.subr.bf16.mxu0 0
        %985 = vmatpush1.bf16.msra.mxu0 0
        %986 = vmatprep.mubr.bf16.mxu0 0
        %987 = vmatmul.mubr.bf16.gmra.mrb[0].mxu0 %v949
        %v988 = vpop.f32.mrb[0].mxu0
        %v989 = vadd.f32 %v586, %v988
        %v990 = vpop.f32.mrb[0].mxu0
        %v991 = vpop.f32.mrb[0].mxu0
        %v992 = vpop.f32.mrb[0].mxu0
        %993 = vdwg.mxu0
        %v994 = vsel %vm603, %v989, -inf
        %995 = vmax.xlane.f32.xlu0 %v994
        %v996 = vpop.xlane.xlu0 %995
        %v997 = vsub.f32 %v989, %v996
        %v998 = vmul.f32 %v997, 1.442695
        %v999 = vpow.pop %v998
        %v1000 = vsel %vm603, %v999, 0.0
        %1001 = vadd.xlane.f32.xlu0 %v1000
        %v1002 = vpop.xlane.xlu0 %1001
        %v1003 = vrcp.pop %v1002
        %v1004 = vmul.f32 %v999, %v1003
        %v1005 = vpack.c.bf16 %v1004, %v1004
        %v1007 = vsel %vm603, %v1005, 0
        %v1010 = vsel %vm603, %v579, 0
        %1012 = vmatprep.subr.bf16.mxu0 0
        %1013 = vmatpush1.bf16.xpose.msra.mxu0 %v1010
        %1014 = vmatprep.subr.bf16.mxu0 0
        %1015 = vmatpush1.bf16.xpose.msra.mxu0 0
        %1016 = vmatprep.subr.bf16.mxu0 0
        %1017 = vmatpush1.bf16.xpose.msra.mxu0 0
        %1018 = vmatprep.subr.bf16.mxu0 0
        %1019 = vmatpush1.bf16.xpose.msra.mxu0 0
        %1020 = vmatprep.subr.bf16.mxu0 0
        %1021 = vmatpush1.bf16.xpose.msra.mxu0 0
        %1022 = vmatprep.subr.bf16.mxu0 0
        %1023 = vmatpush1.bf16.xpose.msra.mxu0 0
        %1024 = vmatprep.subr.bf16.mxu0 0
        %1025 = vmatpush1.bf16.xpose.msra.mxu0 0
        %1026 = vmatprep.subr.bf16.mxu0 0
        %1027 = vmatpush1.bf16.xpose.msra.mxu0 0
        %1028 = vmatprep.subr.bf16.mxu0 0
        %1029 = vmatpush1.bf16.xpose.msra.mxu0 0
        %1030 = vmatprep.subr.bf16.mxu0 0
        %1031 = vmatpush1.bf16.xpose.msra.mxu0 0
        %1032 = vmatprep.subr.bf16.mxu0 0
        %1033 = vmatpush1.bf16.xpose.msra.mxu0 0
        %1034 = vmatprep.subr.bf16.mxu0 0
        %1035 = vmatpush1.bf16.xpose.msra.mxu0 0
        %1036 = vmatprep.subr.bf16.mxu0 0
        %1037 = vmatpush1.bf16.xpose.msra.mxu0 0
        %1038 = vmatprep.subr.bf16.mxu0 0
        %1039 = vmatpush1.bf16.xpose.msra.mxu0 0
        %1040 = vmatprep.subr.bf16.mxu0 0
        %1041 = vmatpush1.bf16.xpose.msra.mxu0 0
        %1042 = vmatprep.subr.bf16.mxu0 0
        %1043 = vmatpush1.bf16.xpose.msra.mxu0 0
        %1044 = vmatprep.mubr.bf16.mxu0 0
        %1045 = vmatmul.mubr.bf16.gmra.mrb[0].mxu0 %v1007
        %v1046 = vpop.f32.mrb[0].mxu0
        %v1047 = vadd.f32 0.0, %v1046
        %v1048 = vpop.f32.mrb[0].mxu0
        %v1049 = vpop.f32.mrb[0].mxu0
        %v1050 = vpop.f32.mrb[0].mxu0
        %1051 = vdwg.mxu0
        %v1052 = vpack.c.bf16 %v1047, %v1047
        %v1053 = vld [vmem:[%s3 + $0x8] sm:$0xf]
        %v1055 = vsel %vm603, %v1052, 0
        %v1058 = vsel %vm607, %v1053, 0
        %1060 = vmatprep.subr.bf16.mxu0 0
        %1061 = vmatpush1.bf16.msra.mxu0 %v1058
        %1062 = vmatprep.subr.bf16.mxu0 0
        %1063 = vmatpush1.bf16.msra.mxu0 0
        %1064 = vmatprep.subr.bf16.mxu0 0
        %1065 = vmatpush1.bf16.msra.mxu0 0
        %1066 = vmatprep.subr.bf16.mxu0 0
        %1067 = vmatpush1.bf16.msra.mxu0 0
        %1068 = vmatprep.subr.bf16.mxu0 0
        %1069 = vmatpush1.bf16.msra.mxu0 0
        %1070 = vmatprep.subr.bf16.mxu0 0
        %1071 = vmatpush1.bf16.msra.mxu0 0
        %1072 = vmatprep.subr.bf16.mxu0 0
        %1073 = vmatpush1.bf16.msra.mxu0 0
        %1074 = vmatprep.subr.bf16.mxu0 0
        %1075 = vmatpush1.bf16.msra.mxu0 0
        %1076 = vmatprep.subr.bf16.mxu0 0
        %1077 = vmatpush1.bf16.msra.mxu0 0
        %1078 = vmatprep.subr.bf16.mxu0 0
        %1079 = vmatpush1.bf16.msra.mxu0 0
        %1080 = vmatprep.subr.bf16.mxu0 0
        %1081 = vmatpush1.bf16.msra.mxu0 0
        %1082 = vmatprep.subr.bf16.mxu0 0
        %1083 = vmatpush1.bf16.msra.mxu0 0
        %1084 = vmatprep.subr.bf16.mxu0 0
        %1085 = vmatpush1.bf16.msra.mxu0 0
        %1086 = vmatprep.subr.bf16.mxu0 0
        %1087 = vmatpush1.bf16.msra.mxu0 0
        %1088 = vmatprep.subr.bf16.mxu0 0
        %1089 = vmatpush1.bf16.msra.mxu0 0
        %1090 = vmatprep.subr.bf16.mxu0 0
        %1091 = vmatpush1.bf16.msra.mxu0 0
        %1092 = vmatprep.mubr.bf16.mxu0 0
        %1093 = vmatmul.mubr.bf16.gmra.mrb[0].mxu0 %v1055
        %v1094 = vpop.f32.mrb[0].mxu0
        %v1095 = vadd.f32 0.0, %v1094
        %v1096 = vpop.f32.mrb[0].mxu0
        %v1097 = vpop.f32.mrb[0].mxu0
        %v1098 = vpop.f32.mrb[0].mxu0
        %1099 = vdwg.mxu0
        %v1100 = vadd.f32 %v927, %v1095
        %v1102 = vrot.slane %v575, 4
        %1104 = vxpose.xlu0.c.b16.start [1/8] %v1102, 128
        %1105 = vxpose.xlu0.c.b16.cont [2/8] 0, 128
        %1106 = vxpose.xlu0.c.b16.cont [3/8] 0, 128
        %1107 = vxpose.xlu0.c.b16.cont [4/8] 0, 128
        %1108 = vxpose.xlu0.c.b16.cont [5/8] 0, 128
        %1109 = vxpose.xlu0.c.b16.cont [6/8] 0, 128
        %1110 = vxpose.xlu0.c.b16.cont [7/8] 0, 128
        %1111 = vxpose.xlu0.c.b16.end [8/8] 0, 128
        %v1112 = vpop.trf.xlu0
        %v1113 = vpop.trf.xlu0
        %v1114 = vpop.trf.xlu0
        %v1115 = vpop.trf.xlu0
        %v1116 = vpop.trf.xlu0
        %v1117 = vpop.trf.xlu0
        %v1118 = vpop.trf.xlu0
        %v1119 = vpop.trf.xlu0
        %v1121 = vrot.slane %v577, 4
        %v1123 = vsel %vm603, %v1112, 0
        %v1126 = vsel %vm607, %v1121, 0
        %1128 = vmatprep.subr.bf16.mxu0 0
        %1129 = vmatpush1.bf16.msra.mxu0 %v1126
        %1130 = vmatprep.subr.bf16.mxu0 0
        %1131 = vmatpush1.bf16.msra.mxu0 0
        %1132 = vmatprep.subr.bf16.mxu0 0
        %1133 = vmatpush1.bf16.msra.mxu0 0
        %1134 = vmatprep.subr.bf16.mxu0 0
        %1135 = vmatpush1.bf16.msra.mxu0 0
        %1136 = vmatprep.subr.bf16.mxu0 0
        %1137 = vmatpush1.bf16.msra.mxu0 0
        %1138 = vmatprep.subr.bf16.mxu0 0
        %1139 = vmatpush1.bf16.msra.mxu0 0
        %1140 = vmatprep.subr.bf16.mxu0 0
        %1141 = vmatpush1.bf16.msra.mxu0 0
        %1142 = vmatprep.subr.bf16.mxu0 0
        %1143 = vmatpush1.bf16.msra.mxu0 0
        %1144 = vmatprep.subr.bf16.mxu0 0
        %1145 = vmatpush1.bf16.msra.mxu0 0
        %1146 = vmatprep.subr.bf16.mxu0 0
        %1147 = vmatpush1.bf16.msra.mxu0 0
        %1148 = vmatprep.subr.bf16.mxu0 0
        %1149 = vmatpush1.bf16.msra.mxu0 0
        %1150 = vmatprep.subr.bf16.mxu0 0
        %1151 = vmatpush1.bf16.msra.mxu0 0
        %1152 = vmatprep.subr.bf16.mxu0 0
        %1153 = vmatpush1.bf16.msra.mxu0 0
        %1154 = vmatprep.subr.bf16.mxu0 0
        %1155 = vmatpush1.bf16.msra.mxu0 0
        %1156 = vmatprep.subr.bf16.mxu0 0
        %1157 = vmatpush1.bf16.msra.mxu0 0
        %1158 = vmatprep.subr.bf16.mxu0 0
        %1159 = vmatpush1.bf16.msra.mxu0 0
        %1160 = vmatprep.mubr.bf16.mxu0 0
        %1161 = vmatmul.mubr.bf16.gmra.mrb[0].mxu0 %v1123
        %v1162 = vpop.f32.mrb[0].mxu0
        %v1163 = vadd.f32 %v586, %v1162
        %v1164 = vpop.f32.mrb[0].mxu0
        %v1165 = vpop.f32.mrb[0].mxu0
        %v1166 = vpop.f32.mrb[0].mxu0
        %1167 = vdwg.mxu0
        %v1168 = vsel %vm603, %v1163, -inf
        %1169 = vmax.xlane.f32.xlu0 %v1168
        %v1170 = vpop.xlane.xlu0 %1169
        %v1171 = vsub.f32 %v1163, %v1170
        %v1172 = vmul.f32 %v1171, 1.442695
        %v1173 = vpow.pop %v1172
        %v1174 = vsel %vm603, %v1173, 0.0
        %1175 = vadd.xlane.f32.xlu0 %v1174
        %v1176 = vpop.xlane.xlu0 %1175
        %v1177 = vrcp.pop %v1176
        %v1178 = vmul.f32 %v1173, %v1177
        %v1179 = vpack.c.bf16 %v1178, %v1178
        %v1181 = vrot.slane %v579, 4
        %v1183 = vsel %vm603, %v1179, 0
        %v1186 = vsel %vm603, %v1181, 0
        %1188 = vmatprep.subr.bf16.mxu0 0
        %1189 = vmatpush1.bf16.xpose.msra.mxu0 %v1186
        %1190 = vmatprep.subr.bf16.mxu0 0
        %1191 = vmatpush1.bf16.xpose.msra.mxu0 0
        %1192 = vmatprep.subr.bf16.mxu0 0
        %1193 = vmatpush1.bf16.xpose.msra.mxu0 0
        %1194 = vmatprep.subr.bf16.mxu0 0
        %1195 = vmatpush1.bf16.xpose.msra.mxu0 0
        %1196 = vmatprep.subr.bf16.mxu0 0
        %1197 = vmatpush1.bf16.xpose.msra.mxu0 0
        %1198 = vmatprep.subr.bf16.mxu0 0
        %1199 = vmatpush1.bf16.xpose.msra.mxu0 0
        %1200 = vmatprep.subr.bf16.mxu0 0
        %1201 = vmatpush1.bf16.xpose.msra.mxu0 0
        %1202 = vmatprep.subr.bf16.mxu0 0
        %1203 = vmatpush1.bf16.xpose.msra.mxu0 0
        %1204 = vmatprep.subr.bf16.mxu0 0
        %1205 = vmatpush1.bf16.xpose.msra.mxu0 0
        %1206 = vmatprep.subr.bf16.mxu0 0
        %1207 = vmatpush1.bf16.xpose.msra.mxu0 0
        %1208 = vmatprep.subr.bf16.mxu0 0
        %1209 = vmatpush1.bf16.xpose.msra.mxu0 0
        %1210 = vmatprep.subr.bf16.mxu0 0
        %1211 = vmatpush1.bf16.xpose.msra.mxu0 0
        %1212 = vmatprep.subr.bf16.mxu0 0
        %1213 = vmatpush1.bf16.xpose.msra.mxu0 0
        %1214 = vmatprep.subr.bf16.mxu0 0
        %1215 = vmatpush1.bf16.xpose.msra.mxu0 0
        %1216 = vmatprep.subr.bf16.mxu0 0
        %1217 = vmatpush1.bf16.xpose.msra.mxu0 0
        %1218 = vmatprep.subr.bf16.mxu0 0
        %1219 = vmatpush1.bf16.xpose.msra.mxu0 0
        %1220 = vmatprep.mubr.bf16.mxu0 0
        %1221 = vmatmul.mubr.bf16.gmra.mrb[0].mxu0 %v1183
        %v1222 = vpop.f32.mrb[0].mxu0
        %v1223 = vadd.f32 0.0, %v1222
        %v1224 = vpop.f32.mrb[0].mxu0
        %v1225 = vpop.f32.mrb[0].mxu0
        %v1226 = vpop.f32.mrb[0].mxu0
        %1227 = vdwg.mxu0
        %v1228 = vpack.c.bf16 %v1223, %v1223
        %v1229 = vld [vmem:[%s3 + $0xc] sm:$0xf]
        %v1231 = vsel %vm603, %v1228, 0
        %v1234 = vsel %vm607, %v1229, 0
        %1236 = vmatprep.subr.bf16.mxu0 0
        %1237 = vmatpush1.bf16.msra.mxu0 %v1234
        %1238 = vmatprep.subr.bf16.mxu0 0
        %1239 = vmatpush1.bf16.msra.mxu0 0
        %1240 = vmatprep.subr.bf16.mxu0 0
        %1241 = vmatpush1.bf16.msra.mxu0 0
        %1242 = vmatprep.subr.bf16.mxu0 0
        %1243 = vmatpush1.bf16.msra.mxu0 0
        %1244 = vmatprep.subr.bf16.mxu0 0
        %1245 = vmatpush1.bf16.msra.mxu0 0
        %1246 = vmatprep.subr.bf16.mxu0 0
        %1247 = vmatpush1.bf16.msra.mxu0 0
        %1248 = vmatprep.subr.bf16.mxu0 0
        %1249 = vmatpush1.bf16.msra.mxu0 0
        %1250 = vmatprep.subr.bf16.mxu0 0
        %1251 = vmatpush1.bf16.msra.mxu0 0
        %1252 = vmatprep.subr.bf16.mxu0 0
        %1253 = vmatpush1.bf16.msra.mxu0 0
        %1254 = vmatprep.subr.bf16.mxu0 0
        %1255 = vmatpush1.bf16.msra.mxu0 0
        %1256 = vmatprep.subr.bf16.mxu0 0
        %1257 = vmatpush1.bf16.msra.mxu0 0
        %1258 = vmatprep.subr.bf16.mxu0 0
        %1259 = vmatpush1.bf16.msra.mxu0 0
        %1260 = vmatprep.subr.bf16.mxu0 0
        %1261 = vmatpush1.bf16.msra.mxu0 0
        %1262 = vmatprep.subr.bf16.mxu0 0
        %1263 = vmatpush1.bf16.msra.mxu0 0
        %1264 = vmatprep.subr.bf16.mxu0 0
        %1265 = vmatpush1.bf16.msra.mxu0 0
        %1266 = vmatprep.subr.bf16.mxu0 0
        %1267 = vmatpush1.bf16.msra.mxu0 0
        %1268 = vmatprep.mubr.bf16.mxu0 0
        %1269 = vmatmul.mubr.bf16.gmra.mrb[0].mxu0 %v1231
        %v1270 = vpop.f32.mrb[0].mxu0
        %v1271 = vadd.f32 0.0, %v1270
        %v1272 = vpop.f32.mrb[0].mxu0
        %v1273 = vpop.f32.mrb[0].mxu0
        %v1274 = vpop.f32.mrb[0].mxu0
        %1275 = vdwg.mxu0
        %v1276 = vadd.f32 %v1100, %v1271
        %v1277 = vadd.f32 %v1276, %v427
        %v1278 = vsel %vm471, %v1277, 0.0
        %1279 = vadd.xlane.f32.xlu0 %v1278
        %v1280 = vpop.xlane.xlu0 %1279
        %v1281 = vrcp.pop 32.0
        %v1282 = vmul.f32 %v1280, %v1281
        %v1283 = vsub.f32 %v1277, %v1282
        %v1284 = vmul.f32 %v1283, %v1283
        %v1285 = vsel %vm471, %v1284, 0.0
        %1286 = vadd.xlane.f32.xlu0 %v1285
        %v1287 = vpop.xlane.xlu0 %1286
        %v1288 = vmul.f32 %v1287, %v1281
        %v1289 = vadd.f32 %v1288, 1e-06
        %v1290 = vrsqrt.pop %v1289
        %v1291 = vmul.f32 %v1283, %v1290
        %v1292 = vld [vmem:[%s4] sm:$0x1]
        %v1294 = vlaneseq
        %v1295 = vshrl.u32 %v1294, 7
        %v1296 = vsub.s32 0, %v1295
        %v1297 = vrot.slane %v1292, %v1296
        %v1299 = vmul.f32 %v1291, %v1297
        %v1300 = vld [vmem:[%s5] sm:$0x1]
        %v1302 = vlaneseq
        %v1303 = vshrl.u32 %v1302, 7
        %v1304 = vsub.s32 0, %v1303
        %v1305 = vrot.slane %v1300, %v1304
        %v1307 = vadd.f32 %v1299, %v1305
        %v1308 = vpack.c.bf16 %v1307, %v1307
        %v1309 = vld [vmem:[%s6] sm:$0xf]
        %v1310 = vld [vmem:[%s6 + $0x4] sm:$0xf]
        %v1311 = vld [vmem:[%s6 + $0x8] sm:$0xf]
        %v1312 = vld [vmem:[%s6 + $0xc] sm:$0xf]
        %v1313 = vld [vmem:[%s7] sm:$0x1]
        %v1315 = vlaneseq
        %v1316 = vshrl.u32 %v1315, 7
        %v1317 = vsub.s32 0, %v1316
        %v1318 = vrot.slane %v1313, %v1317
        %v1324 = vunpack.c.l.b16 %v1309
        %v1325 = vunpack.c.l.b16 %v1310
        %v1326 = vunpack.c.l.b16 %v1311
        %v1327 = vunpack.c.l.b16 %v1312
        %v1328 = vpack.c.b16 %v1325, %v1324
        %v1329 = vpack.c.b16 %v1327, %v1326
        %v1333 = vsel %vm471, %v1308, 0
        %1335 = vmatprep.subr.bf16.mxu0 0
        %1336 = vmatpush1.bf16.msra.mxu0 %v1328
        %1337 = vmatprep.subr.bf16.mxu0 0
        %1338 = vmatpush1.bf16.msra.mxu0 %v1329
        %1339 = vmatprep.subr.bf16.mxu0 0
        %1340 = vmatpush1.bf16.msra.mxu0 0
        %1341 = vmatprep.subr.bf16.mxu0 0
        %1342 = vmatpush1.bf16.msra.mxu0 0
        %1343 = vmatprep.subr.bf16.mxu0 0
        %1344 = vmatpush1.bf16.msra.mxu0 0
        %1345 = vmatprep.subr.bf16.mxu0 0
        %1346 = vmatpush1.bf16.msra.mxu0 0
        %1347 = vmatprep.subr.bf16.mxu0 0
        %1348 = vmatpush1.bf16.msra.mxu0 0
        %1349 = vmatprep.subr.bf16.mxu0 0
        %1350 = vmatpush1.bf16.msra.mxu0 0
        %1351 = vmatprep.subr.bf16.mxu0 0
        %1352 = vmatpush1.bf16.msra.mxu0 0
        %1353 = vmatprep.subr.bf16.mxu0 0
        %1354 = vmatpush1.bf16.msra.mxu0 0
        %1355 = vmatprep.subr.bf16.mxu0 0
        %1356 = vmatpush1.bf16.msra.mxu0 0
        %1357 = vmatprep.subr.bf16.mxu0 0
        %1358 = vmatpush1.bf16.msra.mxu0 0
        %1359 = vmatprep.subr.bf16.mxu0 0
        %1360 = vmatpush1.bf16.msra.mxu0 0
        %1361 = vmatprep.subr.bf16.mxu0 0
        %1362 = vmatpush1.bf16.msra.mxu0 0
        %1363 = vmatprep.subr.bf16.mxu0 0
        %1364 = vmatpush1.bf16.msra.mxu0 0
        %1365 = vmatprep.subr.bf16.mxu0 0
        %1366 = vmatpush1.bf16.msra.mxu0 0
        %1367 = vmatprep.mubr.bf16.mxu0 0
        %1368 = vmatmul.mubr.bf16.gmra.mrb[0].mxu0 %v1333
        %v1369 = vpop.f32.mrb[0].mxu0
        %v1370 = vadd.f32 %v1318, %v1369
        %v1371 = vpop.f32.mrb[0].mxu0
        %v1372 = vpop.f32.mrb[0].mxu0
        %v1373 = vpop.f32.mrb[0].mxu0
        %1374 = vdwg.mxu0
        %v1375 = vmax.f32 %v1370, 0.0
        %v1376 = vpack.c.bf16 %v1375, %v1375
        %v1377 = vld [vmem:[%s8] sm:$0xf]
        %v1378 = vld [vmem:[%s8 + $0x4] sm:$0xf]
        %v1379 = vld [vmem:[%s8 + $0x8] sm:$0xf]
        %v1380 = vld [vmem:[%s8 + $0xc] sm:$0xf]
        %v1381 = vld [vmem:[%s9] sm:$0x1]
        %v1383 = vlaneseq
        %v1384 = vshrl.u32 %v1383, 7
        %v1385 = vsub.s32 0, %v1384
        %v1386 = vrot.slane %v1381, %v1385
        %v1392 = vunpack.c.l.b16 %v1377
        %v1393 = vunpack.c.l.b16 %v1378
        %v1394 = vunpack.c.l.b16 %v1379
        %v1395 = vunpack.c.l.b16 %v1380
        %v1396 = vpack.c.b16 %v1393, %v1392
        %v1397 = vpack.c.b16 %v1395, %v1394
        %v1401 = vsel %vm471, %v1376, 0
        %1403 = vmatprep.subr.bf16.mxu0 0
        %1404 = vmatpush1.bf16.msra.mxu0 %v1396
        %1405 = vmatprep.subr.bf16.mxu0 0
        %1406 = vmatpush1.bf16.msra.mxu0 %v1397
        %1407 = vmatprep.subr.bf16.mxu0 0
        %1408 = vmatpush1.bf16.msra.mxu0 0
        %1409 = vmatprep.subr.bf16.mxu0 0
        %1410 = vmatpush1.bf16.msra.mxu0 0
        %1411 = vmatprep.subr.bf16.mxu0 0
        %1412 = vmatpush1.bf16.msra.mxu0 0
        %1413 = vmatprep.subr.bf16.mxu0 0
        %1414 = vmatpush1.bf16.msra.mxu0 0
        %1415 = vmatprep.subr.bf16.mxu0 0
        %1416 = vmatpush1.bf16.msra.mxu0 0
        %1417 = vmatprep.subr.bf16.mxu0 0
        %1418 = vmatpush1.bf16.msra.mxu0 0
        %1419 = vmatprep.subr.bf16.mxu0 0
        %1420 = vmatpush1.bf16.msra.mxu0 0
        %1421 = vmatprep.subr.bf16.mxu0 0
        %1422 = vmatpush1.bf16.msra.mxu0 0
        %1423 = vmatprep.subr.bf16.mxu0 0
        %1424 = vmatpush1.bf16.msra.mxu0 0
        %1425 = vmatprep.subr.bf16.mxu0 0
        %1426 = vmatpush1.bf16.msra.mxu0 0
        %1427 = vmatprep.subr.bf16.mxu0 0
        %1428 = vmatpush1.bf16.msra.mxu0 0
        %1429 = vmatprep.subr.bf16.mxu0 0
        %1430 = vmatpush1.bf16.msra.mxu0 0
        %1431 = vmatprep.subr.bf16.mxu0 0
        %1432 = vmatpush1.bf16.msra.mxu0 0
        %1433 = vmatprep.subr.bf16.mxu0 0
        %1434 = vmatpush1.bf16.msra.mxu0 0
        %1435 = vmatprep.mubr.bf16.mxu0 0
        %1436 = vmatmul.mubr.bf16.gmra.mrb[0].mxu0 %v1401
        %v1437 = vpop.f32.mrb[0].mxu0
        %v1438 = vadd.f32 %v1386, %v1437
        %v1439 = vpop.f32.mrb[0].mxu0
        %v1440 = vpop.f32.mrb[0].mxu0
        %v1441 = vpop.f32.mrb[0].mxu0
        %1442 = vdwg.mxu0
        %v1443 = vadd.f32 %v1438, %v1307
        %v1444 = vsel %vm471, %v1443, 0.0
        %1445 = vadd.xlane.f32.xlu0 %v1444
        %v1446 = vpop.xlane.xlu0 %1445
        %v1447 = vmul.f32 %v1446, %v1281
        %v1448 = vsub.f32 %v1443, %v1447
        %v1449 = vmul.f32 %v1448, %v1448
        %v1450 = vsel %vm471, %v1449, 0.0
        %1451 = vadd.xlane.f32.xlu0 %v1450
        %v1452 = vpop.xlane.xlu0 %1451
        %v1453 = vmul.f32 %v1452, %v1281
        %v1454 = vadd.f32 %v1453, 1e-06
        %v1455 = vrsqrt.pop %v1454
        %v1456 = vmul.f32 %v1448, %v1455
        %v1457 = vld [vmem:[%s10] sm:$0x1]
        %v1459 = vlaneseq
        %v1460 = vshrl.u32 %v1459, 7
        %v1461 = vsub.s32 0, %v1460
        %v1462 = vrot.slane %v1457, %v1461
        %v1464 = vmul.f32 %v1456, %v1462
        %v1465 = vld [vmem:[%s11] sm:$0x1]
        %v1467 = vlaneseq
        %v1468 = vshrl.u32 %v1467, 7
        %v1469 = vsub.s32 0, %v1468
        %v1470 = vrot.slane %v1465, %v1469
        %v1472 = vadd.f32 %v1464, %v1470
        %1473 = vst.msk [vmem:[%s417] sm:$0xff] %vm471, %v1472
        %s1474 = sand.u32 %s296, 1
        %s1475 = scalar_lea.sflag [#allocation3], %s1474
        %s1476 = sand.u32 %s296, 1
        %s1477 = smul.addr %s1476, 8
        %s1478 = scalar_lea.vmem [#allocation2], %s1477
        // Predicated region
        $region69: #{tpu_custom_call.1} parent=67 // pred_check
          %p1479 = pneg %p306
        $region70: #{tpu_custom_call.1} parent=67 // pred_check_branch
          %1481 = sbr.rel (%p1479) target = $region72
        $region71: #{tpu_custom_call.1} parent=67 // pred_region
          %s1483 = ssub.s32 128, 128
          %1484 = vsyncadd %s1475, %s1483
          %s1485 = smul.addr %s26, 128
          %s1486 = scalar_lea.hbm %s12, %s1485
          %s1488 = sshll.u32 %s1478, 4
          %s1489 = int_to_ptr.vmem [resolvable:$true] %s1488
          %1491 = dma.vmem_to_hbm [thread:$0]  %s1489, 128, %s1486, %s1475
        $region72: #{tpu_custom_call.1} parent=67 // pred_fallthru
          _
      $region68: #{tpu_custom_call.1} parent=5 // pred_fallthru
        _
      %p1492 = scmp.le.s32.totalorder 2, %s21
      // Predicated region
      $region73: #{tpu_custom_call.1} parent=5 // pred_check
        %p1493 = pneg %p1492
      $region74: #{tpu_custom_call.1} parent=5 // pred_check_branch
        %1495 = sbr.rel (%p1493) target = $region76
      $region75: #{tpu_custom_call.1} parent=5 // pred_region
        %s1496 = ssub.s32 %s21, 2
        // Predicated region
        $region77: #{tpu_custom_call.1} parent=75 // pred_check
          %p1497 = pneg %p312
        $region78: #{tpu_custom_call.1} parent=75 // pred_check_branch
          %1499 = sbr.rel (%p1497) target = $region80
        $region79: #{tpu_custom_call.1} parent=75 // pred_region
          %s1500 = sand.u32 %s297, 1
          %s1501 = scalar_lea.sflag [#allocation3], %s1500
          %s1502 = sand.u32 %s297, 1
          %s1503 = smul.addr %s1502, 8
          %s1504 = scalar_lea.vmem [#allocation2], %s1503
          %1505 = dma.done %s1501, 128
        $region80: #{tpu_custom_call.1} parent=75 // pred_fallthru
          _
      $region76: #{tpu_custom_call.1} parent=5 // pred_fallthru
        _
    $region6: #{tpu_custom_call.1} parent=1 // loop_footer
      %s25 = sadd.s32 1, %s21
    $region7: #{tpu_custom_call.1} parent=1 // loop_footer_branch
      %20 = sbr.rel target = $region3
    $region8: #{tpu_custom_call.1} parent=1 // loop_exit
      _
    %1506 = vsyncpa [#allocation3], 1
    %s1507 = scalar_lea.sflag [#allocation3], 1
    %1508 = vsyncpa %s1507, 1

</llo_original>
